<compile_context>
chip_gen: v6e
topology: v6e:2x2x1
jax: 0.10.0
libtpu: 0.0.40
codegen_flags: <defaults>
</compile_context>

<pallas_src>
import functools

import jax
import jax.numpy as jnp
from jax.experimental import pallas as pl
from jax.experimental.pallas import tpu as pltpu

EPS = 1e-5
_SENTINEL = -1e30          # "exactly zero after BN+ReLU" padding marker
_SENTINEL_THRESH = -1e29


def _round_up(x, m):
    return (x + m - 1) // m * m


# ----------------------------- Pallas kernels ---------------------------------
def _gemm_stats_kernel(p_ref, w_ref, y_ref, stats_ref):
    """conv-as-GEMM row tile + per-tile BN partial statistics.

    p_ref:     (tile_m, Kpad)  bf16 im2col patch tile
    w_ref:     (Kpad, Cpad)    bf16 flattened conv weight (resident)
    y_ref:     (tile_m, Cpad)  bf16 raw conv output tile
    stats_ref: (1, 2, Cpad)    f32 [sum, sum-of-squares] over this tile's rows
    """
    acc = jnp.dot(p_ref[...], w_ref[...], preferred_element_type=jnp.float32)
    yb = acc.astype(y_ref.dtype)
    y_ref[...] = yb
    # Statistics from the rounded values -> self-consistent with what pass B/C
    # actually normalizes.
    yq = yb.astype(jnp.float32)
    s = jnp.sum(yq, axis=0, keepdims=True)            # (1, Cpad)
    sq = jnp.sum(yq * yq, axis=0, keepdims=True)      # (1, Cpad)
    stats_ref[...] = jnp.concatenate([s, sq], axis=0).reshape(1, 2, -1)


def _gemm_fused_prelu_stats_kernel(p_ref, sk_ref, hk_ref, w_ref, y_ref, stats_ref):
    """Same as above, but the previous layer's BN + ReLU is applied to the
    patch tile before the matmul (per-channel affine tiled 9x along K, held
    resident as (1, Kpad) f32 vectors).  Sentinel-valued patch entries (the
    spatial zero padding of the *normalized* map, and row padding) map to 0.
    The extra VPU work hides under the MXU work of the GEMM tile.
    """
    p = p_ref[...].astype(jnp.float32)
    a = jnp.maximum(p * sk_ref[...] + hk_ref[...], 0.0)
    a = jnp.where(p <= _SENTINEL_THRESH, 0.0, a)
    acc = jnp.dot(a.astype(jnp.bfloat16), w_ref[...],
                  preferred_element_type=jnp.float32)
    yb = acc.astype(y_ref.dtype)
    y_ref[...] = yb
    yq = yb.astype(jnp.float32)
    s = jnp.sum(yq, axis=0, keepdims=True)
    sq = jnp.sum(yq * yq, axis=0, keepdims=True)
    stats_ref[...] = jnp.concatenate([s, sq], axis=0).reshape(1, 2, -1)


def _bn_relu_kernel(y_ref, scale_ref, shift_ref, o_ref):
    """BN (folded to per-channel affine) + ReLU on a row tile."""
    y = y_ref[...].astype(jnp.float32)
    out = jnp.maximum(y * scale_ref[...] + shift_ref[...], 0.0)
    o_ref[...] = out.astype(o_ref.dtype)


# --------------------------- tiling / VMEM budgets -----------------------------
def _vmem_budgets():
    """(vmem_limit_bytes, per-kernel tile budget), generation aware."""
    cap = 64 * 1024 * 1024
    try:  # trace-time hardware query; fall back to the v7x-safe assumption.
        cap = int(getattr(pltpu.get_tpu_info(), "vmem_capacity_bytes", cap))
    except Exception:
        pass
    if cap >= 100 * 1024 * 1024:            # v5e / v6e: 128 MiB per TensorCore
        return 100 * 1024 * 1024, 64 * 1024 * 1024
    return 48 * 1024 * 1024, 28 * 1024 * 1024   # v7x: 64 MiB per TensorCore


def _choose_tile_gemm(kpad, cpad, rows, budget_bytes):
    """Largest power-of-two row tile whose double-buffered pipeline (incl. the
    f32 accumulator, acc^2 and fused-affine temporaries) fits the budget."""
    def est(tm):
        patches_io = 2 * tm * kpad * 2          # bf16 input, double-buffered
        affine_tmp = tm * kpad * (4 + 4 + 2)    # f32 patch, f32 activ, bf16 activ
        weights = kpad * cpad * 2               # bf16, resident
        y_io = 2 * tm * cpad * 2                # bf16 output, double-buffered
        acc_tmp = 2 * tm * cpad * 4             # f32 acc + acc*acc
        vecs = 4 * kpad * 4 + 8 * cpad * 4      # scale/shift + stats blocks
        return patches_io + affine_tmp + weights + y_io + acc_tmp + vecs

    tile = 1024
    while tile > 128 and est(tile) > budget_bytes:
        tile //= 2
    while tile > 128 and tile // 2 >= rows:     # don't grossly over-pad tiny M
        tile //= 2
    return tile


def _choose_tile_ew(cpad, rows, tile_gemm, out_bytes, budget_bytes):
    """Pass C (pure HBM-bound) gets a bigger row tile, a multiple of the GEMM
    tile so both grids share one padded row count."""
    max_rows = _round_up(rows, tile_gemm)

    def est(t):
        return t * cpad * (2 * 2 + 2 * out_bytes + 4) + 8 * cpad * 4

    tile = tile_gemm
    while tile * 2 <= min(2048, max_rows) and est(tile * 2) <= budget_bytes:
        tile *= 2
    return tile


# ------------------------------- JAX glue --------------------------------------
def _im2col_3x3(x_nhwc, stride, pad_value=0.0):
    """im2col for a 3x3 conv, padding=1, given stride (done in bf16)."""
    N, H, W, C = x_nhwc.shape
    Ho = (H + 2 - 3) // stride + 1
    Wo = (W + 2 - 3) // stride + 1
    xp = jnp.pad(x_nhwc, ((0, 0), (1, 1), (1, 1), (0, 0)),
                 constant_values=pad_value)
    taps = []
    for dy in range(3):
        for dx in range(3):
            taps.append(xp[:, dy:dy + (Ho - 1) * stride + 1:stride,
                              dx:dx + (Wo - 1) * stride + 1:stride, :])
    patches = jnp.concatenate(taps, axis=-1)                # (N, Ho, Wo, 9*C)
    return patches.reshape(N * Ho * Wo, 9 * C), (N, Ho, Wo)


def _pad_patches(patches, kpad, rows_pad, row_pad_value):
    rows, k = patches.shape
    patches = jnp.pad(patches, ((0, 0), (0, kpad - k)))               # zeros
    patches = jnp.pad(patches, ((0, rows_pad - rows), (0, 0)),
                      constant_values=row_pad_value)
    return patches


def _flatten_weight(w_oihw, kpad, cpad):
    """(O,I,3,3) -> (Kpad, Cpad) bf16, matching im2col column order
    k = (dy*3+dx)*Cin + c."""
    cout, cin = w_oihw.shape[0], w_oihw.shape[1]
    k = 9 * cin
    w = jnp.transpose(w_oihw, (2, 3, 1, 0)).reshape(k, cout)
    w = jnp.pad(w, ((0, kpad - k), (0, cpad - cout)))
    return w.astype(jnp.bfloat16)


def _bn_fold(stats, n_rows, gamma, beta, cpad):
    """Reduce per-tile partial stats to per-channel scale/shift (f32)."""
    s = jnp.sum(stats[:, 0, :], axis=0)                 # (Cpad,)
    ss = jnp.sum(stats[:, 1, :], axis=0)                # (Cpad,)
    mean = s / n_rows
    # E[x^2]-E[x]^2 in f32; clamp tiny negatives from rounding.
    var = jnp.maximum(ss / n_rows - mean * mean, 0.0)
    inv = jax.lax.rsqrt(var + EPS)
    g = jnp.pad(gamma.astype(jnp.float32), (0, cpad - gamma.shape[0]))
    b = jnp.pad(beta.astype(jnp.float32), (0, cpad - beta.shape[0]))
    scale = g * inv
    shift = b - mean * scale
    return scale, shift                                  # (Cpad,), (Cpad,)


def _conv_gemm_pass(patches, w_flat, tile_m, kpad, cpad, vmem_limit,
                    scale_k=None, shift_k=None):
    """Row-tiled conv GEMM (+BN partial stats).  If scale_k/shift_k are given,
    the previous layer's BN+ReLU is fused onto the patch tile."""
    rows_pad = patches.shape[0]
    num_tiles = rows_pad // tile_m
    cparams = pltpu.CompilerParams(
        dimension_semantics=("parallel",),
        vmem_limit_bytes=vmem_limit,
    )
    cost = pl.CostEstimate(
        flops=2 * rows_pad * kpad * cpad,
        transcendentals=0,
        bytes_accessed=(rows_pad * kpad * 2 + kpad * cpad * 2
                        + rows_pad * cpad * 2 + num_tiles * 2 * cpad * 4),
    )
    out_shape = [
        jax.ShapeDtypeStruct((rows_pad, cpad), jnp.bfloat16),
        jax.ShapeDtypeStruct((num_tiles, 2, cpad), jnp.float32),
    ]
    out_specs = [
        pl.BlockSpec((tile_m, cpad), lambda i: (i, 0)),
        pl.BlockSpec((1, 2, cpad), lambda i: (i, 0, 0)),
    ]
    patch_spec = pl.BlockSpec((tile_m, kpad), lambda i: (i, 0))
    w_spec = pl.BlockSpec((kpad, cpad), lambda i: (0, 0))        # resident

    if scale_k is None:
        return pl.pallas_call(
            _gemm_stats_kernel,
            grid=(num_tiles,),
            in_specs=[patch_spec, w_spec],
            out_specs=out_specs,
            out_shape=out_shape,
            compiler_params=cparams,
            cost_estimate=cost,
        )(patches, w_flat)

    vec_spec = pl.BlockSpec((1, kpad), lambda i: (0, 0))         # resident
    return pl.pallas_call(
        _gemm_fused_prelu_stats_kernel,
        grid=(num_tiles,),
        in_specs=[patch_spec, vec_spec, vec_spec, w_spec],
        out_specs=out_specs,
        out_shape=out_shape,
        compiler_params=cparams,
        cost_estimate=cost,
    )(patches, scale_k, shift_k, w_flat)


def _bn_relu_pass(y, scale, shift, tile_m, cpad, vmem_limit, out_dtype):
    rows_pad = y.shape[0]
    num_tiles = rows_pad // tile_m
    out_bytes = jnp.dtype(out_dtype).itemsize
    cparams = pltpu.CompilerParams(
        dimension_semantics=("parallel",),
        vmem_limit_bytes=vmem_limit,
    )
    cost = pl.CostEstimate(
        flops=3 * rows_pad * cpad,
        transcendentals=0,
        bytes_accessed=rows_pad * cpad * (2 + out_bytes) + 2 * cpad * 4,
    )
    return pl.pallas_call(
        _bn_relu_kernel,
        grid=(num_tiles,),
        in_specs=[
            pl.BlockSpec((tile_m, cpad), lambda i: (i, 0)),
            pl.BlockSpec((1, cpad), lambda i: (0, 0)),
            pl.BlockSpec((1, cpad), lambda i: (0, 0)),
        ],
        out_specs=pl.BlockSpec((tile_m, cpad), lambda i: (i, 0)),
        out_shape=jax.ShapeDtypeStruct((rows_pad, cpad), out_dtype),
        compiler_params=cparams,
        cost_estimate=cost,
    )(y, scale.reshape(1, -1), shift.reshape(1, -1))


@functools.partial(jax.jit, static_argnames=("stride",))
def basic_block_noshortcut(x_nchw, params, stride=1):
    """Forward pass of BasicBlock_noshortcut.  Input/output are NCHW f32."""
    w1, g1, b1 = params["w1"], params["g1"], params["b1"]
    w2, g2, b2 = params["w2"], params["g2"], params["b2"]
    planes = w1.shape[0]

    vmem_limit, tile_budget = _vmem_budgets()

    # bf16 BEFORE im2col -> the XLA-side patch intermediates are half size.
    x = jnp.transpose(x_nchw, (0, 2, 3, 1)).astype(jnp.bfloat16)   # NCHW->NHWC

    # ---------------- Pass A: conv1 GEMM + BN1 partial stats ----------------
    patches1, (N, H1, W1) = _im2col_3x3(x, stride)
    rows1, k1 = patches1.shape
    kpad1 = _round_up(k1, 128)
    cpad = _round_up(planes, 128)

    tile_g1 = _choose_tile_gemm(kpad1, cpad, rows1, tile_budget)
    rows_pad1 = _round_up(rows1, tile_g1)
    patches1 = _pad_patches(patches1, kpad1, rows_pad1, 0.0)
    w1f = _flatten_weight(w1, kpad1, cpad)

    y1, stats1 = _conv_gemm_pass(patches1, w1f, tile_g1, kpad1, cpad, vmem_limit)
    scale1, shift1 = _bn_fold(stats1, rows1, g1, b1, cpad)

    # ------- Pass B: conv2 GEMM with BN1 + ReLU fused onto the patches ------
    a1_raw = y1[:rows1, :planes].reshape(N, H1, W1, planes)        # raw conv1 (bf16)
    # Sentinel spatial padding == "the *normalized+ReLU'd* map is 0 here".
    patches2, (_, H2, W2) = _im2col_3x3(a1_raw, 1, pad_value=_SENTINEL)
    rows2, k2 = patches2.shape
    kpad2 = _round_up(k2, 128)

    tile_g2 = _choose_tile_gemm(kpad2, cpad, rows2, tile_budget)
    tile_ew = _choose_tile_ew(cpad, rows2, tile_g2, 4, tile_budget)
    rows_pad2 = _round_up(rows2, tile_ew)                          # divisible by both
    patches2 = _pad_patches(patches2, kpad2, rows_pad2, _SENTINEL)
    w2f = _flatten_weight(w2, kpad2, cpad)

    # Per-K scale/shift: tile the per-channel BN1 affine 9x along K.
    # Padded K columns get scale=1 / shift=0 so zero (and sentinel) patch
    # entries stay exactly 0.
    scale_k = jnp.pad(jnp.tile(scale1[:planes], 9), (0, kpad2 - k2),
                      constant_values=1.0).reshape(1, kpad2)
    shift_k = jnp.pad(jnp.tile(shift1[:planes], 9), (0, kpad2 - k2),
                      constant_values=0.0).reshape(1, kpad2)

    y2, stats2 = _conv_gemm_pass(patches2, w2f, tile_g2, kpad2, cpad,
                                 vmem_limit, scale_k, shift_k)
    scale2, shift2 = _bn_fold(stats2, rows2, g2, b2, cpad)

    # ---------------- Pass C: BN2 + ReLU (large row tiles) ------------------
    out = _bn_relu_pass(y2, scale2, shift2, tile_ew, cpad, vmem_limit,
                        jnp.float32)

    out = out[:rows2, :planes].reshape(N, H2, W2, planes)
    return jnp.transpose(out, (0, 3, 1, 2))                        # NHWC -> NCHW


# --------------------------- pure-JAX reference --------------------------------
def _ref_block(x, params, stride):
    def conv(x, w, s):
        return jax.lax.conv_general_dilated(
            x, w, window_strides=(s, s), padding=((1, 1), (1, 1)),
            dimension_numbers=("NCHW", "OIHW", "NCHW"),
            precision=jax.lax.Precision.HIGHEST,
        )

    def bn(x, g, b):
        mean = x.mean(axis=(0, 2, 3), keepdims=True)
        var = ((x - mean) ** 2).mean(axis=(0, 2, 3), keepdims=True)
        xhat = (x - mean) * jax.lax.rsqrt(var + EPS)
        return xhat * g.reshape(1, -1, 1, 1) + b.reshape(1, -1, 1, 1)

    out = jax.nn.relu(bn(conv(x, params["w1"], stride), params["g1"], params["b1"]))
    out = jax.nn.relu(bn(conv(out, params["w2"], 1), params["g2"], params["b2"]))
    return out


# ---------------------------------- main ---------------------------------------
if __name__ == "__main__":
    key = jax.random.PRNGKey(0)
    N, in_planes, H, W = 2, 4, 16, 16
    planes, stride = 8, 1

    k0, k1, k2 = jax.random.split(key, 3)
    x = jax.random.normal(k0, (N, in_planes, H, W), jnp.float32)
    w1 = jax.random.normal(k1, (planes, in_planes, 3, 3), jnp.float32) / (3 * 3 * in_planes) ** 0.5
    w2 = jax.random.normal(k2, (planes, planes, 3, 3), jnp.float32) / (3 * 3 * planes) ** 0.5
    params = dict(
        w1=w1, g1=jnp.ones((planes,), jnp.float32), b1=jnp.zeros((planes,), jnp.float32),
        w2=w2, g2=jnp.ones((planes,), jnp.float32), b2=jnp.zeros((planes,), jnp.float32),
    )

    out = jax.block_until_ready(basic_block_noshortcut(x, params, stride))
    ref = jax.block_until_ready(_ref_block(x, params, stride))

    assert out.shape == ref.shape == (N, planes, H, W), (out.shape, ref.shape)
    # bf16 MXU inputs / bf16 inter-conv activations with f32 accumulation;
    # tolerance is set for bf16-class numerics vs the f32 HIGHEST reference.
    max_err = float(jnp.max(jnp.abs(out - ref)))
    assert jnp.allclose(out, ref, atol=3e-2, rtol=3e-2), f"max abs err = {max_err}"
    print("KERNEL_OK")
</pallas_src>

<mosaic_0001>
module attributes {stable_mosaic.version = 11 : i64} {
  func.func @_gemm_stats_kernel(%arg0: i32, %arg1: memref<512x128xbf16, #tpu.memory_space<vmem>>, %arg2: memref<128x128xbf16, #tpu.memory_space<vmem>>, %arg3: memref<512x128xbf16, #tpu.memory_space<vmem>>, %arg4: memref<1x2x128xf32, #tpu.memory_space<vmem>>) attributes {dimension_semantics = [#tpu.dimension_semantics<parallel>], iteration_bounds = array<i64: 1>, scalar_prefetch = 0 : i64, scratch_operands = 0 : i64, tpu.core_type = #tpu.core_type<tc>, window_params = [{transform_indices = @transform_0, window_bounds = array<i64: 512, 128>}, {pipeline_mode = #tpu.pipeline_mode<synchronous>, transform_indices = @transform_1, window_bounds = array<i64: 128, 128>}, {transform_indices = @transform_2, window_bounds = array<i64: 512, 128>}, {transform_indices = @transform_3, window_bounds = array<i64: 1, 2, 128>}]} {
    %c0 = arith.constant 0 : index
    %c0_0 = arith.constant 0 : index
    %0 = vector.load %arg1[%c0, %c0_0] : memref<512x128xbf16, #tpu.memory_space<vmem>>, vector<512x128xbf16>
    %c0_1 = arith.constant 0 : index
    %c0_2 = arith.constant 0 : index
    %1 = vector.load %arg2[%c0_1, %c0_2] : memref<128x128xbf16, #tpu.memory_space<vmem>>, vector<128x128xbf16>
    %cst = arith.constant dense<0.000000e+00> : vector<512x128xf32>
    %2 = tpu.matmul %0, %1, %cst {dimension_numbers = #tpu.dot_dimension_numbers<[1], [0], [0], [1], [0, 0, 1, 1], [], []>} : vector<512x128xbf16>, vector<128x128xbf16>, vector<512x128xf32> -> vector<512x128xf32>
    %3 = arith.truncf %2 : vector<512x128xf32> to vector<512x128xbf16>
    %c0_3 = arith.constant 0 : index
    %c0_4 = arith.constant 0 : index
    %4 = vector.load %arg3[%c0_3, %c0_4] : memref<512x128xbf16, #tpu.memory_space<vmem>>, vector<512x128xbf16>
    tpu.vector_store %arg3[%c0_3, %c0_4], %3 {strides = array<i32>} : memref<512x128xbf16, #tpu.memory_space<vmem>>, vector<512x128xbf16>,
    %5 = arith.extf %3 : vector<512x128xbf16> to vector<512x128xf32>
    %cst_5 = arith.constant dense<0.000000e+00> : vector<128xf32>
    %6 = vector.multi_reduction <add>, %5, %cst_5 [0] : vector<512x128xf32> to vector<128xf32>
    %7 = vector.shape_cast %6 : vector<128xf32> to vector<1x128xf32>
    %8 = arith.mulf %5, %5 : vector<512x128xf32>
    %cst_6 = arith.constant dense<0.000000e+00> : vector<128xf32>
    %9 = vector.multi_reduction <add>, %8, %cst_6 [0] : vector<512x128xf32> to vector<128xf32>
    %10 = vector.shape_cast %9 : vector<128xf32> to vector<1x128xf32>
    %11 = tpu.concatenate %7, %10 in 0 : vector<1x128xf32>, vector<1x128xf32> -> vector<2x128xf32>
    %12 = vector.shape_cast %11 : vector<2x128xf32> to vector<1x2x128xf32>
    %c0_7 = arith.constant 0 : index
    %c0_8 = arith.constant 0 : index
    %c0_9 = arith.constant 0 : index
    %13 = vector.load %arg4[%c0_7, %c0_8, %c0_9] : memref<1x2x128xf32, #tpu.memory_space<vmem>>, vector<1x2x128xf32>
    tpu.vector_store %arg4[%c0_7, %c0_8, %c0_9], %12 {strides = array<i32>} : memref<1x2x128xf32, #tpu.memory_space<vmem>>, vector<1x2x128xf32>,
    return
  }
  func.func @transform_0(%arg0: i32) -> (i32, i32) {
    %c0_i32 = arith.constant 0 : i32
    %c0_i32_0 = arith.constant 0 : i32
    return %arg0, %c0_i32 : i32, i32
  }
  func.func @transform_1(%arg0: i32) -> (i32, i32) {
    %c0_i32 = arith.constant 0 : i32
    %c0_i32_0 = arith.constant 0 : i32
    %c0_i32_1 = arith.constant 0 : i32
    return %c0_i32, %c0_i32_0 : i32, i32
  }
  func.func @transform_2(%arg0: i32) -> (i32, i32) {
    %c0_i32 = arith.constant 0 : i32
    %c0_i32_0 = arith.constant 0 : i32
    return %arg0, %c0_i32 : i32, i32
  }
  func.func @transform_3(%arg0: i32) -> (i32, i32, i32) {
    %c0_i32 = arith.constant 0 : i32
    %c0_i32_0 = arith.constant 0 : i32
    %c0_i32_1 = arith.constant 0 : i32
    return %arg0, %c0_i32, %c0_i32_0 : i32, i32, i32
  }
}

module attributes {stable_mosaic.version = 11 : i64} {
  func.func @_gemm_fused_prelu_stats_kernel(%arg0: i32, %arg1: memref<512x128xbf16, #tpu.memory_space<vmem>>, %arg2: memref<1x128xf32, #tpu.memory_space<vmem>>, %arg3: memref<1x128xf32, #tpu.memory_space<vmem>>, %arg4: memref<128x128xbf16, #tpu.memory_space<vmem>>, %arg5: memref<512x128xbf16, #tpu.memory_space<vmem>>, %arg6: memref<1x2x128xf32, #tpu.memory_space<vmem>>) attributes {dimension_semantics = [#tpu.dimension_semantics<parallel>], iteration_bounds = array<i64: 1>, scalar_prefetch = 0 : i64, scratch_operands = 0 : i64, tpu.core_type = #tpu.core_type<tc>, window_params = [{transform_indices = @transform_0, window_bounds = array<i64: 512, 128>}, {pipeline_mode = #tpu.pipeline_mode<synchronous>, transform_indices = @transform_1, window_bounds = array<i64: 1, 128>}, {pipeline_mode = #tpu.pipeline_mode<synchronous>, transform_indices = @transform_2, window_bounds = array<i64: 1, 128>}, {pipeline_mode = #tpu.pipeline_mode<synchronous>, transform_indices = @transform_3, window_bounds = array<i64: 128, 128>}, {transform_indices = @transform_4, window_bounds = array<i64: 512, 128>}, {transform_indices = @transform_5, window_bounds = array<i64: 1, 2, 128>}]} {
    %c0 = arith.constant 0 : index
    %c0_0 = arith.constant 0 : index
    %0 = vector.load %arg1[%c0, %c0_0] : memref<512x128xbf16, #tpu.memory_space<vmem>>, vector<512x128xbf16>
    %1 = arith.extf %0 : vector<512x128xbf16> to vector<512x128xf32>
    %c0_1 = arith.constant 0 : index
    %c0_2 = arith.constant 0 : index
    %2 = vector.load %arg2[%c0_1, %c0_2] : memref<1x128xf32, #tpu.memory_space<vmem>>, vector<1x128xf32>
    %3 = vector.broadcast %2 : vector<1x128xf32> to vector<512x128xf32>
    %4 = arith.mulf %1, %3 : vector<512x128xf32>
    %c0_3 = arith.constant 0 : index
    %c0_4 = arith.constant 0 : index
    %5 = vector.load %arg3[%c0_3, %c0_4] : memref<1x128xf32, #tpu.memory_space<vmem>>, vector<1x128xf32>
    %6 = vector.broadcast %5 : vector<1x128xf32> to vector<512x128xf32>
    %7 = arith.addf %4, %6 : vector<512x128xf32>
    %cst = arith.constant 0.000000e+00 : f32
    %8 = vector.broadcast %cst : f32 to vector<512x128xf32>
    %9 = arith.maximumf %7, %8 : vector<512x128xf32>
    %cst_5 = arith.constant -1.000000e+29 : f32
    %10 = vector.broadcast %cst_5 : f32 to vector<512x128xf32>
    %11 = arith.cmpf ole, %1, %10 : vector<512x128xf32>
    %cst_6 = arith.constant 0.000000e+00 : f32
    %12 = vector.broadcast %cst_6 : f32 to vector<512x128xf32>
    %13 = arith.select %11, %12, %9 : vector<512x128xi1>, vector<512x128xf32>
    %14 = arith.truncf %13 : vector<512x128xf32> to vector<512x128xbf16>
    %c0_7 = arith.constant 0 : index
    %c0_8 = arith.constant 0 : index
    %15 = vector.load %arg4[%c0_7, %c0_8] : memref<128x128xbf16, #tpu.memory_space<vmem>>, vector<128x128xbf16>
    %cst_9 = arith.constant dense<0.000000e+00> : vector<512x128xf32>
    %16 = tpu.matmul %14, %15, %cst_9 {dimension_numbers = #tpu.dot_dimension_numbers<[1], [0], [0], [1], [0, 0, 1, 1], [], []>} : vector<512x128xbf16>, vector<128x128xbf16>, vector<512x128xf32> -> vector<512x128xf32>
    %17 = arith.truncf %16 : vector<512x128xf32> to vector<512x128xbf16>
    %c0_10 = arith.constant 0 : index
    %c0_11 = arith.constant 0 : index
    %18 = vector.load %arg5[%c0_10, %c0_11] : memref<512x128xbf16, #tpu.memory_space<vmem>>, vector<512x128xbf16>
    tpu.vector_store %arg5[%c0_10, %c0_11], %17 {strides = array<i32>} : memref<512x128xbf16, #tpu.memory_space<vmem>>, vector<512x128xbf16>,
    %19 = arith.extf %17 : vector<512x128xbf16> to vector<512x128xf32>
    %cst_12 = arith.constant dense<0.000000e+00> : vector<128xf32>
    %20 = vector.multi_reduction <add>, %19, %cst_12 [0] : vector<512x128xf32> to vector<128xf32>
    %21 = vector.shape_cast %20 : vector<128xf32> to vector<1x128xf32>
    %22 = arith.mulf %19, %19 : vector<512x128xf32>
    %cst_13 = arith.constant dense<0.000000e+00> : vector<128xf32>
    %23 = vector.multi_reduction <add>, %22, %cst_13 [0] : vector<512x128xf32> to vector<128xf32>
    %24 = vector.shape_cast %23 : vector<128xf32> to vector<1x128xf32>
    %25 = tpu.concatenate %21, %24 in 0 : vector<1x128xf32>, vector<1x128xf32> -> vector<2x128xf32>
    %26 = vector.shape_cast %25 : vector<2x128xf32> to vector<1x2x128xf32>
    %c0_14 = arith.constant 0 : index
    %c0_15 = arith.constant 0 : index
    %c0_16 = arith.constant 0 : index
    %27 = vector.load %arg6[%c0_14, %c0_15, %c0_16] : memref<1x2x128xf32, #tpu.memory_space<vmem>>, vector<1x2x128xf32>
    tpu.vector_store %arg6[%c0_14, %c0_15, %c0_16], %26 {strides = array<i32>} : memref<1x2x128xf32, #tpu.memory_space<vmem>>, vector<1x2x128xf32>,
    return
  }
  func.func @transform_0(%arg0: i32) -> (i32, i32) {
    %c0_i32 = arith.constant 0 : i32
    %c0_i32_0 = arith.constant 0 : i32
    return %arg0, %c0_i32 : i32, i32
  }
  func.func @transform_1(%arg0: i32) -> (i32, i32) {
    %c0_i32 = arith.constant 0 : i32
    %c0_i32_0 = arith.constant 0 : i32
    %c0_i32_1 = arith.constant 0 : i32
    return %c0_i32, %c0_i32_0 : i32, i32
  }
  func.func @transform_2(%arg0: i32) -> (i32, i32) {
    %c0_i32 = arith.constant 0 : i32
    %c0_i32_0 = arith.constant 0 : i32
    %c0_i32_1 = arith.constant 0 : i32
    return %c0_i32, %c0_i32_0 : i32, i32
  }
  func.func @transform_3(%arg0: i32) -> (i32, i32) {
    %c0_i32 = arith.constant 0 : i32
    %c0_i32_0 = arith.constant 0 : i32
    %c0_i32_1 = arith.constant 0 : i32
    return %c0_i32, %c0_i32_0 : i32, i32
  }
  func.func @transform_4(%arg0: i32) -> (i32, i32) {
    %c0_i32 = arith.constant 0 : i32
    %c0_i32_0 = arith.constant 0 : i32
    return %arg0, %c0_i32 : i32, i32
  }
  func.func @transform_5(%arg0: i32) -> (i32, i32, i32) {
    %c0_i32 = arith.constant 0 : i32
    %c0_i32_0 = arith.constant 0 : i32
    %c0_i32_1 = arith.constant 0 : i32
    return %arg0, %c0_i32, %c0_i32_0 : i32, i32, i32
  }
}

module attributes {stable_mosaic.version = 11 : i64} {
  func.func @_bn_relu_kernel(%arg0: i32, %arg1: memref<512x128xbf16, #tpu.memory_space<vmem>>, %arg2: memref<1x128xf32, #tpu.memory_space<vmem>>, %arg3: memref<1x128xf32, #tpu.memory_space<vmem>>, %arg4: memref<512x128xf32, #tpu.memory_space<vmem>>) attributes {dimension_semantics = [#tpu.dimension_semantics<parallel>], iteration_bounds = array<i64: 1>, scalar_prefetch = 0 : i64, scratch_operands = 0 : i64, tpu.core_type = #tpu.core_type<tc>, window_params = [{transform_indices = @transform_0, window_bounds = array<i64: 512, 128>}, {pipeline_mode = #tpu.pipeline_mode<synchronous>, transform_indices = @transform_1, window_bounds = array<i64: 1, 128>}, {pipeline_mode = #tpu.pipeline_mode<synchronous>, transform_indices = @transform_2, window_bounds = array<i64: 1, 128>}, {transform_indices = @transform_3, window_bounds = array<i64: 512, 128>}]} {
    %c0 = arith.constant 0 : index
    %c0_0 = arith.constant 0 : index
    %0 = vector.load %arg1[%c0, %c0_0] : memref<512x128xbf16, #tpu.memory_space<vmem>>, vector<512x128xbf16>
    %1 = arith.extf %0 : vector<512x128xbf16> to vector<512x128xf32>
    %c0_1 = arith.constant 0 : index
    %c0_2 = arith.constant 0 : index
    %2 = vector.load %arg2[%c0_1, %c0_2] : memref<1x128xf32, #tpu.memory_space<vmem>>, vector<1x128xf32>
    %3 = vector.broadcast %2 : vector<1x128xf32> to vector<512x128xf32>
    %4 = arith.mulf %1, %3 : vector<512x128xf32>
    %c0_3 = arith.constant 0 : index
    %c0_4 = arith.constant 0 : index
    %5 = vector.load %arg3[%c0_3, %c0_4] : memref<1x128xf32, #tpu.memory_space<vmem>>, vector<1x128xf32>
    %6 = vector.broadcast %5 : vector<1x128xf32> to vector<512x128xf32>
    %7 = arith.addf %4, %6 : vector<512x128xf32>
    %cst = arith.constant 0.000000e+00 : f32
    %8 = vector.broadcast %cst : f32 to vector<512x128xf32>
    %9 = arith.maximumf %7, %8 : vector<512x128xf32>
    %c0_5 = arith.constant 0 : index
    %c0_6 = arith.constant 0 : index
    %10 = vector.load %arg4[%c0_5, %c0_6] : memref<512x128xf32, #tpu.memory_space<vmem>>, vector<512x128xf32>
    tpu.vector_store %arg4[%c0_5, %c0_6], %9 {strides = array<i32>} : memref<512x128xf32, #tpu.memory_space<vmem>>, vector<512x128xf32>,
    return
  }
  func.func @transform_0(%arg0: i32) -> (i32, i32) {
    %c0_i32 = arith.constant 0 : i32
    %c0_i32_0 = arith.constant 0 : i32
    return %arg0, %c0_i32 : i32, i32
  }
  func.func @transform_1(%arg0: i32) -> (i32, i32) {
    %c0_i32 = arith.constant 0 : i32
    %c0_i32_0 = arith.constant 0 : i32
    %c0_i32_1 = arith.constant 0 : i32
    return %c0_i32, %c0_i32_0 : i32, i32
  }
  func.func @transform_2(%arg0: i32) -> (i32, i32) {
    %c0_i32 = arith.constant 0 : i32
    %c0_i32_0 = arith.constant 0 : i32
    %c0_i32_1 = arith.constant 0 : i32
    return %c0_i32, %c0_i32_0 : i32, i32
  }
  func.func @transform_3(%arg0: i32) -> (i32, i32) {
    %c0_i32 = arith.constant 0 : i32
    %c0_i32_0 = arith.constant 0 : i32
    return %arg0, %c0_i32 : i32, i32
  }
}

</mosaic_0001>

<llo_original>
// kernel: tile.13
$region0: #{tile.13}
  #allocation0 [shape = 's32[1]{0}', space=sflag, size = 0x4, scoped, tag = 'scoped memory for tile.13']
  %s0 = inlined_call_operand.vmem [shape: f32[8], index: 0, kind: input, shape index: {}]
  %s1 = inlined_call_operand.vmem [shape: f32[9,8], index: 1, kind: output, shape index: {}]
  // Predicated region
  $region2: #{tile.13} parent=0 // pred_check
    _
  $region3: #{tile.13} parent=0 // pred_check_branch
    %3 = sbr.rel (0) target = $region5
  $region4: #{tile.13} parent=0 // pred_region
    _
  $region5: #{tile.13} parent=0 // pred_fallthru
    _
  %v4 = vld [vmem:[%s0] ss:$0 sm:$0xff]
  %5 = vst [vmem:[%s1] sm:$0xff] %v4
  %s6 = scalar_lea.vmem %s1, 8
  %7 = vst [vmem:[%s6] sm:$0xff] %v4

// kernel: tile.14
$region0: #{tile.14}
  %s0 = inlined_call_operand.vmem [shape: f32[9,8], index: 0, kind: input, shape index: {}]
  %s1 = inlined_call_operand.vmem [shape: f32[72], index: 1, kind: output, shape index: {}]
  $region1: #{tile.14} parent=0
    #allocation0 [shape = 'u8[4096]{0}', space=vmem, size = 0x1000, scoped, tag = 'scoped mem for output reshape']
    %v2 = vld [vmem:[%s0] sm:$0x1]
    %vm3 = vcmask 64512
    %4 = vst.msk [vmem:[#allocation0] sm:$0x1] %vm3, %v2
    %s5 = scalar_lea.vmem %s0, 8
    %v6 = vld [vmem:[%s5] sm:$0x1]
    %7 = vrot.lane.b32.xlu0 %v6, 64
    %v8 = vpop.permute.xlu0 %7
    %vm9 = vcmask 589312
    %10 = vst.msk [vmem:[#allocation0] sm:$0x1] %vm9, %v8
    %s11 = scalar_lea.vmem %s0, 7
    %v12 = vld [vmem:[%s11] sm:$0x1]
    %13 = vrot.lane.b32.xlu0 %v12, 56
    %v14 = vpop.permute.xlu0 %13
    %vm15 = vcmask 523712
    %16 = vst.msk [vmem:[#allocation0] sm:$0x1] %vm15, %v14
    %s17 = scalar_lea.vmem %s0, 6
    %v18 = vld [vmem:[%s17] sm:$0x1]
    %19 = vrot.lane.b32.xlu0 %v18, 48
    %v20 = vpop.permute.xlu0 %19
    %vm21 = vcmask 458112
    %22 = vst.msk [vmem:[#allocation0] sm:$0x1] %vm21, %v20
    %s23 = scalar_lea.vmem %s0, 5
    %v24 = vld [vmem:[%s23] sm:$0x1]
    %25 = vrot.lane.b32.xlu0 %v24, 40
    %v26 = vpop.permute.xlu0 %25
    %vm27 = vcmask 392512
    %28 = vst.msk [vmem:[#allocation0] sm:$0x1] %vm27, %v26
    %s29 = scalar_lea.vmem %s0, 4
    %v30 = vld [vmem:[%s29] sm:$0x1]
    %31 = vrot.lane.b32.xlu0 %v30, 32
    %v32 = vpop.permute.xlu0 %31
    %vm33 = vcmask 326912
    %34 = vst.msk [vmem:[#allocation0] sm:$0x1] %vm33, %v32
    %s35 = scalar_lea.vmem %s0, 3
    %v36 = vld [vmem:[%s35] sm:$0x1]
    %37 = vrot.lane.b32.xlu0 %v36, 24
    %v38 = vpop.permute.xlu0 %37
    %vm39 = vcmask 261312
    %40 = vst.msk [vmem:[#allocation0] sm:$0x1] %vm39, %v38
    %s41 = scalar_lea.vmem %s0, 2
    %v42 = vld [vmem:[%s41] sm:$0x1]
    %43 = vrot.lane.b32.xlu0 %v42, 16
    %v44 = vpop.permute.xlu0 %43
    %vm45 = vcmask 195712
    %46 = vst.msk [vmem:[#allocation0] sm:$0x1] %vm45, %v44
    %s47 = scalar_lea.vmem %s0, 1
    %v48 = vld [vmem:[%s47] sm:$0x1]
    %49 = vrot.lane.b32.xlu0 %v48, 8
    %v50 = vpop.permute.xlu0 %49
    %vm51 = vcmask 130112
    %52 = vst.msk [vmem:[#allocation0] sm:$0x1] %vm51, %v50
    %s54 = sshll.u32 1, 1
    %s55 = ssub.s32 %s54, 1
    %v57 = vld [vmem:[#allocation0] sm:%s55]
    %s58 = sshll.u32 1, 1
    %s59 = ssub.s32 %s58, 1
    %60 = vst [vmem:[%s1] sm:%s59] %v57

// kernel: basic_block_noshortcut.3
$region0: #{basic_block_noshortcut.3}
  #allocation0 [shape = 'u32[]', space=smem, size = 0x4, offset = 0x4, fixed_abs, tag = 'smem constant byte address 0x4 - core index']
  #allocation1 [shape = 'u32[144,128]{1,0:T(1,128)}', space=vmem, size = 0x12000, scoped, tag = 'internal scratch']
  %s0 = inlined_call_operand.vmem [shape: bf16[512,128], index: 0, kind: input, shape index: {}]
  %s1 = inlined_call_operand.vmem [shape: bf16[128,128], index: 1, kind: input, shape index: {}]
  %s2 = inlined_call_operand.vmem [shape: bf16[512,128], index: 2, kind: output, shape index: {0}]
  %s3 = inlined_call_operand.vmem [shape: f32[1,2,128], index: 3, kind: output, shape index: {1}]
  %4 = xla_tuple %s2, %s3
  %s5 = sld [smem:[#allocation0]]
  $region26: #{basic_block_noshortcut.3} parent=0
    _
  %s7 = ssub.s32 1, %s5
  %s8 = scalar_select 0, %s7, %s5
  // Predicated region
  $region2: #{basic_block_noshortcut.3} parent=0 // pred_check
    _
  $region3: #{basic_block_noshortcut.3} parent=0 // pred_check_branch
    %10 = sbr.rel (0) target = $region5
  $region4: #{basic_block_noshortcut.3} parent=0 // pred_region
    _
  $region5: #{basic_block_noshortcut.3} parent=0 // pred_fallthru
    _
  // Predicated region
  $region6: #{basic_block_noshortcut.3} parent=0 // pred_check
    _
  $region7: #{basic_block_noshortcut.3} parent=0 // pred_check_branch
    %12 = sbr.rel (0) target = $region9
  $region8: #{basic_block_noshortcut.3} parent=0 // pred_region
    _
  $region9: #{basic_block_noshortcut.3} parent=0 // pred_fallthru
    _
  %v14 = vld [vmem:[%s0] sm:$0xf]
  %v15 = vld [vmem:[%s0 + $0x4] sm:$0xf]
  %v16 = vld [vmem:[%s0 + $0x8] sm:$0xf]
  %v17 = vld [vmem:[%s0 + $0xc] sm:$0xf]
  %v18 = vld [vmem:[%s0 + $0x10] sm:$0xf]
  %v19 = vld [vmem:[%s0 + $0x14] sm:$0xf]
  %v20 = vld [vmem:[%s0 + $0x18] sm:$0xf]
  %v21 = vld [vmem:[%s0 + $0x1c] sm:$0xf]
  %v22 = vld [vmem:[%s0 + $0x20] sm:$0xf]
  %v23 = vld [vmem:[%s0 + $0x24] sm:$0xf]
  %v24 = vld [vmem:[%s0 + $0x28] sm:$0xf]
  %v25 = vld [vmem:[%s0 + $0x2c] sm:$0xf]
  %v26 = vld [vmem:[%s0 + $0x30] sm:$0xf]
  %v27 = vld [vmem:[%s0 + $0x34] sm:$0xf]
  %v28 = vld [vmem:[%s0 + $0x38] sm:$0xf]
  %v29 = vld [vmem:[%s0 + $0x3c] sm:$0xf]
  %v30 = vld [vmem:[%s0 + $0x40] sm:$0xf]
  %v31 = vld [vmem:[%s0 + $0x44] sm:$0xf]
  %v32 = vld [vmem:[%s0 + $0x48] sm:$0xf]
  %v33 = vld [vmem:[%s0 + $0x4c] sm:$0xf]
  %v34 = vld [vmem:[%s0 + $0x50] sm:$0xf]
  %v35 = vld [vmem:[%s0 + $0x54] sm:$0xf]
  %v36 = vld [vmem:[%s0 + $0x58] sm:$0xf]
  %v37 = vld [vmem:[%s0 + $0x5c] sm:$0xf]
  %v38 = vld [vmem:[%s0 + $0x60] sm:$0xf]
  %v39 = vld [vmem:[%s0 + $0x64] sm:$0xf]
  %v40 = vld [vmem:[%s0 + $0x68] sm:$0xf]
  %v41 = vld [vmem:[%s0 + $0x6c] sm:$0xf]
  %v42 = vld [vmem:[%s0 + $0x70] sm:$0xf]
  %v43 = vld [vmem:[%s0 + $0x74] sm:$0xf]
  %v44 = vld [vmem:[%s0 + $0x78] sm:$0xf]
  %v45 = vld [vmem:[%s0 + $0x7c] sm:$0xf]
  %v46 = vld [vmem:[%s0 + $0x80] sm:$0xf]
  %v47 = vld [vmem:[%s0 + $0x84] sm:$0xf]
  %v48 = vld [vmem:[%s0 + $0x88] sm:$0xf]
  %v49 = vld [vmem:[%s0 + $0x8c] sm:$0xf]
  %v50 = vld [vmem:[%s0 + $0x90] sm:$0xf]
  %v51 = vld [vmem:[%s0 + $0x94] sm:$0xf]
  %v52 = vld [vmem:[%s0 + $0x98] sm:$0xf]
  %v53 = vld [vmem:[%s0 + $0x9c] sm:$0xf]
  %v54 = vld [vmem:[%s0 + $0xa0] sm:$0xf]
  %v55 = vld [vmem:[%s0 + $0xa4] sm:$0xf]
  %v56 = vld [vmem:[%s0 + $0xa8] sm:$0xf]
  %v57 = vld [vmem:[%s0 + $0xac] sm:$0xf]
  %v58 = vld [vmem:[%s0 + $0xb0] sm:$0xf]
  %v59 = vld [vmem:[%s0 + $0xb4] sm:$0xf]
  %v60 = vld [vmem:[%s0 + $0xb8] sm:$0xf]
  %v61 = vld [vmem:[%s0 + $0xbc] sm:$0xf]
  %v62 = vld [vmem:[%s0 + $0xc0] sm:$0xf]
  %v63 = vld [vmem:[%s0 + $0xc4] sm:$0xf]
  %v64 = vld [vmem:[%s0 + $0xc8] sm:$0xf]
  %v65 = vld [vmem:[%s0 + $0xcc] sm:$0xf]
  %v66 = vld [vmem:[%s0 + $0xd0] sm:$0xf]
  %v67 = vld [vmem:[%s0 + $0xd4] sm:$0xf]
  %v68 = vld [vmem:[%s0 + $0xd8] sm:$0xf]
  %v69 = vld [vmem:[%s0 + $0xdc] sm:$0xf]
  %v70 = vld [vmem:[%s0 + $0xe0] sm:$0xf]
  %v71 = vld [vmem:[%s0 + $0xe4] sm:$0xf]
  %v72 = vld [vmem:[%s0 + $0xe8] sm:$0xf]
  %v73 = vld [vmem:[%s0 + $0xec] sm:$0xf]
  %v74 = vld [vmem:[%s0 + $0xf0] sm:$0xf]
  %v75 = vld [vmem:[%s0 + $0xf4] sm:$0xf]
  %v76 = vld [vmem:[%s0 + $0xf8] sm:$0xf]
  %v77 = vld [vmem:[%s0 + $0xfc] sm:$0xf]
  %v78 = vld [vmem:[%s1] sm:$0xf]
  %v79 = vld [vmem:[%s1 + $0x4] sm:$0xf]
  %v80 = vld [vmem:[%s1 + $0x8] sm:$0xf]
  %v81 = vld [vmem:[%s1 + $0xc] sm:$0xf]
  %v82 = vld [vmem:[%s1 + $0x10] sm:$0xf]
  %v83 = vld [vmem:[%s1 + $0x14] sm:$0xf]
  %v84 = vld [vmem:[%s1 + $0x18] sm:$0xf]
  %v85 = vld [vmem:[%s1 + $0x1c] sm:$0xf]
  %v86 = vld [vmem:[%s1 + $0x20] sm:$0xf]
  %v87 = vld [vmem:[%s1 + $0x24] sm:$0xf]
  %v88 = vld [vmem:[%s1 + $0x28] sm:$0xf]
  %v89 = vld [vmem:[%s1 + $0x2c] sm:$0xf]
  %v90 = vld [vmem:[%s1 + $0x30] sm:$0xf]
  %v91 = vld [vmem:[%s1 + $0x34] sm:$0xf]
  %v92 = vld [vmem:[%s1 + $0x38] sm:$0xf]
  %v93 = vld [vmem:[%s1 + $0x3c] sm:$0xf]
  %v158 = vunpack.c.l.b16 %v14
  %v159 = vunpack.c.l.b16 %v15
  %v160 = vunpack.c.l.b16 %v16
  %v161 = vunpack.c.l.b16 %v17
  %v162 = vunpack.c.l.b16 %v18
  %v163 = vunpack.c.l.b16 %v19
  %v164 = vunpack.c.l.b16 %v20
  %v165 = vunpack.c.l.b16 %v21
  %v166 = vunpack.c.l.b16 %v22
  %v167 = vunpack.c.l.b16 %v23
  %v168 = vunpack.c.l.b16 %v24
  %v169 = vunpack.c.l.b16 %v25
  %v170 = vunpack.c.l.b16 %v26
  %v171 = vunpack.c.l.b16 %v27
  %v172 = vunpack.c.l.b16 %v28
  %v173 = vunpack.c.l.b16 %v29
  %v174 = vunpack.c.l.b16 %v30
  %v175 = vunpack.c.l.b16 %v31
  %v176 = vunpack.c.l.b16 %v32
  %v177 = vunpack.c.l.b16 %v33
  %v178 = vunpack.c.l.b16 %v34
  %v179 = vunpack.c.l.b16 %v35
  %v180 = vunpack.c.l.b16 %v36
  %v181 = vunpack.c.l.b16 %v37
  %v182 = vunpack.c.l.b16 %v38
  %v183 = vunpack.c.l.b16 %v39
  %v184 = vunpack.c.l.b16 %v40
  %v185 = vunpack.c.l.b16 %v41
  %v186 = vunpack.c.l.b16 %v42
  %v187 = vunpack.c.l.b16 %v43
  %v188 = vunpack.c.l.b16 %v44
  %v189 = vunpack.c.l.b16 %v45
  %v190 = vunpack.c.l.b16 %v46
  %v191 = vunpack.c.l.b16 %v47
  %v192 = vunpack.c.l.b16 %v48
  %v193 = vunpack.c.l.b16 %v49
  %v194 = vunpack.c.l.b16 %v50
  %v195 = vunpack.c.l.b16 %v51
  %v196 = vunpack.c.l.b16 %v52
  %v197 = vunpack.c.l.b16 %v53
  %v198 = vunpack.c.l.b16 %v54
  %v199 = vunpack.c.l.b16 %v55
  %v200 = vunpack.c.l.b16 %v56
  %v201 = vunpack.c.l.b16 %v57
  %v202 = vunpack.c.l.b16 %v58
  %v203 = vunpack.c.l.b16 %v59
  %v204 = vunpack.c.l.b16 %v60
  %v205 = vunpack.c.l.b16 %v61
  %v206 = vunpack.c.l.b16 %v62
  %v207 = vunpack.c.l.b16 %v63
  %v208 = vunpack.c.l.b16 %v64
  %v209 = vunpack.c.l.b16 %v65
  %v210 = vunpack.c.l.b16 %v66
  %v211 = vunpack.c.l.b16 %v67
  %v212 = vunpack.c.l.b16 %v68
  %v213 = vunpack.c.l.b16 %v69
  %v214 = vunpack.c.l.b16 %v70
  %v215 = vunpack.c.l.b16 %v71
  %v216 = vunpack.c.l.b16 %v72
  %v217 = vunpack.c.l.b16 %v73
  %v218 = vunpack.c.l.b16 %v74
  %v219 = vunpack.c.l.b16 %v75
  %v220 = vunpack.c.l.b16 %v76
  %v221 = vunpack.c.l.b16 %v77
  %v222 = vpack.c.b16 %v159, %v158
  %v223 = vpack.c.b16 %v161, %v160
  %v224 = vpack.c.b16 %v163, %v162
  %v225 = vpack.c.b16 %v165, %v164
  %v226 = vpack.c.b16 %v167, %v166
  %v227 = vpack.c.b16 %v169, %v168
  %v228 = vpack.c.b16 %v171, %v170
  %v229 = vpack.c.b16 %v173, %v172
  %v230 = vpack.c.b16 %v175, %v174
  %v231 = vpack.c.b16 %v177, %v176
  %v232 = vpack.c.b16 %v179, %v178
  %v233 = vpack.c.b16 %v181, %v180
  %v234 = vpack.c.b16 %v183, %v182
  %v235 = vpack.c.b16 %v185, %v184
  %v236 = vpack.c.b16 %v187, %v186
  %v237 = vpack.c.b16 %v189, %v188
  %v238 = vpack.c.b16 %v191, %v190
  %v239 = vpack.c.b16 %v193, %v192
  %v240 = vpack.c.b16 %v195, %v194
  %v241 = vpack.c.b16 %v197, %v196
  %v242 = vpack.c.b16 %v199, %v198
  %v243 = vpack.c.b16 %v201, %v200
  %v244 = vpack.c.b16 %v203, %v202
  %v245 = vpack.c.b16 %v205, %v204
  %v246 = vpack.c.b16 %v207, %v206
  %v247 = vpack.c.b16 %v209, %v208
  %v248 = vpack.c.b16 %v211, %v210
  %v249 = vpack.c.b16 %v213, %v212
  %v250 = vpack.c.b16 %v215, %v214
  %v251 = vpack.c.b16 %v217, %v216
  %v252 = vpack.c.b16 %v219, %v218
  %v253 = vpack.c.b16 %v221, %v220
  %v302 = vunpack.c.l.b16 %v78
  %v303 = vunpack.c.l.b16 %v79
  %v304 = vunpack.c.l.b16 %v80
  %v305 = vunpack.c.l.b16 %v81
  %v306 = vunpack.c.l.b16 %v82
  %v307 = vunpack.c.l.b16 %v83
  %v308 = vunpack.c.l.b16 %v84
  %v309 = vunpack.c.l.b16 %v85
  %v310 = vunpack.c.l.b16 %v86
  %v311 = vunpack.c.l.b16 %v87
  %v312 = vunpack.c.l.b16 %v88
  %v313 = vunpack.c.l.b16 %v89
  %v314 = vunpack.c.l.b16 %v90
  %v315 = vunpack.c.l.b16 %v91
  %v316 = vunpack.c.l.b16 %v92
  %v317 = vunpack.c.l.b16 %v93
  %v318 = vpack.c.b16 %v303, %v302
  %v319 = vpack.c.b16 %v305, %v304
  %v320 = vpack.c.b16 %v307, %v306
  %v321 = vpack.c.b16 %v309, %v308
  %v322 = vpack.c.b16 %v311, %v310
  %v323 = vpack.c.b16 %v313, %v312
  %v324 = vpack.c.b16 %v315, %v314
  %v325 = vpack.c.b16 %v317, %v316
  %334 = vmatprep.subr.bf16.mxu0 0
  %335 = vmatpush1.bf16.msra.mxu0 %v325
  %336 = vmatprep.subr.bf16.mxu0 0
  %337 = vmatpush1.bf16.msra.mxu0 %v324
  %338 = vmatprep.subr.bf16.mxu0 0
  %339 = vmatpush1.bf16.msra.mxu0 %v323
  %340 = vmatprep.subr.bf16.mxu0 0
  %341 = vmatpush1.bf16.msra.mxu0 %v322
  %342 = vmatprep.subr.bf16.mxu0 0
  %343 = vmatpush1.bf16.msra.mxu0 %v321
  %344 = vmatprep.subr.bf16.mxu0 0
  %345 = vmatpush1.bf16.msra.mxu0 %v320
  %346 = vmatprep.subr.bf16.mxu0 0
  %347 = vmatpush1.bf16.msra.mxu0 %v319
  %348 = vmatprep.subr.bf16.mxu0 0
  %349 = vmatpush1.bf16.msra.mxu0 %v318
  %350 = vmatprep.subr.bf16.mxu0 0
  %351 = vmatpush2.bf16.msra.mxu0 0
  %352 = vmatprep.subr.bf16.mxu0 0
  %353 = vmatpush2.bf16.msra.mxu0 0
  %354 = vmatprep.subr.bf16.mxu0 0
  %355 = vmatpush2.bf16.msra.mxu0 0
  %356 = vmatprep.subr.bf16.mxu0 0
  %357 = vmatpush2.bf16.msra.mxu0 0
  %358 = vmatprep.subr.bf16.mxu0 0
  %359 = vmatpush2.bf16.msra.mxu0 0
  %360 = vmatprep.subr.bf16.mxu0 0
  %361 = vmatpush2.bf16.msra.mxu0 0
  %362 = vmatprep.subr.bf16.mxu0 0
  %363 = vmatpush2.bf16.msra.mxu0 0
  %364 = vmatprep.subr.bf16.mxu0 0
  %365 = vmatpush2.bf16.msra.mxu0 0
  %366 = vmatprep.mubr.bf16.mxu0 0
  %367 = vmatmul.mubr.bf16.gmra.mxu0 %v222
  %v368 = vpop.f32.mrf.mxu0
  %v369 = vadd.f32 0.0, %v368
  %v370 = vpop.f32.mrf.mxu0
  %v371 = vpop.f32.mrf.mxu0
  %v372 = vadd.f32 0.0, %v371
  %v373 = vpop.f32.mrf.mxu0
  %374 = vmatprep.mubr.bf16.mxu0 0
  %375 = vmatmul.mubr.bf16.gmra.mxu0 %v223
  %v376 = vpop.f32.mrf.mxu0
  %v377 = vadd.f32 0.0, %v376
  %v378 = vpop.f32.mrf.mxu0
  %v379 = vpop.f32.mrf.mxu0
  %v380 = vadd.f32 0.0, %v379
  %v381 = vpop.f32.mrf.mxu0
  %382 = vmatprep.mubr.bf16.mxu0 0
  %383 = vmatmul.mubr.bf16.gmra.mxu0 %v224
  %v384 = vpop.f32.mrf.mxu0
  %v385 = vadd.f32 0.0, %v384
  %v386 = vpop.f32.mrf.mxu0
  %v387 = vpop.f32.mrf.mxu0
  %v388 = vadd.f32 0.0, %v387
  %v389 = vpop.f32.mrf.mxu0
  %390 = vmatprep.mubr.bf16.mxu0 0
  %391 = vmatmul.mubr.bf16.gmra.mxu0 %v225
  %v392 = vpop.f32.mrf.mxu0
  %v393 = vadd.f32 0.0, %v392
  %v394 = vpop.f32.mrf.mxu0
  %v395 = vpop.f32.mrf.mxu0
  %v396 = vadd.f32 0.0, %v395
  %v397 = vpop.f32.mrf.mxu0
  %398 = vmatprep.mubr.bf16.mxu0 0
  %399 = vmatmul.mubr.bf16.gmra.mxu0 %v226
  %v400 = vpop.f32.mrf.mxu0
  %v401 = vadd.f32 0.0, %v400
  %v402 = vpop.f32.mrf.mxu0
  %v403 = vpop.f32.mrf.mxu0
  %v404 = vadd.f32 0.0, %v403
  %v405 = vpop.f32.mrf.mxu0
  %406 = vmatprep.mubr.bf16.mxu0 0
  %407 = vmatmul.mubr.bf16.gmra.mxu0 %v227
  %v408 = vpop.f32.mrf.mxu0
  %v409 = vadd.f32 0.0, %v408
  %v410 = vpop.f32.mrf.mxu0
  %v411 = vpop.f32.mrf.mxu0
  %v412 = vadd.f32 0.0, %v411
  %v413 = vpop.f32.mrf.mxu0
  %414 = vmatprep.mubr.bf16.mxu0 0
  %415 = vmatmul.mubr.bf16.gmra.mxu0 %v228
  %v416 = vpop.f32.mrf.mxu0
  %v417 = vadd.f32 0.0, %v416
  %v418 = vpop.f32.mrf.mxu0
  %v419 = vpop.f32.mrf.mxu0
  %v420 = vadd.f32 0.0, %v419
  %v421 = vpop.f32.mrf.mxu0
  %422 = vmatprep.mubr.bf16.mxu0 0
  %423 = vmatmul.mubr.bf16.gmra.mxu0 %v229
  %v424 = vpop.f32.mrf.mxu0
  %v425 = vadd.f32 0.0, %v424
  %v426 = vpop.f32.mrf.mxu0
  %v427 = vpop.f32.mrf.mxu0
  %v428 = vadd.f32 0.0, %v427
  %v429 = vpop.f32.mrf.mxu0
  %430 = vmatprep.mubr.bf16.mxu0 0
  %431 = vmatmul.mubr.bf16.gmra.mxu0 %v230
  %v432 = vpop.f32.mrf.mxu0
  %v433 = vadd.f32 0.0, %v432
  %v434 = vpop.f32.mrf.mxu0
  %v435 = vpop.f32.mrf.mxu0
  %v436 = vadd.f32 0.0, %v435
  %v437 = vpop.f32.mrf.mxu0
  %438 = vmatprep.mubr.bf16.mxu0 0
  %439 = vmatmul.mubr.bf16.gmra.mxu0 %v231
  %v440 = vpop.f32.mrf.mxu0
  %v441 = vadd.f32 0.0, %v440
  %v442 = vpop.f32.mrf.mxu0
  %v443 = vpop.f32.mrf.mxu0
  %v444 = vadd.f32 0.0, %v443
  %v445 = vpop.f32.mrf.mxu0
  %446 = vmatprep.mubr.bf16.mxu0 0
  %447 = vmatmul.mubr.bf16.gmra.mxu0 %v232
  %v448 = vpop.f32.mrf.mxu0
  %v449 = vadd.f32 0.0, %v448
  %v450 = vpop.f32.mrf.mxu0
  %v451 = vpop.f32.mrf.mxu0
  %v452 = vadd.f32 0.0, %v451
  %v453 = vpop.f32.mrf.mxu0
  %454 = vmatprep.mubr.bf16.mxu0 0
  %455 = vmatmul.mubr.bf16.gmra.mxu0 %v233
  %v456 = vpop.f32.mrf.mxu0
  %v457 = vadd.f32 0.0, %v456
  %v458 = vpop.f32.mrf.mxu0
  %v459 = vpop.f32.mrf.mxu0
  %v460 = vadd.f32 0.0, %v459
  %v461 = vpop.f32.mrf.mxu0
  %462 = vmatprep.mubr.bf16.mxu0 0
  %463 = vmatmul.mubr.bf16.gmra.mxu0 %v234
  %v464 = vpop.f32.mrf.mxu0
  %v465 = vadd.f32 0.0, %v464
  %v466 = vpop.f32.mrf.mxu0
  %v467 = vpop.f32.mrf.mxu0
  %v468 = vadd.f32 0.0, %v467
  %v469 = vpop.f32.mrf.mxu0
  %470 = vmatprep.mubr.bf16.mxu0 0
  %471 = vmatmul.mubr.bf16.gmra.mxu0 %v235
  %v472 = vpop.f32.mrf.mxu0
  %v473 = vadd.f32 0.0, %v472
  %v474 = vpop.f32.mrf.mxu0
  %v475 = vpop.f32.mrf.mxu0
  %v476 = vadd.f32 0.0, %v475
  %v477 = vpop.f32.mrf.mxu0
  %478 = vmatprep.mubr.bf16.mxu0 0
  %479 = vmatmul.mubr.bf16.gmra.mxu0 %v236
  %v480 = vpop.f32.mrf.mxu0
  %v481 = vadd.f32 0.0, %v480
  %v482 = vpop.f32.mrf.mxu0
  %v483 = vpop.f32.mrf.mxu0
  %v484 = vadd.f32 0.0, %v483
  %v485 = vpop.f32.mrf.mxu0
  %486 = vmatprep.mubr.bf16.mxu0 0
  %487 = vmatmul.mubr.bf16.gmra.mxu0 %v237
  %v488 = vpop.f32.mrf.mxu0
  %v489 = vadd.f32 0.0, %v488
  %v490 = vpop.f32.mrf.mxu0
  %v491 = vpop.f32.mrf.mxu0
  %v492 = vadd.f32 0.0, %v491
  %v493 = vpop.f32.mrf.mxu0
  %494 = vmatprep.mubr.bf16.mxu0 0
  %495 = vmatmul.mubr.bf16.gmra.mxu0 %v238
  %v496 = vpop.f32.mrf.mxu0
  %v497 = vadd.f32 0.0, %v496
  %v498 = vpop.f32.mrf.mxu0
  %v499 = vpop.f32.mrf.mxu0
  %v500 = vadd.f32 0.0, %v499
  %v501 = vpop.f32.mrf.mxu0
  %502 = vmatprep.mubr.bf16.mxu0 0
  %503 = vmatmul.mubr.bf16.gmra.mxu0 %v239
  %v504 = vpop.f32.mrf.mxu0
  %v505 = vadd.f32 0.0, %v504
  %v506 = vpop.f32.mrf.mxu0
  %v507 = vpop.f32.mrf.mxu0
  %v508 = vadd.f32 0.0, %v507
  %v509 = vpop.f32.mrf.mxu0
  %510 = vmatprep.mubr.bf16.mxu0 0
  %511 = vmatmul.mubr.bf16.gmra.mxu0 %v240
  %v512 = vpop.f32.mrf.mxu0
  %v513 = vadd.f32 0.0, %v512
  %v514 = vpop.f32.mrf.mxu0
  %v515 = vpop.f32.mrf.mxu0
  %v516 = vadd.f32 0.0, %v515
  %v517 = vpop.f32.mrf.mxu0
  %518 = vmatprep.mubr.bf16.mxu0 0
  %519 = vmatmul.mubr.bf16.gmra.mxu0 %v241
  %v520 = vpop.f32.mrf.mxu0
  %v521 = vadd.f32 0.0, %v520
  %v522 = vpop.f32.mrf.mxu0
  %v523 = vpop.f32.mrf.mxu0
  %v524 = vadd.f32 0.0, %v523
  %v525 = vpop.f32.mrf.mxu0
  %526 = vmatprep.mubr.bf16.mxu0 0
  %527 = vmatmul.mubr.bf16.gmra.mxu0 %v242
  %v528 = vpop.f32.mrf.mxu0
  %v529 = vadd.f32 0.0, %v528
  %v530 = vpop.f32.mrf.mxu0
  %v531 = vpop.f32.mrf.mxu0
  %v532 = vadd.f32 0.0, %v531
  %v533 = vpop.f32.mrf.mxu0
  %534 = vmatprep.mubr.bf16.mxu0 0
  %535 = vmatmul.mubr.bf16.gmra.mxu0 %v243
  %v536 = vpop.f32.mrf.mxu0
  %v537 = vadd.f32 0.0, %v536
  %v538 = vpop.f32.mrf.mxu0
  %v539 = vpop.f32.mrf.mxu0
  %v540 = vadd.f32 0.0, %v539
  %v541 = vpop.f32.mrf.mxu0
  %542 = vmatprep.mubr.bf16.mxu0 0
  %543 = vmatmul.mubr.bf16.gmra.mxu0 %v244
  %v544 = vpop.f32.mrf.mxu0
  %v545 = vadd.f32 0.0, %v544
  %v546 = vpop.f32.mrf.mxu0
  %v547 = vpop.f32.mrf.mxu0
  %v548 = vadd.f32 0.0, %v547
  %v549 = vpop.f32.mrf.mxu0
  %550 = vmatprep.mubr.bf16.mxu0 0
  %551 = vmatmul.mubr.bf16.gmra.mxu0 %v245
  %v552 = vpop.f32.mrf.mxu0
  %v553 = vadd.f32 0.0, %v552
  %v554 = vpop.f32.mrf.mxu0
  %v555 = vpop.f32.mrf.mxu0
  %v556 = vadd.f32 0.0, %v555
  %v557 = vpop.f32.mrf.mxu0
  %558 = vmatprep.mubr.bf16.mxu0 0
  %559 = vmatmul.mubr.bf16.gmra.mxu0 %v246
  %v560 = vpop.f32.mrf.mxu0
  %v561 = vadd.f32 0.0, %v560
  %v562 = vpop.f32.mrf.mxu0
  %v563 = vpop.f32.mrf.mxu0
  %v564 = vadd.f32 0.0, %v563
  %v565 = vpop.f32.mrf.mxu0
  %566 = vmatprep.mubr.bf16.mxu0 0
  %567 = vmatmul.mubr.bf16.gmra.mxu0 %v247
  %v568 = vpop.f32.mrf.mxu0
  %v569 = vadd.f32 0.0, %v568
  %v570 = vpop.f32.mrf.mxu0
  %v571 = vpop.f32.mrf.mxu0
  %v572 = vadd.f32 0.0, %v571
  %v573 = vpop.f32.mrf.mxu0
  %574 = vmatprep.mubr.bf16.mxu0 0
  %575 = vmatmul.mubr.bf16.gmra.mxu0 %v248
  %v576 = vpop.f32.mrf.mxu0
  %v577 = vadd.f32 0.0, %v576
  %v578 = vpop.f32.mrf.mxu0
  %v579 = vpop.f32.mrf.mxu0
  %v580 = vadd.f32 0.0, %v579
  %v581 = vpop.f32.mrf.mxu0
  %582 = vmatprep.mubr.bf16.mxu0 0
  %583 = vmatmul.mubr.bf16.gmra.mxu0 %v249
  %v584 = vpop.f32.mrf.mxu0
  %v585 = vadd.f32 0.0, %v584
  %v586 = vpop.f32.mrf.mxu0
  %v587 = vpop.f32.mrf.mxu0
  %v588 = vadd.f32 0.0, %v587
  %v589 = vpop.f32.mrf.mxu0
  %590 = vmatprep.mubr.bf16.mxu0 0
  %591 = vmatmul.mubr.bf16.gmra.mxu0 %v250
  %v592 = vpop.f32.mrf.mxu0
  %v593 = vadd.f32 0.0, %v592
  %v594 = vpop.f32.mrf.mxu0
  %v595 = vpop.f32.mrf.mxu0
  %v596 = vadd.f32 0.0, %v595
  %v597 = vpop.f32.mrf.mxu0
  %598 = vmatprep.mubr.bf16.mxu0 0
  %599 = vmatmul.mubr.bf16.gmra.mxu0 %v251
  %v600 = vpop.f32.mrf.mxu0
  %v601 = vadd.f32 0.0, %v600
  %v602 = vpop.f32.mrf.mxu0
  %v603 = vpop.f32.mrf.mxu0
  %v604 = vadd.f32 0.0, %v603
  %v605 = vpop.f32.mrf.mxu0
  %606 = vmatprep.mubr.bf16.mxu0 0
  %607 = vmatmul.mubr.bf16.gmra.mxu0 %v252
  %v608 = vpop.f32.mrf.mxu0
  %v609 = vadd.f32 0.0, %v608
  %v610 = vpop.f32.mrf.mxu0
  %v611 = vpop.f32.mrf.mxu0
  %v612 = vadd.f32 0.0, %v611
  %v613 = vpop.f32.mrf.mxu0
  %614 = vmatprep.mubr.bf16.mxu0 0
  %615 = vmatmul.mubr.bf16.gmra.mxu0 %v253
  %v616 = vpop.f32.mrf.mxu0
  %v617 = vadd.f32 0.0, %v616
  %v618 = vpop.f32.mrf.mxu0
  %v619 = vpop.f32.mrf.mxu0
  %v620 = vadd.f32 0.0, %v619
  %v621 = vpop.f32.mrf.mxu0
  %622 = vdwg.mxu0
  %v623 = vpack.c.bf16 %v372, %v369
  %v624 = vpack.c.bf16 %v380, %v377
  %v625 = vpack.c.bf16 %v388, %v385
  %v626 = vpack.c.bf16 %v396, %v393
  %v627 = vpack.c.bf16 %v404, %v401
  %v628 = vpack.c.bf16 %v412, %v409
  %v629 = vpack.c.bf16 %v420, %v417
  %v630 = vpack.c.bf16 %v428, %v425
  %v631 = vpack.c.bf16 %v436, %v433
  %v632 = vpack.c.bf16 %v444, %v441
  %v633 = vpack.c.bf16 %v452, %v449
  %v634 = vpack.c.bf16 %v460, %v457
  %v635 = vpack.c.bf16 %v468, %v465
  %v636 = vpack.c.bf16 %v476, %v473
  %v637 = vpack.c.bf16 %v484, %v481
  %v638 = vpack.c.bf16 %v492, %v489
  %v639 = vpack.c.bf16 %v500, %v497
  %v640 = vpack.c.bf16 %v508, %v505
  %v641 = vpack.c.bf16 %v516, %v513
  %v642 = vpack.c.bf16 %v524, %v521
  %v643 = vpack.c.bf16 %v532, %v529
  %v644 = vpack.c.bf16 %v540, %v537
  %v645 = vpack.c.bf16 %v548, %v545
  %v646 = vpack.c.bf16 %v556, %v553
  %v647 = vpack.c.bf16 %v564, %v561
  %v648 = vpack.c.bf16 %v572, %v569
  %v649 = vpack.c.bf16 %v580, %v577
  %v650 = vpack.c.bf16 %v588, %v585
  %v651 = vpack.c.bf16 %v596, %v593
  %v652 = vpack.c.bf16 %v604, %v601
  %v653 = vpack.c.bf16 %v612, %v609
  %v654 = vpack.c.bf16 %v620, %v617
  %v687 = vunpack.c.l.b16 %v623
  %v688 = vunpack.c.h.b16 %v623
  %v689 = vunpack.c.l.b16 %v624
  %v690 = vunpack.c.h.b16 %v624
  %v691 = vunpack.c.l.b16 %v625
  %v692 = vunpack.c.h.b16 %v625
  %v693 = vunpack.c.l.b16 %v626
  %v694 = vunpack.c.h.b16 %v626
  %v695 = vunpack.c.l.b16 %v627
  %v696 = vunpack.c.h.b16 %v627
  %v697 = vunpack.c.l.b16 %v628
  %v698 = vunpack.c.h.b16 %v628
  %v699 = vunpack.c.l.b16 %v629
  %v700 = vunpack.c.h.b16 %v629
  %v701 = vunpack.c.l.b16 %v630
  %v702 = vunpack.c.h.b16 %v630
  %v703 = vunpack.c.l.b16 %v631
  %v704 = vunpack.c.h.b16 %v631
  %v705 = vunpack.c.l.b16 %v632
  %v706 = vunpack.c.h.b16 %v632
  %v707 = vunpack.c.l.b16 %v633
  %v708 = vunpack.c.h.b16 %v633
  %v709 = vunpack.c.l.b16 %v634
  %v710 = vunpack.c.h.b16 %v634
  %v711 = vunpack.c.l.b16 %v635
  %v712 = vunpack.c.h.b16 %v635
  %v713 = vunpack.c.l.b16 %v636
  %v714 = vunpack.c.h.b16 %v636
  %v715 = vunpack.c.l.b16 %v637
  %v716 = vunpack.c.h.b16 %v637
  %v717 = vunpack.c.l.b16 %v638
  %v718 = vunpack.c.h.b16 %v638
  %v719 = vunpack.c.l.b16 %v639
  %v720 = vunpack.c.h.b16 %v639
  %v721 = vunpack.c.l.b16 %v640
  %v722 = vunpack.c.h.b16 %v640
  %v723 = vunpack.c.l.b16 %v641
  %v724 = vunpack.c.h.b16 %v641
  %v725 = vunpack.c.l.b16 %v642
  %v726 = vunpack.c.h.b16 %v642
  %v727 = vunpack.c.l.b16 %v643
  %v728 = vunpack.c.h.b16 %v643
  %v729 = vunpack.c.l.b16 %v644
  %v730 = vunpack.c.h.b16 %v644
  %v731 = vunpack.c.l.b16 %v645
  %v732 = vunpack.c.h.b16 %v645
  %v733 = vunpack.c.l.b16 %v646
  %v734 = vunpack.c.h.b16 %v646
  %v735 = vunpack.c.l.b16 %v647
  %v736 = vunpack.c.h.b16 %v647
  %v737 = vunpack.c.l.b16 %v648
  %v738 = vunpack.c.h.b16 %v648
  %v739 = vunpack.c.l.b16 %v649
  %v740 = vunpack.c.h.b16 %v649
  %v741 = vunpack.c.l.b16 %v650
  %v742 = vunpack.c.h.b16 %v650
  %v743 = vunpack.c.l.b16 %v651
  %v744 = vunpack.c.h.b16 %v651
  %v745 = vunpack.c.l.b16 %v652
  %v746 = vunpack.c.h.b16 %v652
  %v747 = vunpack.c.l.b16 %v653
  %v748 = vunpack.c.h.b16 %v653
  %v749 = vunpack.c.l.b16 %v654
  %v750 = vunpack.c.h.b16 %v654
  %v751 = vpack.c.b16 %v687, %v687
  %v752 = vpack.c.b16 %v688, %v688
  %v753 = vpack.c.b16 %v689, %v689
  %v754 = vpack.c.b16 %v690, %v690
  %v755 = vpack.c.b16 %v691, %v691
  %v756 = vpack.c.b16 %v692, %v692
  %v757 = vpack.c.b16 %v693, %v693
  %v758 = vpack.c.b16 %v694, %v694
  %v759 = vpack.c.b16 %v695, %v695
  %v760 = vpack.c.b16 %v696, %v696
  %v761 = vpack.c.b16 %v697, %v697
  %v762 = vpack.c.b16 %v698, %v698
  %v763 = vpack.c.b16 %v699, %v699
  %v764 = vpack.c.b16 %v700, %v700
  %v765 = vpack.c.b16 %v701, %v701
  %v766 = vpack.c.b16 %v702, %v702
  %v767 = vpack.c.b16 %v703, %v703
  %v768 = vpack.c.b16 %v704, %v704
  %v769 = vpack.c.b16 %v705, %v705
  %v770 = vpack.c.b16 %v706, %v706
  %v771 = vpack.c.b16 %v707, %v707
  %v772 = vpack.c.b16 %v708, %v708
  %v773 = vpack.c.b16 %v709, %v709
  %v774 = vpack.c.b16 %v710, %v710
  %v775 = vpack.c.b16 %v711, %v711
  %v776 = vpack.c.b16 %v712, %v712
  %v777 = vpack.c.b16 %v713, %v713
  %v778 = vpack.c.b16 %v714, %v714
  %v779 = vpack.c.b16 %v715, %v715
  %v780 = vpack.c.b16 %v716, %v716
  %v781 = vpack.c.b16 %v717, %v717
  %v782 = vpack.c.b16 %v718, %v718
  %v783 = vpack.c.b16 %v719, %v719
  %v784 = vpack.c.b16 %v720, %v720
  %v785 = vpack.c.b16 %v721, %v721
  %v786 = vpack.c.b16 %v722, %v722
  %v787 = vpack.c.b16 %v723, %v723
  %v788 = vpack.c.b16 %v724, %v724
  %v789 = vpack.c.b16 %v725, %v725
  %v790 = vpack.c.b16 %v726, %v726
  %v791 = vpack.c.b16 %v727, %v727
  %v792 = vpack.c.b16 %v728, %v728
  %v793 = vpack.c.b16 %v729, %v729
  %v794 = vpack.c.b16 %v730, %v730
  %v795 = vpack.c.b16 %v731, %v731
  %v796 = vpack.c.b16 %v732, %v732
  %v797 = vpack.c.b16 %v733, %v733
  %v798 = vpack.c.b16 %v734, %v734
  %v799 = vpack.c.b16 %v735, %v735
  %v800 = vpack.c.b16 %v736, %v736
  %v801 = vpack.c.b16 %v737, %v737
  %v802 = vpack.c.b16 %v738, %v738
  %v803 = vpack.c.b16 %v739, %v739
  %v804 = vpack.c.b16 %v740, %v740
  %v805 = vpack.c.b16 %v741, %v741
  %v806 = vpack.c.b16 %v742, %v742
  %v807 = vpack.c.b16 %v743, %v743
  %v808 = vpack.c.b16 %v744, %v744
  %v809 = vpack.c.b16 %v745, %v745
  %v810 = vpack.c.b16 %v746, %v746
  %v811 = vpack.c.b16 %v747, %v747
  %v812 = vpack.c.b16 %v748, %v748
  %v813 = vpack.c.b16 %v749, %v749
  %v814 = vpack.c.b16 %v750, %v750
  %879 = vst [vmem:[%s2] sm:$0xf] %v751
  %880 = vst [vmem:[%s2 + $0x4] sm:$0xf] %v752
  %881 = vst [vmem:[%s2 + $0x8] sm:$0xf] %v753
  %882 = vst [vmem:[%s2 + $0xc] sm:$0xf] %v754
  %883 = vst [vmem:[%s2 + $0x10] sm:$0xf] %v755
  %884 = vst [vmem:[%s2 + $0x14] sm:$0xf] %v756
  %885 = vst [vmem:[%s2 + $0x18] sm:$0xf] %v757
  %886 = vst [vmem:[%s2 + $0x1c] sm:$0xf] %v758
  %887 = vst [vmem:[%s2 + $0x20] sm:$0xf] %v759
  %888 = vst [vmem:[%s2 + $0x24] sm:$0xf] %v760
  %889 = vst [vmem:[%s2 + $0x28] sm:$0xf] %v761
  %890 = vst [vmem:[%s2 + $0x2c] sm:$0xf] %v762
  %891 = vst [vmem:[%s2 + $0x30] sm:$0xf] %v763
  %892 = vst [vmem:[%s2 + $0x34] sm:$0xf] %v764
  %893 = vst [vmem:[%s2 + $0x38] sm:$0xf] %v765
  %894 = vst [vmem:[%s2 + $0x3c] sm:$0xf] %v766
  %895 = vst [vmem:[%s2 + $0x40] sm:$0xf] %v767
  %896 = vst [vmem:[%s2 + $0x44] sm:$0xf] %v768
  %897 = vst [vmem:[%s2 + $0x48] sm:$0xf] %v769
  %898 = vst [vmem:[%s2 + $0x4c] sm:$0xf] %v770
  %899 = vst [vmem:[%s2 + $0x50] sm:$0xf] %v771
  %900 = vst [vmem:[%s2 + $0x54] sm:$0xf] %v772
  %901 = vst [vmem:[%s2 + $0x58] sm:$0xf] %v773
  %902 = vst [vmem:[%s2 + $0x5c] sm:$0xf] %v774
  %903 = vst [vmem:[%s2 + $0x60] sm:$0xf] %v775
  %904 = vst [vmem:[%s2 + $0x64] sm:$0xf] %v776
  %905 = vst [vmem:[%s2 + $0x68] sm:$0xf] %v777
  %906 = vst [vmem:[%s2 + $0x6c] sm:$0xf] %v778
  %907 = vst [vmem:[%s2 + $0x70] sm:$0xf] %v779
  %908 = vst [vmem:[%s2 + $0x74] sm:$0xf] %v780
  %909 = vst [vmem:[%s2 + $0x78] sm:$0xf] %v781
  %910 = vst [vmem:[%s2 + $0x7c] sm:$0xf] %v782
  %911 = vst [vmem:[%s2 + $0x80] sm:$0xf] %v783
  %912 = vst [vmem:[%s2 + $0x84] sm:$0xf] %v784
  %913 = vst [vmem:[%s2 + $0x88] sm:$0xf] %v785
  %914 = vst [vmem:[%s2 + $0x8c] sm:$0xf] %v786
  %915 = vst [vmem:[%s2 + $0x90] sm:$0xf] %v787
  %916 = vst [vmem:[%s2 + $0x94] sm:$0xf] %v788
  %917 = vst [vmem:[%s2 + $0x98] sm:$0xf] %v789
  %918 = vst [vmem:[%s2 + $0x9c] sm:$0xf] %v790
  %919 = vst [vmem:[%s2 + $0xa0] sm:$0xf] %v791
  %920 = vst [vmem:[%s2 + $0xa4] sm:$0xf] %v792
  %921 = vst [vmem:[%s2 + $0xa8] sm:$0xf] %v793
  %922 = vst [vmem:[%s2 + $0xac] sm:$0xf] %v794
  %923 = vst [vmem:[%s2 + $0xb0] sm:$0xf] %v795
  %924 = vst [vmem:[%s2 + $0xb4] sm:$0xf] %v796
  %925 = vst [vmem:[%s2 + $0xb8] sm:$0xf] %v797
  %926 = vst [vmem:[%s2 + $0xbc] sm:$0xf] %v798
  %927 = vst [vmem:[%s2 + $0xc0] sm:$0xf] %v799
  %928 = vst [vmem:[%s2 + $0xc4] sm:$0xf] %v800
  %929 = vst [vmem:[%s2 + $0xc8] sm:$0xf] %v801
  %930 = vst [vmem:[%s2 + $0xcc] sm:$0xf] %v802
  %931 = vst [vmem:[%s2 + $0xd0] sm:$0xf] %v803
  %932 = vst [vmem:[%s2 + $0xd4] sm:$0xf] %v804
  %933 = vst [vmem:[%s2 + $0xd8] sm:$0xf] %v805
  %934 = vst [vmem:[%s2 + $0xdc] sm:$0xf] %v806
  %935 = vst [vmem:[%s2 + $0xe0] sm:$0xf] %v807
  %936 = vst [vmem:[%s2 + $0xe4] sm:$0xf] %v808
  %937 = vst [vmem:[%s2 + $0xe8] sm:$0xf] %v809
  %938 = vst [vmem:[%s2 + $0xec] sm:$0xf] %v810
  %939 = vst [vmem:[%s2 + $0xf0] sm:$0xf] %v811
  %940 = vst [vmem:[%s2 + $0xf4] sm:$0xf] %v812
  %941 = vst [vmem:[%s2 + $0xf8] sm:$0xf] %v813
  %942 = vst [vmem:[%s2 + $0xfc] sm:$0xf] %v814
  %v943 = vunpack.c.l.bf16 %v623
  %v944 = vunpack.c.h.bf16 %v623
  %v945 = vunpack.c.l.bf16 %v624
  %v946 = vunpack.c.h.bf16 %v624
  %v947 = vunpack.c.l.bf16 %v625
  %v948 = vunpack.c.h.bf16 %v625
  %v949 = vunpack.c.l.bf16 %v626
  %v950 = vunpack.c.h.bf16 %v626
  %v951 = vunpack.c.l.bf16 %v627
  %v952 = vunpack.c.h.bf16 %v627
  %v953 = vunpack.c.l.bf16 %v628
  %v954 = vunpack.c.h.bf16 %v628
  %v955 = vunpack.c.l.bf16 %v629
  %v956 = vunpack.c.h.bf16 %v629
  %v957 = vunpack.c.l.bf16 %v630
  %v958 = vunpack.c.h.bf16 %v630
  %v959 = vunpack.c.l.bf16 %v631
  %v960 = vunpack.c.h.bf16 %v631
  %v961 = vunpack.c.l.bf16 %v632
  %v962 = vunpack.c.h.bf16 %v632
  %v963 = vunpack.c.l.bf16 %v633
  %v964 = vunpack.c.h.bf16 %v633
  %v965 = vunpack.c.l.bf16 %v634
  %v966 = vunpack.c.h.bf16 %v634
  %v967 = vunpack.c.l.bf16 %v635
  %v968 = vunpack.c.h.bf16 %v635
  %v969 = vunpack.c.l.bf16 %v636
  %v970 = vunpack.c.h.bf16 %v636
  %v971 = vunpack.c.l.bf16 %v637
  %v972 = vunpack.c.h.bf16 %v637
  %v973 = vunpack.c.l.bf16 %v638
  %v974 = vunpack.c.h.bf16 %v638
  %v975 = vunpack.c.l.bf16 %v639
  %v976 = vunpack.c.h.bf16 %v639
  %v977 = vunpack.c.l.bf16 %v640
  %v978 = vunpack.c.h.bf16 %v640
  %v979 = vunpack.c.l.bf16 %v641
  %v980 = vunpack.c.h.bf16 %v641
  %v981 = vunpack.c.l.bf16 %v642
  %v982 = vunpack.c.h.bf16 %v642
  %v983 = vunpack.c.l.bf16 %v643
  %v984 = vunpack.c.h.bf16 %v643
  %v985 = vunpack.c.l.bf16 %v644
  %v986 = vunpack.c.h.bf16 %v644
  %v987 = vunpack.c.l.bf16 %v645
  %v988 = vunpack.c.h.bf16 %v645
  %v989 = vunpack.c.l.bf16 %v646
  %v990 = vunpack.c.h.bf16 %v646
  %v991 = vunpack.c.l.bf16 %v647
  %v992 = vunpack.c.h.bf16 %v647
  %v993 = vunpack.c.l.bf16 %v648
  %v994 = vunpack.c.h.bf16 %v648
  %v995 = vunpack.c.l.bf16 %v649
  %v996 = vunpack.c.h.bf16 %v649
  %v997 = vunpack.c.l.bf16 %v650
  %v998 = vunpack.c.h.bf16 %v650
  %v999 = vunpack.c.l.bf16 %v651
  %v1000 = vunpack.c.h.bf16 %v651
  %v1001 = vunpack.c.l.bf16 %v652
  %v1002 = vunpack.c.h.bf16 %v652
  %v1003 = vunpack.c.l.bf16 %v653
  %v1004 = vunpack.c.h.bf16 %v653
  %v1005 = vunpack.c.l.bf16 %v654
  %v1006 = vunpack.c.h.bf16 %v654
  %v1007 = vadd.f32 %v943, %v944
  %v1008 = vadd.f32 %v1007, %v945
  %v1009 = vadd.f32 %v1008, %v946
  %v1010 = vadd.f32 %v1009, %v947
  %v1011 = vadd.f32 %v1010, %v948
  %v1012 = vadd.f32 %v1011, %v949
  %v1013 = vadd.f32 %v1012, %v950
  %v1014 = vadd.f32 %v1013, %v951
  %v1015 = vadd.f32 %v1014, %v952
  %v1016 = vadd.f32 %v1015, %v953
  %v1017 = vadd.f32 %v1016, %v954
  %v1018 = vadd.f32 %v1017, %v955
  %v1019 = vadd.f32 %v1018, %v956
  %v1020 = vadd.f32 %v1019, %v957
  %v1021 = vadd.f32 %v1020, %v958
  %v1022 = vadd.f32 %v1021, %v959
  %v1023 = vadd.f32 %v1022, %v960
  %v1024 = vadd.f32 %v1023, %v961
  %v1025 = vadd.f32 %v1024, %v962
  %v1026 = vadd.f32 %v1025, %v963
  %v1027 = vadd.f32 %v1026, %v964
  %v1028 = vadd.f32 %v1027, %v965
  %v1029 = vadd.f32 %v1028, %v966
  %v1030 = vadd.f32 %v1029, %v967
  %v1031 = vadd.f32 %v1030, %v968
  %v1032 = vadd.f32 %v1031, %v969
  %v1033 = vadd.f32 %v1032, %v970
  %v1034 = vadd.f32 %v1033, %v971
  %v1035 = vadd.f32 %v1034, %v972
  %v1036 = vadd.f32 %v1035, %v973
  %v1037 = vadd.f32 %v1036, %v974
  %v1038 = vadd.f32 %v1037, %v975
  %v1039 = vadd.f32 %v1038, %v976
  %v1040 = vadd.f32 %v1039, %v977
  %v1041 = vadd.f32 %v1040, %v978
  %v1042 = vadd.f32 %v1041, %v979
  %v1043 = vadd.f32 %v1042, %v980
  %v1044 = vadd.f32 %v1043, %v981
  %v1045 = vadd.f32 %v1044, %v982
  %v1046 = vadd.f32 %v1045, %v983
  %v1047 = vadd.f32 %v1046, %v984
  %v1048 = vadd.f32 %v1047, %v985
  %v1049 = vadd.f32 %v1048, %v986
  %v1050 = vadd.f32 %v1049, %v987
  %v1051 = vadd.f32 %v1050, %v988
  %v1052 = vadd.f32 %v1051, %v989
  %v1053 = vadd.f32 %v1052, %v990
  %v1054 = vadd.f32 %v1053, %v991
  %v1055 = vadd.f32 %v1054, %v992
  %v1056 = vadd.f32 %v1055, %v993
  %v1057 = vadd.f32 %v1056, %v994
  %v1058 = vadd.f32 %v1057, %v995
  %v1059 = vadd.f32 %v1058, %v996
  %v1060 = vadd.f32 %v1059, %v997
  %v1061 = vadd.f32 %v1060, %v998
  %v1062 = vadd.f32 %v1061, %v999
  %v1063 = vadd.f32 %v1062, %v1000
  %v1064 = vadd.f32 %v1063, %v1001
  %v1065 = vadd.f32 %v1064, %v1002
  %v1066 = vadd.f32 %v1065, %v1003
  %v1067 = vadd.f32 %v1066, %v1004
  %v1068 = vadd.f32 %v1067, %v1005
  %v1069 = vadd.f32 %v1068, %v1006
  %v1070 = vrot.slane %v1069, 4
  %v1071 = vadd.f32 %v1069, %v1070
  %v1072 = vrot.slane %v1071, 2
  %v1073 = vadd.f32 %v1071, %v1072
  %v1074 = vrot.slane %v1073, 1
  %v1075 = vadd.f32 %v1073, %v1074
  %v1076 = vmul.f32 %v943, %v943
  %v1077 = vmul.f32 %v944, %v944
  %v1078 = vmul.f32 %v945, %v945
  %v1079 = vmul.f32 %v946, %v946
  %v1080 = vmul.f32 %v947, %v947
  %v1081 = vmul.f32 %v948, %v948
  %v1082 = vmul.f32 %v949, %v949
  %v1083 = vmul.f32 %v950, %v950
  %v1084 = vmul.f32 %v951, %v951
  %v1085 = vmul.f32 %v952, %v952
  %v1086 = vmul.f32 %v953, %v953
  %v1087 = vmul.f32 %v954, %v954
  %v1088 = vmul.f32 %v955, %v955
  %v1089 = vmul.f32 %v956, %v956
  %v1090 = vmul.f32 %v957, %v957
  %v1091 = vmul.f32 %v958, %v958
  %v1092 = vmul.f32 %v959, %v959
  %v1093 = vmul.f32 %v960, %v960
  %v1094 = vmul.f32 %v961, %v961
  %v1095 = vmul.f32 %v962, %v962
  %v1096 = vmul.f32 %v963, %v963
  %v1097 = vmul.f32 %v964, %v964
  %v1098 = vmul.f32 %v965, %v965
  %v1099 = vmul.f32 %v966, %v966
  %v1100 = vmul.f32 %v967, %v967
  %v1101 = vmul.f32 %v968, %v968
  %v1102 = vmul.f32 %v969, %v969
  %v1103 = vmul.f32 %v970, %v970
  %v1104 = vmul.f32 %v971, %v971
  %v1105 = vmul.f32 %v972, %v972
  %v1106 = vmul.f32 %v973, %v973
  %v1107 = vmul.f32 %v974, %v974
  %v1108 = vmul.f32 %v975, %v975
  %v1109 = vmul.f32 %v976, %v976
  %v1110 = vmul.f32 %v977, %v977
  %v1111 = vmul.f32 %v978, %v978
  %v1112 = vmul.f32 %v979, %v979
  %v1113 = vmul.f32 %v980, %v980
  %v1114 = vmul.f32 %v981, %v981
  %v1115 = vmul.f32 %v982, %v982
  %v1116 = vmul.f32 %v983, %v983
  %v1117 = vmul.f32 %v984, %v984
  %v1118 = vmul.f32 %v985, %v985
  %v1119 = vmul.f32 %v986, %v986
  %v1120 = vmul.f32 %v987, %v987
  %v1121 = vmul.f32 %v988, %v988
  %v1122 = vmul.f32 %v989, %v989
  %v1123 = vmul.f32 %v990, %v990
  %v1124 = vmul.f32 %v991, %v991
  %v1125 = vmul.f32 %v992, %v992
  %v1126 = vmul.f32 %v993, %v993
  %v1127 = vmul.f32 %v994, %v994
  %v1128 = vmul.f32 %v995, %v995
  %v1129 = vmul.f32 %v996, %v996
  %v1130 = vmul.f32 %v997, %v997
  %v1131 = vmul.f32 %v998, %v998
  %v1132 = vmul.f32 %v999, %v999
  %v1133 = vmul.f32 %v1000, %v1000
  %v1134 = vmul.f32 %v1001, %v1001
  %v1135 = vmul.f32 %v1002, %v1002
  %v1136 = vmul.f32 %v1003, %v1003
  %v1137 = vmul.f32 %v1004, %v1004
  %v1138 = vmul.f32 %v1005, %v1005
  %v1139 = vmul.f32 %v1006, %v1006
  %v1140 = vadd.f32 %v1076, %v1077
  %v1141 = vadd.f32 %v1140, %v1078
  %v1142 = vadd.f32 %v1141, %v1079
  %v1143 = vadd.f32 %v1142, %v1080
  %v1144 = vadd.f32 %v1143, %v1081
  %v1145 = vadd.f32 %v1144, %v1082
  %v1146 = vadd.f32 %v1145, %v1083
  %v1147 = vadd.f32 %v1146, %v1084
  %v1148 = vadd.f32 %v1147, %v1085
  %v1149 = vadd.f32 %v1148, %v1086
  %v1150 = vadd.f32 %v1149, %v1087
  %v1151 = vadd.f32 %v1150, %v1088
  %v1152 = vadd.f32 %v1151, %v1089
  %v1153 = vadd.f32 %v1152, %v1090
  %v1154 = vadd.f32 %v1153, %v1091
  %v1155 = vadd.f32 %v1154, %v1092
  %v1156 = vadd.f32 %v1155, %v1093
  %v1157 = vadd.f32 %v1156, %v1094
  %v1158 = vadd.f32 %v1157, %v1095
  %v1159 = vadd.f32 %v1158, %v1096
  %v1160 = vadd.f32 %v1159, %v1097
  %v1161 = vadd.f32 %v1160, %v1098
  %v1162 = vadd.f32 %v1161, %v1099
  %v1163 = vadd.f32 %v1162, %v1100
  %v1164 = vadd.f32 %v1163, %v1101
  %v1165 = vadd.f32 %v1164, %v1102
  %v1166 = vadd.f32 %v1165, %v1103
  %v1167 = vadd.f32 %v1166, %v1104
  %v1168 = vadd.f32 %v1167, %v1105
  %v1169 = vadd.f32 %v1168, %v1106
  %v1170 = vadd.f32 %v1169, %v1107
  %v1171 = vadd.f32 %v1170, %v1108
  %v1172 = vadd.f32 %v1171, %v1109
  %v1173 = vadd.f32 %v1172, %v1110
  %v1174 = vadd.f32 %v1173, %v1111
  %v1175 = vadd.f32 %v1174, %v1112
  %v1176 = vadd.f32 %v1175, %v1113
  %v1177 = vadd.f32 %v1176, %v1114
  %v1178 = vadd.f32 %v1177, %v1115
  %v1179 = vadd.f32 %v1178, %v1116
  %v1180 = vadd.f32 %v1179, %v1117
  %v1181 = vadd.f32 %v1180, %v1118
  %v1182 = vadd.f32 %v1181, %v1119
  %v1183 = vadd.f32 %v1182, %v1120
  %v1184 = vadd.f32 %v1183, %v1121
  %v1185 = vadd.f32 %v1184, %v1122
  %v1186 = vadd.f32 %v1185, %v1123
  %v1187 = vadd.f32 %v1186, %v1124
  %v1188 = vadd.f32 %v1187, %v1125
  %v1189 = vadd.f32 %v1188, %v1126
  %v1190 = vadd.f32 %v1189, %v1127
  %v1191 = vadd.f32 %v1190, %v1128
  %v1192 = vadd.f32 %v1191, %v1129
  %v1193 = vadd.f32 %v1192, %v1130
  %v1194 = vadd.f32 %v1193, %v1131
  %v1195 = vadd.f32 %v1194, %v1132
  %v1196 = vadd.f32 %v1195, %v1133
  %v1197 = vadd.f32 %v1196, %v1134
  %v1198 = vadd.f32 %v1197, %v1135
  %v1199 = vadd.f32 %v1198, %v1136
  %v1200 = vadd.f32 %v1199, %v1137
  %v1201 = vadd.f32 %v1200, %v1138
  %v1202 = vadd.f32 %v1201, %v1139
  %v1203 = vrot.slane %v1202, 4
  %v1204 = vadd.f32 %v1202, %v1203
  %v1205 = vrot.slane %v1204, 2
  %v1206 = vadd.f32 %v1204, %v1205
  %v1207 = vrot.slane %v1206, 1
  %v1208 = vadd.f32 %v1206, %v1207
  %vm1209 = vcmask 1040384
  %v1210 = vsel %vm1209, %v1075, %v1208
  %1211 = vst [vmem:[%s3] sm:$0x3] %v1210
  // Predicated region
  $region10: #{basic_block_noshortcut.3} parent=0 // pred_check
    _
  $region11: #{basic_block_noshortcut.3} parent=0 // pred_check_branch
    %1213 = sbr.rel (0) target = $region13
  $region12: #{basic_block_noshortcut.3} parent=0 // pred_region
    _
  $region13: #{basic_block_noshortcut.3} parent=0 // pred_fallthru
    _
  // Predicated region
  $region14: #{basic_block_noshortcut.3} parent=0 // pred_check
    _
  $region15: #{basic_block_noshortcut.3} parent=0 // pred_check_branch
    %1215 = sbr.rel (0) target = $region17
  $region16: #{basic_block_noshortcut.3} parent=0 // pred_region
    _
  $region17: #{basic_block_noshortcut.3} parent=0 // pred_fallthru
    _
  // Predicated region
  $region18: #{basic_block_noshortcut.3} parent=0 // pred_check
    _
  $region19: #{basic_block_noshortcut.3} parent=0 // pred_check_branch
    %1217 = sbr.rel (0) target = $region21
  $region20: #{basic_block_noshortcut.3} parent=0 // pred_region
    _
  $region21: #{basic_block_noshortcut.3} parent=0 // pred_fallthru
    _
  // Predicated region
  $region22: #{basic_block_noshortcut.3} parent=0 // pred_check
    _
  $region23: #{basic_block_noshortcut.3} parent=0 // pred_check_branch
    %1219 = sbr.rel (0) target = $region25
  $region24: #{basic_block_noshortcut.3} parent=0 // pred_region
    _
  $region25: #{basic_block_noshortcut.3} parent=0 // pred_fallthru
    _

// kernel: basic_block_noshortcut.5
$region0: #{basic_block_noshortcut.5}
  #allocation0 [shape = 'u32[]', space=smem, size = 0x4, offset = 0x4, fixed_abs, tag = 'smem constant byte address 0x4 - core index']
  #allocation1 [shape = 'u32[144,128]{1,0:T(1,128)}', space=vmem, size = 0x12000, scoped, tag = 'internal scratch']
  %s0 = inlined_call_operand.vmem [shape: bf16[512,128], index: 0, kind: input, shape index: {}]
  %s1 = inlined_call_operand.vmem [shape: f32[1,128], index: 1, kind: input, shape index: {}]
  %s2 = inlined_call_operand.vmem [shape: f32[1,128], index: 2, kind: input, shape index: {}]
  %s3 = inlined_call_operand.vmem [shape: f32[512,128], index: 3, kind: output, shape index: {}]
  %s4 = sld [smem:[#allocation0]]
  $region22: #{basic_block_noshortcut.5} parent=0
    _
  %s6 = ssub.s32 1, %s4
  %s7 = scalar_select 0, %s6, %s4
  // Predicated region
  $region2: #{basic_block_noshortcut.5} parent=0 // pred_check
    _
  $region3: #{basic_block_noshortcut.5} parent=0 // pred_check_branch
    %9 = sbr.rel (0) target = $region5
  $region4: #{basic_block_noshortcut.5} parent=0 // pred_region
    _
  $region5: #{basic_block_noshortcut.5} parent=0 // pred_fallthru
    _
  // Predicated region
  $region6: #{basic_block_noshortcut.5} parent=0 // pred_check
    _
  $region7: #{basic_block_noshortcut.5} parent=0 // pred_check_branch
    %11 = sbr.rel (0) target = $region9
  $region8: #{basic_block_noshortcut.5} parent=0 // pred_region
    _
  $region9: #{basic_block_noshortcut.5} parent=0 // pred_fallthru
    _
  // Predicated region
  $region10: #{basic_block_noshortcut.5} parent=0 // pred_check
    _
  $region11: #{basic_block_noshortcut.5} parent=0 // pred_check_branch
    %13 = sbr.rel (0) target = $region13
  $region12: #{basic_block_noshortcut.5} parent=0 // pred_region
    _
  $region13: #{basic_block_noshortcut.5} parent=0 // pred_fallthru
    _
  %v14 = vld [vmem:[%s0] sm:$0xf]
  %v15 = vld [vmem:[%s0 + $0x4] sm:$0xf]
  %v16 = vld [vmem:[%s0 + $0x8] sm:$0xf]
  %v17 = vld [vmem:[%s0 + $0xc] sm:$0xf]
  %v18 = vld [vmem:[%s0 + $0x10] sm:$0xf]
  %v19 = vld [vmem:[%s0 + $0x14] sm:$0xf]
  %v20 = vld [vmem:[%s0 + $0x18] sm:$0xf]
  %v21 = vld [vmem:[%s0 + $0x1c] sm:$0xf]
  %v22 = vld [vmem:[%s0 + $0x20] sm:$0xf]
  %v23 = vld [vmem:[%s0 + $0x24] sm:$0xf]
  %v24 = vld [vmem:[%s0 + $0x28] sm:$0xf]
  %v25 = vld [vmem:[%s0 + $0x2c] sm:$0xf]
  %v26 = vld [vmem:[%s0 + $0x30] sm:$0xf]
  %v27 = vld [vmem:[%s0 + $0x34] sm:$0xf]
  %v28 = vld [vmem:[%s0 + $0x38] sm:$0xf]
  %v29 = vld [vmem:[%s0 + $0x3c] sm:$0xf]
  %v30 = vld [vmem:[%s0 + $0x40] sm:$0xf]
  %v31 = vld [vmem:[%s0 + $0x44] sm:$0xf]
  %v32 = vld [vmem:[%s0 + $0x48] sm:$0xf]
  %v33 = vld [vmem:[%s0 + $0x4c] sm:$0xf]
  %v34 = vld [vmem:[%s0 + $0x50] sm:$0xf]
  %v35 = vld [vmem:[%s0 + $0x54] sm:$0xf]
  %v36 = vld [vmem:[%s0 + $0x58] sm:$0xf]
  %v37 = vld [vmem:[%s0 + $0x5c] sm:$0xf]
  %v38 = vld [vmem:[%s0 + $0x60] sm:$0xf]
  %v39 = vld [vmem:[%s0 + $0x64] sm:$0xf]
  %v40 = vld [vmem:[%s0 + $0x68] sm:$0xf]
  %v41 = vld [vmem:[%s0 + $0x6c] sm:$0xf]
  %v42 = vld [vmem:[%s0 + $0x70] sm:$0xf]
  %v43 = vld [vmem:[%s0 + $0x74] sm:$0xf]
  %v44 = vld [vmem:[%s0 + $0x78] sm:$0xf]
  %v45 = vld [vmem:[%s0 + $0x7c] sm:$0xf]
  %v46 = vld [vmem:[%s0 + $0x80] sm:$0xf]
  %v47 = vld [vmem:[%s0 + $0x84] sm:$0xf]
  %v48 = vld [vmem:[%s0 + $0x88] sm:$0xf]
  %v49 = vld [vmem:[%s0 + $0x8c] sm:$0xf]
  %v50 = vld [vmem:[%s0 + $0x90] sm:$0xf]
  %v51 = vld [vmem:[%s0 + $0x94] sm:$0xf]
  %v52 = vld [vmem:[%s0 + $0x98] sm:$0xf]
  %v53 = vld [vmem:[%s0 + $0x9c] sm:$0xf]
  %v54 = vld [vmem:[%s0 + $0xa0] sm:$0xf]
  %v55 = vld [vmem:[%s0 + $0xa4] sm:$0xf]
  %v56 = vld [vmem:[%s0 + $0xa8] sm:$0xf]
  %v57 = vld [vmem:[%s0 + $0xac] sm:$0xf]
  %v58 = vld [vmem:[%s0 + $0xb0] sm:$0xf]
  %v59 = vld [vmem:[%s0 + $0xb4] sm:$0xf]
  %v60 = vld [vmem:[%s0 + $0xb8] sm:$0xf]
  %v61 = vld [vmem:[%s0 + $0xbc] sm:$0xf]
  %v62 = vld [vmem:[%s0 + $0xc0] sm:$0xf]
  %v63 = vld [vmem:[%s0 + $0xc4] sm:$0xf]
  %v64 = vld [vmem:[%s0 + $0xc8] sm:$0xf]
  %v65 = vld [vmem:[%s0 + $0xcc] sm:$0xf]
  %v66 = vld [vmem:[%s0 + $0xd0] sm:$0xf]
  %v67 = vld [vmem:[%s0 + $0xd4] sm:$0xf]
  %v68 = vld [vmem:[%s0 + $0xd8] sm:$0xf]
  %v69 = vld [vmem:[%s0 + $0xdc] sm:$0xf]
  %v70 = vld [vmem:[%s0 + $0xe0] sm:$0xf]
  %v71 = vld [vmem:[%s0 + $0xe4] sm:$0xf]
  %v72 = vld [vmem:[%s0 + $0xe8] sm:$0xf]
  %v73 = vld [vmem:[%s0 + $0xec] sm:$0xf]
  %v74 = vld [vmem:[%s0 + $0xf0] sm:$0xf]
  %v75 = vld [vmem:[%s0 + $0xf4] sm:$0xf]
  %v76 = vld [vmem:[%s0 + $0xf8] sm:$0xf]
  %v77 = vld [vmem:[%s0 + $0xfc] sm:$0xf]
  %v78 = vunpack.c.l.bf16 %v14
  %v79 = vunpack.c.l.bf16 %v15
  %v80 = vunpack.c.l.bf16 %v16
  %v81 = vunpack.c.l.bf16 %v17
  %v82 = vunpack.c.l.bf16 %v18
  %v83 = vunpack.c.l.bf16 %v19
  %v84 = vunpack.c.l.bf16 %v20
  %v85 = vunpack.c.l.bf16 %v21
  %v86 = vunpack.c.l.bf16 %v22
  %v87 = vunpack.c.l.bf16 %v23
  %v88 = vunpack.c.l.bf16 %v24
  %v89 = vunpack.c.l.bf16 %v25
  %v90 = vunpack.c.l.bf16 %v26
  %v91 = vunpack.c.l.bf16 %v27
  %v92 = vunpack.c.l.bf16 %v28
  %v93 = vunpack.c.l.bf16 %v29
  %v94 = vunpack.c.l.bf16 %v30
  %v95 = vunpack.c.l.bf16 %v31
  %v96 = vunpack.c.l.bf16 %v32
  %v97 = vunpack.c.l.bf16 %v33
  %v98 = vunpack.c.l.bf16 %v34
  %v99 = vunpack.c.l.bf16 %v35
  %v100 = vunpack.c.l.bf16 %v36
  %v101 = vunpack.c.l.bf16 %v37
  %v102 = vunpack.c.l.bf16 %v38
  %v103 = vunpack.c.l.bf16 %v39
  %v104 = vunpack.c.l.bf16 %v40
  %v105 = vunpack.c.l.bf16 %v41
  %v106 = vunpack.c.l.bf16 %v42
  %v107 = vunpack.c.l.bf16 %v43
  %v108 = vunpack.c.l.bf16 %v44
  %v109 = vunpack.c.l.bf16 %v45
  %v110 = vunpack.c.l.bf16 %v46
  %v111 = vunpack.c.l.bf16 %v47
  %v112 = vunpack.c.l.bf16 %v48
  %v113 = vunpack.c.l.bf16 %v49
  %v114 = vunpack.c.l.bf16 %v50
  %v115 = vunpack.c.l.bf16 %v51
  %v116 = vunpack.c.l.bf16 %v52
  %v117 = vunpack.c.l.bf16 %v53
  %v118 = vunpack.c.l.bf16 %v54
  %v119 = vunpack.c.l.bf16 %v55
  %v120 = vunpack.c.l.bf16 %v56
  %v121 = vunpack.c.l.bf16 %v57
  %v122 = vunpack.c.l.bf16 %v58
  %v123 = vunpack.c.l.bf16 %v59
  %v124 = vunpack.c.l.bf16 %v60
  %v125 = vunpack.c.l.bf16 %v61
  %v126 = vunpack.c.l.bf16 %v62
  %v127 = vunpack.c.l.bf16 %v63
  %v128 = vunpack.c.l.bf16 %v64
  %v129 = vunpack.c.l.bf16 %v65
  %v130 = vunpack.c.l.bf16 %v66
  %v131 = vunpack.c.l.bf16 %v67
  %v132 = vunpack.c.l.bf16 %v68
  %v133 = vunpack.c.l.bf16 %v69
  %v134 = vunpack.c.l.bf16 %v70
  %v135 = vunpack.c.l.bf16 %v71
  %v136 = vunpack.c.l.bf16 %v72
  %v137 = vunpack.c.l.bf16 %v73
  %v138 = vunpack.c.l.bf16 %v74
  %v139 = vunpack.c.l.bf16 %v75
  %v140 = vunpack.c.l.bf16 %v76
  %v141 = vunpack.c.l.bf16 %v77
  %v142 = vld [vmem:[%s1] sm:$0x1]
  %v144 = vlaneseq
  %v145 = vshrl.u32 %v144, 7
  %v146 = vsub.s32 0, %v145
  %v147 = vrot.slane %v142, %v146
  %v149 = vmul.f32 %v78, %v147
  %v150 = vmul.f32 %v79, %v147
  %v151 = vmul.f32 %v80, %v147
  %v152 = vmul.f32 %v81, %v147
  %v153 = vmul.f32 %v82, %v147
  %v154 = vmul.f32 %v83, %v147
  %v155 = vmul.f32 %v84, %v147
  %v156 = vmul.f32 %v85, %v147
  %v157 = vmul.f32 %v86, %v147
  %v158 = vmul.f32 %v87, %v147
  %v159 = vmul.f32 %v88, %v147
  %v160 = vmul.f32 %v89, %v147
  %v161 = vmul.f32 %v90, %v147
  %v162 = vmul.f32 %v91, %v147
  %v163 = vmul.f32 %v92, %v147
  %v164 = vmul.f32 %v93, %v147
  %v165 = vmul.f32 %v94, %v147
  %v166 = vmul.f32 %v95, %v147
  %v167 = vmul.f32 %v96, %v147
  %v168 = vmul.f32 %v97, %v147
  %v169 = vmul.f32 %v98, %v147
  %v170 = vmul.f32 %v99, %v147
  %v171 = vmul.f32 %v100, %v147
  %v172 = vmul.f32 %v101, %v147
  %v173 = vmul.f32 %v102, %v147
  %v174 = vmul.f32 %v103, %v147
  %v175 = vmul.f32 %v104, %v147
  %v176 = vmul.f32 %v105, %v147
  %v177 = vmul.f32 %v106, %v147
  %v178 = vmul.f32 %v107, %v147
  %v179 = vmul.f32 %v108, %v147
  %v180 = vmul.f32 %v109, %v147
  %v181 = vmul.f32 %v110, %v147
  %v182 = vmul.f32 %v111, %v147
  %v183 = vmul.f32 %v112, %v147
  %v184 = vmul.f32 %v113, %v147
  %v185 = vmul.f32 %v114, %v147
  %v186 = vmul.f32 %v115, %v147
  %v187 = vmul.f32 %v116, %v147
  %v188 = vmul.f32 %v117, %v147
  %v189 = vmul.f32 %v118, %v147
  %v190 = vmul.f32 %v119, %v147
  %v191 = vmul.f32 %v120, %v147
  %v192 = vmul.f32 %v121, %v147
  %v193 = vmul.f32 %v122, %v147
  %v194 = vmul.f32 %v123, %v147
  %v195 = vmul.f32 %v124, %v147
  %v196 = vmul.f32 %v125, %v147
  %v197 = vmul.f32 %v126, %v147
  %v198 = vmul.f32 %v127, %v147
  %v199 = vmul.f32 %v128, %v147
  %v200 = vmul.f32 %v129, %v147
  %v201 = vmul.f32 %v130, %v147
  %v202 = vmul.f32 %v131, %v147
  %v203 = vmul.f32 %v132, %v147
  %v204 = vmul.f32 %v133, %v147
  %v205 = vmul.f32 %v134, %v147
  %v206 = vmul.f32 %v135, %v147
  %v207 = vmul.f32 %v136, %v147
  %v208 = vmul.f32 %v137, %v147
  %v209 = vmul.f32 %v138, %v147
  %v210 = vmul.f32 %v139, %v147
  %v211 = vmul.f32 %v140, %v147
  %v212 = vmul.f32 %v141, %v147
  %v213 = vld [vmem:[%s2] sm:$0x1]
  %v215 = vlaneseq
  %v216 = vshrl.u32 %v215, 7
  %v217 = vsub.s32 0, %v216
  %v218 = vrot.slane %v213, %v217
  %v220 = vadd.f32 %v149, %v218
  %v221 = vadd.f32 %v150, %v218
  %v222 = vadd.f32 %v151, %v218
  %v223 = vadd.f32 %v152, %v218
  %v224 = vadd.f32 %v153, %v218
  %v225 = vadd.f32 %v154, %v218
  %v226 = vadd.f32 %v155, %v218
  %v227 = vadd.f32 %v156, %v218
  %v228 = vadd.f32 %v157, %v218
  %v229 = vadd.f32 %v158, %v218
  %v230 = vadd.f32 %v159, %v218
  %v231 = vadd.f32 %v160, %v218
  %v232 = vadd.f32 %v161, %v218
  %v233 = vadd.f32 %v162, %v218
  %v234 = vadd.f32 %v163, %v218
  %v235 = vadd.f32 %v164, %v218
  %v236 = vadd.f32 %v165, %v218
  %v237 = vadd.f32 %v166, %v218
  %v238 = vadd.f32 %v167, %v218
  %v239 = vadd.f32 %v168, %v218
  %v240 = vadd.f32 %v169, %v218
  %v241 = vadd.f32 %v170, %v218
  %v242 = vadd.f32 %v171, %v218
  %v243 = vadd.f32 %v172, %v218
  %v244 = vadd.f32 %v173, %v218
  %v245 = vadd.f32 %v174, %v218
  %v246 = vadd.f32 %v175, %v218
  %v247 = vadd.f32 %v176, %v218
  %v248 = vadd.f32 %v177, %v218
  %v249 = vadd.f32 %v178, %v218
  %v250 = vadd.f32 %v179, %v218
  %v251 = vadd.f32 %v180, %v218
  %v252 = vadd.f32 %v181, %v218
  %v253 = vadd.f32 %v182, %v218
  %v254 = vadd.f32 %v183, %v218
  %v255 = vadd.f32 %v184, %v218
  %v256 = vadd.f32 %v185, %v218
  %v257 = vadd.f32 %v186, %v218
  %v258 = vadd.f32 %v187, %v218
  %v259 = vadd.f32 %v188, %v218
  %v260 = vadd.f32 %v189, %v218
  %v261 = vadd.f32 %v190, %v218
  %v262 = vadd.f32 %v191, %v218
  %v263 = vadd.f32 %v192, %v218
  %v264 = vadd.f32 %v193, %v218
  %v265 = vadd.f32 %v194, %v218
  %v266 = vadd.f32 %v195, %v218
  %v267 = vadd.f32 %v196, %v218
  %v268 = vadd.f32 %v197, %v218
  %v269 = vadd.f32 %v198, %v218
  %v270 = vadd.f32 %v199, %v218
  %v271 = vadd.f32 %v200, %v218
  %v272 = vadd.f32 %v201, %v218
  %v273 = vadd.f32 %v202, %v218
  %v274 = vadd.f32 %v203, %v218
  %v275 = vadd.f32 %v204, %v218
  %v276 = vadd.f32 %v205, %v218
  %v277 = vadd.f32 %v206, %v218
  %v278 = vadd.f32 %v207, %v218
  %v279 = vadd.f32 %v208, %v218
  %v280 = vadd.f32 %v209, %v218
  %v281 = vadd.f32 %v210, %v218
  %v282 = vadd.f32 %v211, %v218
  %v283 = vadd.f32 %v212, %v218
  %v284 = vmax.f32 %v220, 0.0
  %v285 = vmax.f32 %v221, 0.0
  %v286 = vmax.f32 %v222, 0.0
  %v287 = vmax.f32 %v223, 0.0
  %v288 = vmax.f32 %v224, 0.0
  %v289 = vmax.f32 %v225, 0.0
  %v290 = vmax.f32 %v226, 0.0
  %v291 = vmax.f32 %v227, 0.0
  %v292 = vmax.f32 %v228, 0.0
  %v293 = vmax.f32 %v229, 0.0
  %v294 = vmax.f32 %v230, 0.0
  %v295 = vmax.f32 %v231, 0.0
  %v296 = vmax.f32 %v232, 0.0
  %v297 = vmax.f32 %v233, 0.0
  %v298 = vmax.f32 %v234, 0.0
  %v299 = vmax.f32 %v235, 0.0
  %v300 = vmax.f32 %v236, 0.0
  %v301 = vmax.f32 %v237, 0.0
  %v302 = vmax.f32 %v238, 0.0
  %v303 = vmax.f32 %v239, 0.0
  %v304 = vmax.f32 %v240, 0.0
  %v305 = vmax.f32 %v241, 0.0
  %v306 = vmax.f32 %v242, 0.0
  %v307 = vmax.f32 %v243, 0.0
  %v308 = vmax.f32 %v244, 0.0
  %v309 = vmax.f32 %v245, 0.0
  %v310 = vmax.f32 %v246, 0.0
  %v311 = vmax.f32 %v247, 0.0
  %v312 = vmax.f32 %v248, 0.0
  %v313 = vmax.f32 %v249, 0.0
  %v314 = vmax.f32 %v250, 0.0
  %v315 = vmax.f32 %v251, 0.0
  %v316 = vmax.f32 %v252, 0.0
  %v317 = vmax.f32 %v253, 0.0
  %v318 = vmax.f32 %v254, 0.0
  %v319 = vmax.f32 %v255, 0.0
  %v320 = vmax.f32 %v256, 0.0
  %v321 = vmax.f32 %v257, 0.0
  %v322 = vmax.f32 %v258, 0.0
  %v323 = vmax.f32 %v259, 0.0
  %v324 = vmax.f32 %v260, 0.0
  %v325 = vmax.f32 %v261, 0.0
  %v326 = vmax.f32 %v262, 0.0
  %v327 = vmax.f32 %v263, 0.0
  %v328 = vmax.f32 %v264, 0.0
  %v329 = vmax.f32 %v265, 0.0
  %v330 = vmax.f32 %v266, 0.0
  %v331 = vmax.f32 %v267, 0.0
  %v332 = vmax.f32 %v268, 0.0
  %v333 = vmax.f32 %v269, 0.0
  %v334 = vmax.f32 %v270, 0.0
  %v335 = vmax.f32 %v271, 0.0
  %v336 = vmax.f32 %v272, 0.0
  %v337 = vmax.f32 %v273, 0.0
  %v338 = vmax.f32 %v274, 0.0
  %v339 = vmax.f32 %v275, 0.0
  %v340 = vmax.f32 %v276, 0.0
  %v341 = vmax.f32 %v277, 0.0
  %v342 = vmax.f32 %v278, 0.0
  %v343 = vmax.f32 %v279, 0.0
  %v344 = vmax.f32 %v280, 0.0
  %v345 = vmax.f32 %v281, 0.0
  %v346 = vmax.f32 %v282, 0.0
  %v347 = vmax.f32 %v283, 0.0
  %348 = vst [vmem:[%s3] sm:$0xff] %v284
  %349 = vst [vmem:[%s3 + $0x8] sm:$0xff] %v285
  %350 = vst [vmem:[%s3 + $0x10] sm:$0xff] %v286
  %351 = vst [vmem:[%s3 + $0x18] sm:$0xff] %v287
  %352 = vst [vmem:[%s3 + $0x20] sm:$0xff] %v288
  %353 = vst [vmem:[%s3 + $0x28] sm:$0xff] %v289
  %354 = vst [vmem:[%s3 + $0x30] sm:$0xff] %v290
  %355 = vst [vmem:[%s3 + $0x38] sm:$0xff] %v291
  %356 = vst [vmem:[%s3 + $0x40] sm:$0xff] %v292
  %357 = vst [vmem:[%s3 + $0x48] sm:$0xff] %v293
  %358 = vst [vmem:[%s3 + $0x50] sm:$0xff] %v294
  %359 = vst [vmem:[%s3 + $0x58] sm:$0xff] %v295
  %360 = vst [vmem:[%s3 + $0x60] sm:$0xff] %v296
  %361 = vst [vmem:[%s3 + $0x68] sm:$0xff] %v297
  %362 = vst [vmem:[%s3 + $0x70] sm:$0xff] %v298
  %363 = vst [vmem:[%s3 + $0x78] sm:$0xff] %v299
  %364 = vst [vmem:[%s3 + $0x80] sm:$0xff] %v300
  %365 = vst [vmem:[%s3 + $0x88] sm:$0xff] %v301
  %366 = vst [vmem:[%s3 + $0x90] sm:$0xff] %v302
  %367 = vst [vmem:[%s3 + $0x98] sm:$0xff] %v303
  %368 = vst [vmem:[%s3 + $0xa0] sm:$0xff] %v304
  %369 = vst [vmem:[%s3 + $0xa8] sm:$0xff] %v305
  %370 = vst [vmem:[%s3 + $0xb0] sm:$0xff] %v306
  %371 = vst [vmem:[%s3 + $0xb8] sm:$0xff] %v307
  %372 = vst [vmem:[%s3 + $0xc0] sm:$0xff] %v308
  %373 = vst [vmem:[%s3 + $0xc8] sm:$0xff] %v309
  %374 = vst [vmem:[%s3 + $0xd0] sm:$0xff] %v310
  %375 = vst [vmem:[%s3 + $0xd8] sm:$0xff] %v311
  %376 = vst [vmem:[%s3 + $0xe0] sm:$0xff] %v312
  %377 = vst [vmem:[%s3 + $0xe8] sm:$0xff] %v313
  %378 = vst [vmem:[%s3 + $0xf0] sm:$0xff] %v314
  %379 = vst [vmem:[%s3 + $0xf8] sm:$0xff] %v315
  %380 = vst [vmem:[%s3 + $0x100] sm:$0xff] %v316
  %381 = vst [vmem:[%s3 + $0x108] sm:$0xff] %v317
  %382 = vst [vmem:[%s3 + $0x110] sm:$0xff] %v318
  %383 = vst [vmem:[%s3 + $0x118] sm:$0xff] %v319
  %384 = vst [vmem:[%s3 + $0x120] sm:$0xff] %v320
  %385 = vst [vmem:[%s3 + $0x128] sm:$0xff] %v321
  %386 = vst [vmem:[%s3 + $0x130] sm:$0xff] %v322
  %387 = vst [vmem:[%s3 + $0x138] sm:$0xff] %v323
  %388 = vst [vmem:[%s3 + $0x140] sm:$0xff] %v324
  %389 = vst [vmem:[%s3 + $0x148] sm:$0xff] %v325
  %390 = vst [vmem:[%s3 + $0x150] sm:$0xff] %v326
  %391 = vst [vmem:[%s3 + $0x158] sm:$0xff] %v327
  %392 = vst [vmem:[%s3 + $0x160] sm:$0xff] %v328
  %393 = vst [vmem:[%s3 + $0x168] sm:$0xff] %v329
  %394 = vst [vmem:[%s3 + $0x170] sm:$0xff] %v330
  %395 = vst [vmem:[%s3 + $0x178] sm:$0xff] %v331
  %396 = vst [vmem:[%s3 + $0x180] sm:$0xff] %v332
  %397 = vst [vmem:[%s3 + $0x188] sm:$0xff] %v333
  %398 = vst [vmem:[%s3 + $0x190] sm:$0xff] %v334
  %399 = vst [vmem:[%s3 + $0x198] sm:$0xff] %v335
  %400 = vst [vmem:[%s3 + $0x1a0] sm:$0xff] %v336
  %401 = vst [vmem:[%s3 + $0x1a8] sm:$0xff] %v337
  %402 = vst [vmem:[%s3 + $0x1b0] sm:$0xff] %v338
  %403 = vst [vmem:[%s3 + $0x1b8] sm:$0xff] %v339
  %404 = vst [vmem:[%s3 + $0x1c0] sm:$0xff] %v340
  %405 = vst [vmem:[%s3 + $0x1c8] sm:$0xff] %v341
  %406 = vst [vmem:[%s3 + $0x1d0] sm:$0xff] %v342
  %407 = vst [vmem:[%s3 + $0x1d8] sm:$0xff] %v343
  %408 = vst [vmem:[%s3 + $0x1e0] sm:$0xff] %v344
  %409 = vst [vmem:[%s3 + $0x1e8] sm:$0xff] %v345
  %410 = vst [vmem:[%s3 + $0x1f0] sm:$0xff] %v346
  %411 = vst [vmem:[%s3 + $0x1f8] sm:$0xff] %v347
  // Predicated region
  $region14: #{basic_block_noshortcut.5} parent=0 // pred_check
    _
  $region15: #{basic_block_noshortcut.5} parent=0 // pred_check_branch
    %413 = sbr.rel (0) target = $region17
  $region16: #{basic_block_noshortcut.5} parent=0 // pred_region
    _
  $region17: #{basic_block_noshortcut.5} parent=0 // pred_fallthru
    _
  // Predicated region
  $region18: #{basic_block_noshortcut.5} parent=0 // pred_check
    _
  $region19: #{basic_block_noshortcut.5} parent=0 // pred_check_branch
    %415 = sbr.rel (0) target = $region21
  $region20: #{basic_block_noshortcut.5} parent=0 // pred_region
    _
  $region21: #{basic_block_noshortcut.5} parent=0 // pred_fallthru
    _

// kernel: basic_block_noshortcut.4
$region0: #{basic_block_noshortcut.4}
  #allocation0 [shape = 'u32[]', space=smem, size = 0x4, offset = 0x4, fixed_abs, tag = 'smem constant byte address 0x4 - core index']
  #allocation1 [shape = 'u32[144,128]{1,0:T(1,128)}', space=vmem, size = 0x12000, scoped, tag = 'internal scratch']
  %s0 = inlined_call_operand.vmem [shape: bf16[512,128], index: 0, kind: input, shape index: {}]
  %s1 = inlined_call_operand.vmem [shape: f32[1,128], index: 1, kind: input, shape index: {}]
  %s2 = inlined_call_operand.vmem [shape: f32[1,128], index: 2, kind: input, shape index: {}]
  %s3 = inlined_call_operand.vmem [shape: bf16[128,128], index: 3, kind: input, shape index: {}]
  %s4 = inlined_call_operand.vmem [shape: bf16[512,128], index: 4, kind: output, shape index: {0}]
  %s5 = inlined_call_operand.vmem [shape: f32[1,2,128], index: 5, kind: output, shape index: {1}]
  %6 = xla_tuple %s4, %s5
  %s7 = sld [smem:[#allocation0]]
  $region34: #{basic_block_noshortcut.4} parent=0
    _
  %s9 = ssub.s32 1, %s7
  %s10 = scalar_select 0, %s9, %s7
  // Predicated region
  $region2: #{basic_block_noshortcut.4} parent=0 // pred_check
    _
  $region3: #{basic_block_noshortcut.4} parent=0 // pred_check_branch
    %12 = sbr.rel (0) target = $region5
  $region4: #{basic_block_noshortcut.4} parent=0 // pred_region
    _
  $region5: #{basic_block_noshortcut.4} parent=0 // pred_fallthru
    _
  // Predicated region
  $region6: #{basic_block_noshortcut.4} parent=0 // pred_check
    _
  $region7: #{basic_block_noshortcut.4} parent=0 // pred_check_branch
    %14 = sbr.rel (0) target = $region9
  $region8: #{basic_block_noshortcut.4} parent=0 // pred_region
    _
  $region9: #{basic_block_noshortcut.4} parent=0 // pred_fallthru
    _
  // Predicated region
  $region10: #{basic_block_noshortcut.4} parent=0 // pred_check
    _
  $region11: #{basic_block_noshortcut.4} parent=0 // pred_check_branch
    %16 = sbr.rel (0) target = $region13
  $region12: #{basic_block_noshortcut.4} parent=0 // pred_region
    _
  $region13: #{basic_block_noshortcut.4} parent=0 // pred_fallthru
    _
  // Predicated region
  $region14: #{basic_block_noshortcut.4} parent=0 // pred_check
    _
  $region15: #{basic_block_noshortcut.4} parent=0 // pred_check_branch
    %18 = sbr.rel (0) target = $region17
  $region16: #{basic_block_noshortcut.4} parent=0 // pred_region
    _
  $region17: #{basic_block_noshortcut.4} parent=0 // pred_fallthru
    _
  %v20 = vld [vmem:[%s0] sm:$0xf]
  %v21 = vld [vmem:[%s0 + $0x4] sm:$0xf]
  %v22 = vld [vmem:[%s0 + $0x8] sm:$0xf]
  %v23 = vld [vmem:[%s0 + $0xc] sm:$0xf]
  %v24 = vld [vmem:[%s0 + $0x10] sm:$0xf]
  %v25 = vld [vmem:[%s0 + $0x14] sm:$0xf]
  %v26 = vld [vmem:[%s0 + $0x18] sm:$0xf]
  %v27 = vld [vmem:[%s0 + $0x1c] sm:$0xf]
  %v28 = vld [vmem:[%s0 + $0x20] sm:$0xf]
  %v29 = vld [vmem:[%s0 + $0x24] sm:$0xf]
  %v30 = vld [vmem:[%s0 + $0x28] sm:$0xf]
  %v31 = vld [vmem:[%s0 + $0x2c] sm:$0xf]
  %v32 = vld [vmem:[%s0 + $0x30] sm:$0xf]
  %v33 = vld [vmem:[%s0 + $0x34] sm:$0xf]
  %v34 = vld [vmem:[%s0 + $0x38] sm:$0xf]
  %v35 = vld [vmem:[%s0 + $0x3c] sm:$0xf]
  %v36 = vld [vmem:[%s0 + $0x40] sm:$0xf]
  %v37 = vld [vmem:[%s0 + $0x44] sm:$0xf]
  %v38 = vld [vmem:[%s0 + $0x48] sm:$0xf]
  %v39 = vld [vmem:[%s0 + $0x4c] sm:$0xf]
  %v40 = vld [vmem:[%s0 + $0x50] sm:$0xf]
  %v41 = vld [vmem:[%s0 + $0x54] sm:$0xf]
  %v42 = vld [vmem:[%s0 + $0x58] sm:$0xf]
  %v43 = vld [vmem:[%s0 + $0x5c] sm:$0xf]
  %v44 = vld [vmem:[%s0 + $0x60] sm:$0xf]
  %v45 = vld [vmem:[%s0 + $0x64] sm:$0xf]
  %v46 = vld [vmem:[%s0 + $0x68] sm:$0xf]
  %v47 = vld [vmem:[%s0 + $0x6c] sm:$0xf]
  %v48 = vld [vmem:[%s0 + $0x70] sm:$0xf]
  %v49 = vld [vmem:[%s0 + $0x74] sm:$0xf]
  %v50 = vld [vmem:[%s0 + $0x78] sm:$0xf]
  %v51 = vld [vmem:[%s0 + $0x7c] sm:$0xf]
  %v52 = vld [vmem:[%s0 + $0x80] sm:$0xf]
  %v53 = vld [vmem:[%s0 + $0x84] sm:$0xf]
  %v54 = vld [vmem:[%s0 + $0x88] sm:$0xf]
  %v55 = vld [vmem:[%s0 + $0x8c] sm:$0xf]
  %v56 = vld [vmem:[%s0 + $0x90] sm:$0xf]
  %v57 = vld [vmem:[%s0 + $0x94] sm:$0xf]
  %v58 = vld [vmem:[%s0 + $0x98] sm:$0xf]
  %v59 = vld [vmem:[%s0 + $0x9c] sm:$0xf]
  %v60 = vld [vmem:[%s0 + $0xa0] sm:$0xf]
  %v61 = vld [vmem:[%s0 + $0xa4] sm:$0xf]
  %v62 = vld [vmem:[%s0 + $0xa8] sm:$0xf]
  %v63 = vld [vmem:[%s0 + $0xac] sm:$0xf]
  %v64 = vld [vmem:[%s0 + $0xb0] sm:$0xf]
  %v65 = vld [vmem:[%s0 + $0xb4] sm:$0xf]
  %v66 = vld [vmem:[%s0 + $0xb8] sm:$0xf]
  %v67 = vld [vmem:[%s0 + $0xbc] sm:$0xf]
  %v68 = vld [vmem:[%s0 + $0xc0] sm:$0xf]
  %v69 = vld [vmem:[%s0 + $0xc4] sm:$0xf]
  %v70 = vld [vmem:[%s0 + $0xc8] sm:$0xf]
  %v71 = vld [vmem:[%s0 + $0xcc] sm:$0xf]
  %v72 = vld [vmem:[%s0 + $0xd0] sm:$0xf]
  %v73 = vld [vmem:[%s0 + $0xd4] sm:$0xf]
  %v74 = vld [vmem:[%s0 + $0xd8] sm:$0xf]
  %v75 = vld [vmem:[%s0 + $0xdc] sm:$0xf]
  %v76 = vld [vmem:[%s0 + $0xe0] sm:$0xf]
  %v77 = vld [vmem:[%s0 + $0xe4] sm:$0xf]
  %v78 = vld [vmem:[%s0 + $0xe8] sm:$0xf]
  %v79 = vld [vmem:[%s0 + $0xec] sm:$0xf]
  %v80 = vld [vmem:[%s0 + $0xf0] sm:$0xf]
  %v81 = vld [vmem:[%s0 + $0xf4] sm:$0xf]
  %v82 = vld [vmem:[%s0 + $0xf8] sm:$0xf]
  %v83 = vld [vmem:[%s0 + $0xfc] sm:$0xf]
  %v84 = vunpack.c.l.bf16 %v20
  %v85 = vunpack.c.l.bf16 %v21
  %v86 = vunpack.c.l.bf16 %v22
  %v87 = vunpack.c.l.bf16 %v23
  %v88 = vunpack.c.l.bf16 %v24
  %v89 = vunpack.c.l.bf16 %v25
  %v90 = vunpack.c.l.bf16 %v26
  %v91 = vunpack.c.l.bf16 %v27
  %v92 = vunpack.c.l.bf16 %v28
  %v93 = vunpack.c.l.bf16 %v29
  %v94 = vunpack.c.l.bf16 %v30
  %v95 = vunpack.c.l.bf16 %v31
  %v96 = vunpack.c.l.bf16 %v32
  %v97 = vunpack.c.l.bf16 %v33
  %v98 = vunpack.c.l.bf16 %v34
  %v99 = vunpack.c.l.bf16 %v35
  %v100 = vunpack.c.l.bf16 %v36
  %v101 = vunpack.c.l.bf16 %v37
  %v102 = vunpack.c.l.bf16 %v38
  %v103 = vunpack.c.l.bf16 %v39
  %v104 = vunpack.c.l.bf16 %v40
  %v105 = vunpack.c.l.bf16 %v41
  %v106 = vunpack.c.l.bf16 %v42
  %v107 = vunpack.c.l.bf16 %v43
  %v108 = vunpack.c.l.bf16 %v44
  %v109 = vunpack.c.l.bf16 %v45
  %v110 = vunpack.c.l.bf16 %v46
  %v111 = vunpack.c.l.bf16 %v47
  %v112 = vunpack.c.l.bf16 %v48
  %v113 = vunpack.c.l.bf16 %v49
  %v114 = vunpack.c.l.bf16 %v50
  %v115 = vunpack.c.l.bf16 %v51
  %v116 = vunpack.c.l.bf16 %v52
  %v117 = vunpack.c.l.bf16 %v53
  %v118 = vunpack.c.l.bf16 %v54
  %v119 = vunpack.c.l.bf16 %v55
  %v120 = vunpack.c.l.bf16 %v56
  %v121 = vunpack.c.l.bf16 %v57
  %v122 = vunpack.c.l.bf16 %v58
  %v123 = vunpack.c.l.bf16 %v59
  %v124 = vunpack.c.l.bf16 %v60
  %v125 = vunpack.c.l.bf16 %v61
  %v126 = vunpack.c.l.bf16 %v62
  %v127 = vunpack.c.l.bf16 %v63
  %v128 = vunpack.c.l.bf16 %v64
  %v129 = vunpack.c.l.bf16 %v65
  %v130 = vunpack.c.l.bf16 %v66
  %v131 = vunpack.c.l.bf16 %v67
  %v132 = vunpack.c.l.bf16 %v68
  %v133 = vunpack.c.l.bf16 %v69
  %v134 = vunpack.c.l.bf16 %v70
  %v135 = vunpack.c.l.bf16 %v71
  %v136 = vunpack.c.l.bf16 %v72
  %v137 = vunpack.c.l.bf16 %v73
  %v138 = vunpack.c.l.bf16 %v74
  %v139 = vunpack.c.l.bf16 %v75
  %v140 = vunpack.c.l.bf16 %v76
  %v141 = vunpack.c.l.bf16 %v77
  %v142 = vunpack.c.l.bf16 %v78
  %v143 = vunpack.c.l.bf16 %v79
  %v144 = vunpack.c.l.bf16 %v80
  %v145 = vunpack.c.l.bf16 %v81
  %v146 = vunpack.c.l.bf16 %v82
  %v147 = vunpack.c.l.bf16 %v83
  %v148 = vld [vmem:[%s1] sm:$0x1]
  %v150 = vlaneseq
  %v151 = vshrl.u32 %v150, 7
  %v152 = vsub.s32 0, %v151
  %v153 = vrot.slane %v148, %v152
  %v155 = vmul.f32 %v84, %v153
  %v156 = vmul.f32 %v85, %v153
  %v157 = vmul.f32 %v86, %v153
  %v158 = vmul.f32 %v87, %v153
  %v159 = vmul.f32 %v88, %v153
  %v160 = vmul.f32 %v89, %v153
  %v161 = vmul.f32 %v90, %v153
  %v162 = vmul.f32 %v91, %v153
  %v163 = vmul.f32 %v92, %v153
  %v164 = vmul.f32 %v93, %v153
  %v165 = vmul.f32 %v94, %v153
  %v166 = vmul.f32 %v95, %v153
  %v167 = vmul.f32 %v96, %v153
  %v168 = vmul.f32 %v97, %v153
  %v169 = vmul.f32 %v98, %v153
  %v170 = vmul.f32 %v99, %v153
  %v171 = vmul.f32 %v100, %v153
  %v172 = vmul.f32 %v101, %v153
  %v173 = vmul.f32 %v102, %v153
  %v174 = vmul.f32 %v103, %v153
  %v175 = vmul.f32 %v104, %v153
  %v176 = vmul.f32 %v105, %v153
  %v177 = vmul.f32 %v106, %v153
  %v178 = vmul.f32 %v107, %v153
  %v179 = vmul.f32 %v108, %v153
  %v180 = vmul.f32 %v109, %v153
  %v181 = vmul.f32 %v110, %v153
  %v182 = vmul.f32 %v111, %v153
  %v183 = vmul.f32 %v112, %v153
  %v184 = vmul.f32 %v113, %v153
  %v185 = vmul.f32 %v114, %v153
  %v186 = vmul.f32 %v115, %v153
  %v187 = vmul.f32 %v116, %v153
  %v188 = vmul.f32 %v117, %v153
  %v189 = vmul.f32 %v118, %v153
  %v190 = vmul.f32 %v119, %v153
  %v191 = vmul.f32 %v120, %v153
  %v192 = vmul.f32 %v121, %v153
  %v193 = vmul.f32 %v122, %v153
  %v194 = vmul.f32 %v123, %v153
  %v195 = vmul.f32 %v124, %v153
  %v196 = vmul.f32 %v125, %v153
  %v197 = vmul.f32 %v126, %v153
  %v198 = vmul.f32 %v127, %v153
  %v199 = vmul.f32 %v128, %v153
  %v200 = vmul.f32 %v129, %v153
  %v201 = vmul.f32 %v130, %v153
  %v202 = vmul.f32 %v131, %v153
  %v203 = vmul.f32 %v132, %v153
  %v204 = vmul.f32 %v133, %v153
  %v205 = vmul.f32 %v134, %v153
  %v206 = vmul.f32 %v135, %v153
  %v207 = vmul.f32 %v136, %v153
  %v208 = vmul.f32 %v137, %v153
  %v209 = vmul.f32 %v138, %v153
  %v210 = vmul.f32 %v139, %v153
  %v211 = vmul.f32 %v140, %v153
  %v212 = vmul.f32 %v141, %v153
  %v213 = vmul.f32 %v142, %v153
  %v214 = vmul.f32 %v143, %v153
  %v215 = vmul.f32 %v144, %v153
  %v216 = vmul.f32 %v145, %v153
  %v217 = vmul.f32 %v146, %v153
  %v218 = vmul.f32 %v147, %v153
  %v219 = vld [vmem:[%s2] sm:$0x1]
  %v221 = vlaneseq
  %v222 = vshrl.u32 %v221, 7
  %v223 = vsub.s32 0, %v222
  %v224 = vrot.slane %v219, %v223
  %v226 = vadd.f32 %v155, %v224
  %v227 = vadd.f32 %v156, %v224
  %v228 = vadd.f32 %v157, %v224
  %v229 = vadd.f32 %v158, %v224
  %v230 = vadd.f32 %v159, %v224
  %v231 = vadd.f32 %v160, %v224
  %v232 = vadd.f32 %v161, %v224
  %v233 = vadd.f32 %v162, %v224
  %v234 = vadd.f32 %v163, %v224
  %v235 = vadd.f32 %v164, %v224
  %v236 = vadd.f32 %v165, %v224
  %v237 = vadd.f32 %v166, %v224
  %v238 = vadd.f32 %v167, %v224
  %v239 = vadd.f32 %v168, %v224
  %v240 = vadd.f32 %v169, %v224
  %v241 = vadd.f32 %v170, %v224
  %v242 = vadd.f32 %v171, %v224
  %v243 = vadd.f32 %v172, %v224
  %v244 = vadd.f32 %v173, %v224
  %v245 = vadd.f32 %v174, %v224
  %v246 = vadd.f32 %v175, %v224
  %v247 = vadd.f32 %v176, %v224
  %v248 = vadd.f32 %v177, %v224
  %v249 = vadd.f32 %v178, %v224
  %v250 = vadd.f32 %v179, %v224
  %v251 = vadd.f32 %v180, %v224
  %v252 = vadd.f32 %v181, %v224
  %v253 = vadd.f32 %v182, %v224
  %v254 = vadd.f32 %v183, %v224
  %v255 = vadd.f32 %v184, %v224
  %v256 = vadd.f32 %v185, %v224
  %v257 = vadd.f32 %v186, %v224
  %v258 = vadd.f32 %v187, %v224
  %v259 = vadd.f32 %v188, %v224
  %v260 = vadd.f32 %v189, %v224
  %v261 = vadd.f32 %v190, %v224
  %v262 = vadd.f32 %v191, %v224
  %v263 = vadd.f32 %v192, %v224
  %v264 = vadd.f32 %v193, %v224
  %v265 = vadd.f32 %v194, %v224
  %v266 = vadd.f32 %v195, %v224
  %v267 = vadd.f32 %v196, %v224
  %v268 = vadd.f32 %v197, %v224
  %v269 = vadd.f32 %v198, %v224
  %v270 = vadd.f32 %v199, %v224
  %v271 = vadd.f32 %v200, %v224
  %v272 = vadd.f32 %v201, %v224
  %v273 = vadd.f32 %v202, %v224
  %v274 = vadd.f32 %v203, %v224
  %v275 = vadd.f32 %v204, %v224
  %v276 = vadd.f32 %v205, %v224
  %v277 = vadd.f32 %v206, %v224
  %v278 = vadd.f32 %v207, %v224
  %v279 = vadd.f32 %v208, %v224
  %v280 = vadd.f32 %v209, %v224
  %v281 = vadd.f32 %v210, %v224
  %v282 = vadd.f32 %v211, %v224
  %v283 = vadd.f32 %v212, %v224
  %v284 = vadd.f32 %v213, %v224
  %v285 = vadd.f32 %v214, %v224
  %v286 = vadd.f32 %v215, %v224
  %v287 = vadd.f32 %v216, %v224
  %v288 = vadd.f32 %v217, %v224
  %v289 = vadd.f32 %v218, %v224
  %v290 = vmax.f32 %v226, 0.0
  %v291 = vmax.f32 %v227, 0.0
  %v292 = vmax.f32 %v228, 0.0
  %v293 = vmax.f32 %v229, 0.0
  %v294 = vmax.f32 %v230, 0.0
  %v295 = vmax.f32 %v231, 0.0
  %v296 = vmax.f32 %v232, 0.0
  %v297 = vmax.f32 %v233, 0.0
  %v298 = vmax.f32 %v234, 0.0
  %v299 = vmax.f32 %v235, 0.0
  %v300 = vmax.f32 %v236, 0.0
  %v301 = vmax.f32 %v237, 0.0
  %v302 = vmax.f32 %v238, 0.0
  %v303 = vmax.f32 %v239, 0.0
  %v304 = vmax.f32 %v240, 0.0
  %v305 = vmax.f32 %v241, 0.0
  %v306 = vmax.f32 %v242, 0.0
  %v307 = vmax.f32 %v243, 0.0
  %v308 = vmax.f32 %v244, 0.0
  %v309 = vmax.f32 %v245, 0.0
  %v310 = vmax.f32 %v246, 0.0
  %v311 = vmax.f32 %v247, 0.0
  %v312 = vmax.f32 %v248, 0.0
  %v313 = vmax.f32 %v249, 0.0
  %v314 = vmax.f32 %v250, 0.0
  %v315 = vmax.f32 %v251, 0.0
  %v316 = vmax.f32 %v252, 0.0
  %v317 = vmax.f32 %v253, 0.0
  %v318 = vmax.f32 %v254, 0.0
  %v319 = vmax.f32 %v255, 0.0
  %v320 = vmax.f32 %v256, 0.0
  %v321 = vmax.f32 %v257, 0.0
  %v322 = vmax.f32 %v258, 0.0
  %v323 = vmax.f32 %v259, 0.0
  %v324 = vmax.f32 %v260, 0.0
  %v325 = vmax.f32 %v261, 0.0
  %v326 = vmax.f32 %v262, 0.0
  %v327 = vmax.f32 %v263, 0.0
  %v328 = vmax.f32 %v264, 0.0
  %v329 = vmax.f32 %v265, 0.0
  %v330 = vmax.f32 %v266, 0.0
  %v331 = vmax.f32 %v267, 0.0
  %v332 = vmax.f32 %v268, 0.0
  %v333 = vmax.f32 %v269, 0.0
  %v334 = vmax.f32 %v270, 0.0
  %v335 = vmax.f32 %v271, 0.0
  %v336 = vmax.f32 %v272, 0.0
  %v337 = vmax.f32 %v273, 0.0
  %v338 = vmax.f32 %v274, 0.0
  %v339 = vmax.f32 %v275, 0.0
  %v340 = vmax.f32 %v276, 0.0
  %v341 = vmax.f32 %v277, 0.0
  %v342 = vmax.f32 %v278, 0.0
  %v343 = vmax.f32 %v279, 0.0
  %v344 = vmax.f32 %v280, 0.0
  %v345 = vmax.f32 %v281, 0.0
  %v346 = vmax.f32 %v282, 0.0
  %v347 = vmax.f32 %v283, 0.0
  %v348 = vmax.f32 %v284, 0.0
  %v349 = vmax.f32 %v285, 0.0
  %v350 = vmax.f32 %v286, 0.0
  %v351 = vmax.f32 %v287, 0.0
  %v352 = vmax.f32 %v288, 0.0
  %v353 = vmax.f32 %v289, 0.0
  %vm354 = vcmp.le.f32.partialorder %v84, -1e+29
  %vm355 = vcmp.le.f32.partialorder %v85, -1e+29
  %vm356 = vcmp.le.f32.partialorder %v86, -1e+29
  %vm357 = vcmp.le.f32.partialorder %v87, -1e+29
  %vm358 = vcmp.le.f32.partialorder %v88, -1e+29
  %vm359 = vcmp.le.f32.partialorder %v89, -1e+29
  %vm360 = vcmp.le.f32.partialorder %v90, -1e+29
  %vm361 = vcmp.le.f32.partialorder %v91, -1e+29
  %vm362 = vcmp.le.f32.partialorder %v92, -1e+29
  %vm363 = vcmp.le.f32.partialorder %v93, -1e+29
  %vm364 = vcmp.le.f32.partialorder %v94, -1e+29
  %vm365 = vcmp.le.f32.partialorder %v95, -1e+29
  %vm366 = vcmp.le.f32.partialorder %v96, -1e+29
  %vm367 = vcmp.le.f32.partialorder %v97, -1e+29
  %vm368 = vcmp.le.f32.partialorder %v98, -1e+29
  %vm369 = vcmp.le.f32.partialorder %v99, -1e+29
  %vm370 = vcmp.le.f32.partialorder %v100, -1e+29
  %vm371 = vcmp.le.f32.partialorder %v101, -1e+29
  %vm372 = vcmp.le.f32.partialorder %v102, -1e+29
  %vm373 = vcmp.le.f32.partialorder %v103, -1e+29
  %vm374 = vcmp.le.f32.partialorder %v104, -1e+29
  %vm375 = vcmp.le.f32.partialorder %v105, -1e+29
  %vm376 = vcmp.le.f32.partialorder %v106, -1e+29
  %vm377 = vcmp.le.f32.partialorder %v107, -1e+29
  %vm378 = vcmp.le.f32.partialorder %v108, -1e+29
  %vm379 = vcmp.le.f32.partialorder %v109, -1e+29
  %vm380 = vcmp.le.f32.partialorder %v110, -1e+29
  %vm381 = vcmp.le.f32.partialorder %v111, -1e+29
  %vm382 = vcmp.le.f32.partialorder %v112, -1e+29
  %vm383 = vcmp.le.f32.partialorder %v113, -1e+29
  %vm384 = vcmp.le.f32.partialorder %v114, -1e+29
  %vm385 = vcmp.le.f32.partialorder %v115, -1e+29
  %vm386 = vcmp.le.f32.partialorder %v116, -1e+29
  %vm387 = vcmp.le.f32.partialorder %v117, -1e+29
  %vm388 = vcmp.le.f32.partialorder %v118, -1e+29
  %vm389 = vcmp.le.f32.partialorder %v119, -1e+29
  %vm390 = vcmp.le.f32.partialorder %v120, -1e+29
  %vm391 = vcmp.le.f32.partialorder %v121, -1e+29
  %vm392 = vcmp.le.f32.partialorder %v122, -1e+29
  %vm393 = vcmp.le.f32.partialorder %v123, -1e+29
  %vm394 = vcmp.le.f32.partialorder %v124, -1e+29
  %vm395 = vcmp.le.f32.partialorder %v125, -1e+29
  %vm396 = vcmp.le.f32.partialorder %v126, -1e+29
  %vm397 = vcmp.le.f32.partialorder %v127, -1e+29
  %vm398 = vcmp.le.f32.partialorder %v128, -1e+29
  %vm399 = vcmp.le.f32.partialorder %v129, -1e+29
  %vm400 = vcmp.le.f32.partialorder %v130, -1e+29
  %vm401 = vcmp.le.f32.partialorder %v131, -1e+29
  %vm402 = vcmp.le.f32.partialorder %v132, -1e+29
  %vm403 = vcmp.le.f32.partialorder %v133, -1e+29
  %vm404 = vcmp.le.f32.partialorder %v134, -1e+29
  %vm405 = vcmp.le.f32.partialorder %v135, -1e+29
  %vm406 = vcmp.le.f32.partialorder %v136, -1e+29
  %vm407 = vcmp.le.f32.partialorder %v137, -1e+29
  %vm408 = vcmp.le.f32.partialorder %v138, -1e+29
  %vm409 = vcmp.le.f32.partialorder %v139, -1e+29
  %vm410 = vcmp.le.f32.partialorder %v140, -1e+29
  %vm411 = vcmp.le.f32.partialorder %v141, -1e+29
  %vm412 = vcmp.le.f32.partialorder %v142, -1e+29
  %vm413 = vcmp.le.f32.partialorder %v143, -1e+29
  %vm414 = vcmp.le.f32.partialorder %v144, -1e+29
  %vm415 = vcmp.le.f32.partialorder %v145, -1e+29
  %vm416 = vcmp.le.f32.partialorder %v146, -1e+29
  %vm417 = vcmp.le.f32.partialorder %v147, -1e+29
  %v418 = vsel %vm354, 0.0, %v290
  %v419 = vsel %vm355, 0.0, %v291
  %v420 = vsel %vm356, 0.0, %v292
  %v421 = vsel %vm357, 0.0, %v293
  %v422 = vsel %vm358, 0.0, %v294
  %v423 = vsel %vm359, 0.0, %v295
  %v424 = vsel %vm360, 0.0, %v296
  %v425 = vsel %vm361, 0.0, %v297
  %v426 = vsel %vm362, 0.0, %v298
  %v427 = vsel %vm363, 0.0, %v299
  %v428 = vsel %vm364, 0.0, %v300
  %v429 = vsel %vm365, 0.0, %v301
  %v430 = vsel %vm366, 0.0, %v302
  %v431 = vsel %vm367, 0.0, %v303
  %v432 = vsel %vm368, 0.0, %v304
  %v433 = vsel %vm369, 0.0, %v305
  %v434 = vsel %vm370, 0.0, %v306
  %v435 = vsel %vm371, 0.0, %v307
  %v436 = vsel %vm372, 0.0, %v308
  %v437 = vsel %vm373, 0.0, %v309
  %v438 = vsel %vm374, 0.0, %v310
  %v439 = vsel %vm375, 0.0, %v311
  %v440 = vsel %vm376, 0.0, %v312
  %v441 = vsel %vm377, 0.0, %v313
  %v442 = vsel %vm378, 0.0, %v314
  %v443 = vsel %vm379, 0.0, %v315
  %v444 = vsel %vm380, 0.0, %v316
  %v445 = vsel %vm381, 0.0, %v317
  %v446 = vsel %vm382, 0.0, %v318
  %v447 = vsel %vm383, 0.0, %v319
  %v448 = vsel %vm384, 0.0, %v320
  %v449 = vsel %vm385, 0.0, %v321
  %v450 = vsel %vm386, 0.0, %v322
  %v451 = vsel %vm387, 0.0, %v323
  %v452 = vsel %vm388, 0.0, %v324
  %v453 = vsel %vm389, 0.0, %v325
  %v454 = vsel %vm390, 0.0, %v326
  %v455 = vsel %vm391, 0.0, %v327
  %v456 = vsel %vm392, 0.0, %v328
  %v457 = vsel %vm393, 0.0, %v329
  %v458 = vsel %vm394, 0.0, %v330
  %v459 = vsel %vm395, 0.0, %v331
  %v460 = vsel %vm396, 0.0, %v332
  %v461 = vsel %vm397, 0.0, %v333
  %v462 = vsel %vm398, 0.0, %v334
  %v463 = vsel %vm399, 0.0, %v335
  %v464 = vsel %vm400, 0.0, %v336
  %v465 = vsel %vm401, 0.0, %v337
  %v466 = vsel %vm402, 0.0, %v338
  %v467 = vsel %vm403, 0.0, %v339
  %v468 = vsel %vm404, 0.0, %v340
  %v469 = vsel %vm405, 0.0, %v341
  %v470 = vsel %vm406, 0.0, %v342
  %v471 = vsel %vm407, 0.0, %v343
  %v472 = vsel %vm408, 0.0, %v344
  %v473 = vsel %vm409, 0.0, %v345
  %v474 = vsel %vm410, 0.0, %v346
  %v475 = vsel %vm411, 0.0, %v347
  %v476 = vsel %vm412, 0.0, %v348
  %v477 = vsel %vm413, 0.0, %v349
  %v478 = vsel %vm414, 0.0, %v350
  %v479 = vsel %vm415, 0.0, %v351
  %v480 = vsel %vm416, 0.0, %v352
  %v481 = vsel %vm417, 0.0, %v353
  %v482 = vpack.c.bf16 %v419, %v418
  %v483 = vpack.c.bf16 %v421, %v420
  %v484 = vpack.c.bf16 %v423, %v422
  %v485 = vpack.c.bf16 %v425, %v424
  %v486 = vpack.c.bf16 %v427, %v426
  %v487 = vpack.c.bf16 %v429, %v428
  %v488 = vpack.c.bf16 %v431, %v430
  %v489 = vpack.c.bf16 %v433, %v432
  %v490 = vpack.c.bf16 %v435, %v434
  %v491 = vpack.c.bf16 %v437, %v436
  %v492 = vpack.c.bf16 %v439, %v438
  %v493 = vpack.c.bf16 %v441, %v440
  %v494 = vpack.c.bf16 %v443, %v442
  %v495 = vpack.c.bf16 %v445, %v444
  %v496 = vpack.c.bf16 %v447, %v446
  %v497 = vpack.c.bf16 %v449, %v448
  %v498 = vpack.c.bf16 %v451, %v450
  %v499 = vpack.c.bf16 %v453, %v452
  %v500 = vpack.c.bf16 %v455, %v454
  %v501 = vpack.c.bf16 %v457, %v456
  %v502 = vpack.c.bf16 %v459, %v458
  %v503 = vpack.c.bf16 %v461, %v460
  %v504 = vpack.c.bf16 %v463, %v462
  %v505 = vpack.c.bf16 %v465, %v464
  %v506 = vpack.c.bf16 %v467, %v466
  %v507 = vpack.c.bf16 %v469, %v468
  %v508 = vpack.c.bf16 %v471, %v470
  %v509 = vpack.c.bf16 %v473, %v472
  %v510 = vpack.c.bf16 %v475, %v474
  %v511 = vpack.c.bf16 %v477, %v476
  %v512 = vpack.c.bf16 %v479, %v478
  %v513 = vpack.c.bf16 %v481, %v480
  %v514 = vld [vmem:[%s3] sm:$0xf]
  %v515 = vld [vmem:[%s3 + $0x4] sm:$0xf]
  %v516 = vld [vmem:[%s3 + $0x8] sm:$0xf]
  %v517 = vld [vmem:[%s3 + $0xc] sm:$0xf]
  %v518 = vld [vmem:[%s3 + $0x10] sm:$0xf]
  %v519 = vld [vmem:[%s3 + $0x14] sm:$0xf]
  %v520 = vld [vmem:[%s3 + $0x18] sm:$0xf]
  %v521 = vld [vmem:[%s3 + $0x1c] sm:$0xf]
  %v522 = vld [vmem:[%s3 + $0x20] sm:$0xf]
  %v523 = vld [vmem:[%s3 + $0x24] sm:$0xf]
  %v524 = vld [vmem:[%s3 + $0x28] sm:$0xf]
  %v525 = vld [vmem:[%s3 + $0x2c] sm:$0xf]
  %v526 = vld [vmem:[%s3 + $0x30] sm:$0xf]
  %v527 = vld [vmem:[%s3 + $0x34] sm:$0xf]
  %v528 = vld [vmem:[%s3 + $0x38] sm:$0xf]
  %v529 = vld [vmem:[%s3 + $0x3c] sm:$0xf]
  %v546 = vunpack.c.l.b16 %v514
  %v547 = vunpack.c.l.b16 %v515
  %v548 = vunpack.c.l.b16 %v516
  %v549 = vunpack.c.l.b16 %v517
  %v550 = vunpack.c.l.b16 %v518
  %v551 = vunpack.c.l.b16 %v519
  %v552 = vunpack.c.l.b16 %v520
  %v553 = vunpack.c.l.b16 %v521
  %v554 = vunpack.c.l.b16 %v522
  %v555 = vunpack.c.l.b16 %v523
  %v556 = vunpack.c.l.b16 %v524
  %v557 = vunpack.c.l.b16 %v525
  %v558 = vunpack.c.l.b16 %v526
  %v559 = vunpack.c.l.b16 %v527
  %v560 = vunpack.c.l.b16 %v528
  %v561 = vunpack.c.l.b16 %v529
  %v562 = vpack.c.b16 %v547, %v546
  %v563 = vpack.c.b16 %v549, %v548
  %v564 = vpack.c.b16 %v551, %v550
  %v565 = vpack.c.b16 %v553, %v552
  %v566 = vpack.c.b16 %v555, %v554
  %v567 = vpack.c.b16 %v557, %v556
  %v568 = vpack.c.b16 %v559, %v558
  %v569 = vpack.c.b16 %v561, %v560
  %578 = vmatprep.subr.bf16.mxu0 0
  %579 = vmatpush1.bf16.msra.mxu0 %v569
  %580 = vmatprep.subr.bf16.mxu0 0
  %581 = vmatpush1.bf16.msra.mxu0 %v568
  %582 = vmatprep.subr.bf16.mxu0 0
  %583 = vmatpush1.bf16.msra.mxu0 %v567
  %584 = vmatprep.subr.bf16.mxu0 0
  %585 = vmatpush1.bf16.msra.mxu0 %v566
  %586 = vmatprep.subr.bf16.mxu0 0
  %587 = vmatpush1.bf16.msra.mxu0 %v565
  %588 = vmatprep.subr.bf16.mxu0 0
  %589 = vmatpush1.bf16.msra.mxu0 %v564
  %590 = vmatprep.subr.bf16.mxu0 0
  %591 = vmatpush1.bf16.msra.mxu0 %v563
  %592 = vmatprep.subr.bf16.mxu0 0
  %593 = vmatpush1.bf16.msra.mxu0 %v562
  %594 = vmatprep.subr.bf16.mxu0 0
  %595 = vmatpush2.bf16.msra.mxu0 0
  %596 = vmatprep.subr.bf16.mxu0 0
  %597 = vmatpush2.bf16.msra.mxu0 0
  %598 = vmatprep.subr.bf16.mxu0 0
  %599 = vmatpush2.bf16.msra.mxu0 0
  %600 = vmatprep.subr.bf16.mxu0 0
  %601 = vmatpush2.bf16.msra.mxu0 0
  %602 = vmatprep.subr.bf16.mxu0 0
  %603 = vmatpush2.bf16.msra.mxu0 0
  %604 = vmatprep.subr.bf16.mxu0 0
  %605 = vmatpush2.bf16.msra.mxu0 0
  %606 = vmatprep.subr.bf16.mxu0 0
  %607 = vmatpush2.bf16.msra.mxu0 0
  %608 = vmatprep.subr.bf16.mxu0 0
  %609 = vmatpush2.bf16.msra.mxu0 0
  %610 = vmatprep.mubr.bf16.mxu0 0
  %611 = vmatmul.mubr.bf16.gmra.mxu0 %v482
  %v612 = vpop.f32.mrf.mxu0
  %v613 = vadd.f32 0.0, %v612
  %v614 = vpop.f32.mrf.mxu0
  %v615 = vpop.f32.mrf.mxu0
  %v616 = vadd.f32 0.0, %v615
  %v617 = vpop.f32.mrf.mxu0
  %618 = vmatprep.mubr.bf16.mxu0 0
  %619 = vmatmul.mubr.bf16.gmra.mxu0 %v483
  %v620 = vpop.f32.mrf.mxu0
  %v621 = vadd.f32 0.0, %v620
  %v622 = vpop.f32.mrf.mxu0
  %v623 = vpop.f32.mrf.mxu0
  %v624 = vadd.f32 0.0, %v623
  %v625 = vpop.f32.mrf.mxu0
  %626 = vmatprep.mubr.bf16.mxu0 0
  %627 = vmatmul.mubr.bf16.gmra.mxu0 %v484
  %v628 = vpop.f32.mrf.mxu0
  %v629 = vadd.f32 0.0, %v628
  %v630 = vpop.f32.mrf.mxu0
  %v631 = vpop.f32.mrf.mxu0
  %v632 = vadd.f32 0.0, %v631
  %v633 = vpop.f32.mrf.mxu0
  %634 = vmatprep.mubr.bf16.mxu0 0
  %635 = vmatmul.mubr.bf16.gmra.mxu0 %v485
  %v636 = vpop.f32.mrf.mxu0
  %v637 = vadd.f32 0.0, %v636
  %v638 = vpop.f32.mrf.mxu0
  %v639 = vpop.f32.mrf.mxu0
  %v640 = vadd.f32 0.0, %v639
  %v641 = vpop.f32.mrf.mxu0
  %642 = vmatprep.mubr.bf16.mxu0 0
  %643 = vmatmul.mubr.bf16.gmra.mxu0 %v486
  %v644 = vpop.f32.mrf.mxu0
  %v645 = vadd.f32 0.0, %v644
  %v646 = vpop.f32.mrf.mxu0
  %v647 = vpop.f32.mrf.mxu0
  %v648 = vadd.f32 0.0, %v647
  %v649 = vpop.f32.mrf.mxu0
  %650 = vmatprep.mubr.bf16.mxu0 0
  %651 = vmatmul.mubr.bf16.gmra.mxu0 %v487
  %v652 = vpop.f32.mrf.mxu0
  %v653 = vadd.f32 0.0, %v652
  %v654 = vpop.f32.mrf.mxu0
  %v655 = vpop.f32.mrf.mxu0
  %v656 = vadd.f32 0.0, %v655
  %v657 = vpop.f32.mrf.mxu0
  %658 = vmatprep.mubr.bf16.mxu0 0
  %659 = vmatmul.mubr.bf16.gmra.mxu0 %v488
  %v660 = vpop.f32.mrf.mxu0
  %v661 = vadd.f32 0.0, %v660
  %v662 = vpop.f32.mrf.mxu0
  %v663 = vpop.f32.mrf.mxu0
  %v664 = vadd.f32 0.0, %v663
  %v665 = vpop.f32.mrf.mxu0
  %666 = vmatprep.mubr.bf16.mxu0 0
  %667 = vmatmul.mubr.bf16.gmra.mxu0 %v489
  %v668 = vpop.f32.mrf.mxu0
  %v669 = vadd.f32 0.0, %v668
  %v670 = vpop.f32.mrf.mxu0
  %v671 = vpop.f32.mrf.mxu0
  %v672 = vadd.f32 0.0, %v671
  %v673 = vpop.f32.mrf.mxu0
  %674 = vmatprep.mubr.bf16.mxu0 0
  %675 = vmatmul.mubr.bf16.gmra.mxu0 %v490
  %v676 = vpop.f32.mrf.mxu0
  %v677 = vadd.f32 0.0, %v676
  %v678 = vpop.f32.mrf.mxu0
  %v679 = vpop.f32.mrf.mxu0
  %v680 = vadd.f32 0.0, %v679
  %v681 = vpop.f32.mrf.mxu0
  %682 = vmatprep.mubr.bf16.mxu0 0
  %683 = vmatmul.mubr.bf16.gmra.mxu0 %v491
  %v684 = vpop.f32.mrf.mxu0
  %v685 = vadd.f32 0.0, %v684
  %v686 = vpop.f32.mrf.mxu0
  %v687 = vpop.f32.mrf.mxu0
  %v688 = vadd.f32 0.0, %v687
  %v689 = vpop.f32.mrf.mxu0
  %690 = vmatprep.mubr.bf16.mxu0 0
  %691 = vmatmul.mubr.bf16.gmra.mxu0 %v492
  %v692 = vpop.f32.mrf.mxu0
  %v693 = vadd.f32 0.0, %v692
  %v694 = vpop.f32.mrf.mxu0
  %v695 = vpop.f32.mrf.mxu0
  %v696 = vadd.f32 0.0, %v695
  %v697 = vpop.f32.mrf.mxu0
  %698 = vmatprep.mubr.bf16.mxu0 0
  %699 = vmatmul.mubr.bf16.gmra.mxu0 %v493
  %v700 = vpop.f32.mrf.mxu0
  %v701 = vadd.f32 0.0, %v700
  %v702 = vpop.f32.mrf.mxu0
  %v703 = vpop.f32.mrf.mxu0
  %v704 = vadd.f32 0.0, %v703
  %v705 = vpop.f32.mrf.mxu0
  %706 = vmatprep.mubr.bf16.mxu0 0
  %707 = vmatmul.mubr.bf16.gmra.mxu0 %v494
  %v708 = vpop.f32.mrf.mxu0
  %v709 = vadd.f32 0.0, %v708
  %v710 = vpop.f32.mrf.mxu0
  %v711 = vpop.f32.mrf.mxu0
  %v712 = vadd.f32 0.0, %v711
  %v713 = vpop.f32.mrf.mxu0
  %714 = vmatprep.mubr.bf16.mxu0 0
  %715 = vmatmul.mubr.bf16.gmra.mxu0 %v495
  %v716 = vpop.f32.mrf.mxu0
  %v717 = vadd.f32 0.0, %v716
  %v718 = vpop.f32.mrf.mxu0
  %v719 = vpop.f32.mrf.mxu0
  %v720 = vadd.f32 0.0, %v719
  %v721 = vpop.f32.mrf.mxu0
  %722 = vmatprep.mubr.bf16.mxu0 0
  %723 = vmatmul.mubr.bf16.gmra.mxu0 %v496
  %v724 = vpop.f32.mrf.mxu0
  %v725 = vadd.f32 0.0, %v724
  %v726 = vpop.f32.mrf.mxu0
  %v727 = vpop.f32.mrf.mxu0
  %v728 = vadd.f32 0.0, %v727
  %v729 = vpop.f32.mrf.mxu0
  %730 = vmatprep.mubr.bf16.mxu0 0
  %731 = vmatmul.mubr.bf16.gmra.mxu0 %v497
  %v732 = vpop.f32.mrf.mxu0
  %v733 = vadd.f32 0.0, %v732
  %v734 = vpop.f32.mrf.mxu0
  %v735 = vpop.f32.mrf.mxu0
  %v736 = vadd.f32 0.0, %v735
  %v737 = vpop.f32.mrf.mxu0
  %738 = vmatprep.mubr.bf16.mxu0 0
  %739 = vmatmul.mubr.bf16.gmra.mxu0 %v498
  %v740 = vpop.f32.mrf.mxu0
  %v741 = vadd.f32 0.0, %v740
  %v742 = vpop.f32.mrf.mxu0
  %v743 = vpop.f32.mrf.mxu0
  %v744 = vadd.f32 0.0, %v743
  %v745 = vpop.f32.mrf.mxu0
  %746 = vmatprep.mubr.bf16.mxu0 0
  %747 = vmatmul.mubr.bf16.gmra.mxu0 %v499
  %v748 = vpop.f32.mrf.mxu0
  %v749 = vadd.f32 0.0, %v748
  %v750 = vpop.f32.mrf.mxu0
  %v751 = vpop.f32.mrf.mxu0
  %v752 = vadd.f32 0.0, %v751
  %v753 = vpop.f32.mrf.mxu0
  %754 = vmatprep.mubr.bf16.mxu0 0
  %755 = vmatmul.mubr.bf16.gmra.mxu0 %v500
  %v756 = vpop.f32.mrf.mxu0
  %v757 = vadd.f32 0.0, %v756
  %v758 = vpop.f32.mrf.mxu0
  %v759 = vpop.f32.mrf.mxu0
  %v760 = vadd.f32 0.0, %v759
  %v761 = vpop.f32.mrf.mxu0
  %762 = vmatprep.mubr.bf16.mxu0 0
  %763 = vmatmul.mubr.bf16.gmra.mxu0 %v501
  %v764 = vpop.f32.mrf.mxu0
  %v765 = vadd.f32 0.0, %v764
  %v766 = vpop.f32.mrf.mxu0
  %v767 = vpop.f32.mrf.mxu0
  %v768 = vadd.f32 0.0, %v767
  %v769 = vpop.f32.mrf.mxu0
  %770 = vmatprep.mubr.bf16.mxu0 0
  %771 = vmatmul.mubr.bf16.gmra.mxu0 %v502
  %v772 = vpop.f32.mrf.mxu0
  %v773 = vadd.f32 0.0, %v772
  %v774 = vpop.f32.mrf.mxu0
  %v775 = vpop.f32.mrf.mxu0
  %v776 = vadd.f32 0.0, %v775
  %v777 = vpop.f32.mrf.mxu0
  %778 = vmatprep.mubr.bf16.mxu0 0
  %779 = vmatmul.mubr.bf16.gmra.mxu0 %v503
  %v780 = vpop.f32.mrf.mxu0
  %v781 = vadd.f32 0.0, %v780
  %v782 = vpop.f32.mrf.mxu0
  %v783 = vpop.f32.mrf.mxu0
  %v784 = vadd.f32 0.0, %v783
  %v785 = vpop.f32.mrf.mxu0
  %786 = vmatprep.mubr.bf16.mxu0 0
  %787 = vmatmul.mubr.bf16.gmra.mxu0 %v504
  %v788 = vpop.f32.mrf.mxu0
  %v789 = vadd.f32 0.0, %v788
  %v790 = vpop.f32.mrf.mxu0
  %v791 = vpop.f32.mrf.mxu0
  %v792 = vadd.f32 0.0, %v791
  %v793 = vpop.f32.mrf.mxu0
  %794 = vmatprep.mubr.bf16.mxu0 0
  %795 = vmatmul.mubr.bf16.gmra.mxu0 %v505
  %v796 = vpop.f32.mrf.mxu0
  %v797 = vadd.f32 0.0, %v796
  %v798 = vpop.f32.mrf.mxu0
  %v799 = vpop.f32.mrf.mxu0
  %v800 = vadd.f32 0.0, %v799
  %v801 = vpop.f32.mrf.mxu0
  %802 = vmatprep.mubr.bf16.mxu0 0
  %803 = vmatmul.mubr.bf16.gmra.mxu0 %v506
  %v804 = vpop.f32.mrf.mxu0
  %v805 = vadd.f32 0.0, %v804
  %v806 = vpop.f32.mrf.mxu0
  %v807 = vpop.f32.mrf.mxu0
  %v808 = vadd.f32 0.0, %v807
  %v809 = vpop.f32.mrf.mxu0
  %810 = vmatprep.mubr.bf16.mxu0 0
  %811 = vmatmul.mubr.bf16.gmra.mxu0 %v507
  %v812 = vpop.f32.mrf.mxu0
  %v813 = vadd.f32 0.0, %v812
  %v814 = vpop.f32.mrf.mxu0
  %v815 = vpop.f32.mrf.mxu0
  %v816 = vadd.f32 0.0, %v815
  %v817 = vpop.f32.mrf.mxu0
  %818 = vmatprep.mubr.bf16.mxu0 0
  %819 = vmatmul.mubr.bf16.gmra.mxu0 %v508
  %v820 = vpop.f32.mrf.mxu0
  %v821 = vadd.f32 0.0, %v820
  %v822 = vpop.f32.mrf.mxu0
  %v823 = vpop.f32.mrf.mxu0
  %v824 = vadd.f32 0.0, %v823
  %v825 = vpop.f32.mrf.mxu0
  %826 = vmatprep.mubr.bf16.mxu0 0
  %827 = vmatmul.mubr.bf16.gmra.mxu0 %v509
  %v828 = vpop.f32.mrf.mxu0
  %v829 = vadd.f32 0.0, %v828
  %v830 = vpop.f32.mrf.mxu0
  %v831 = vpop.f32.mrf.mxu0
  %v832 = vadd.f32 0.0, %v831
  %v833 = vpop.f32.mrf.mxu0
  %834 = vmatprep.mubr.bf16.mxu0 0
  %835 = vmatmul.mubr.bf16.gmra.mxu0 %v510
  %v836 = vpop.f32.mrf.mxu0
  %v837 = vadd.f32 0.0, %v836
  %v838 = vpop.f32.mrf.mxu0
  %v839 = vpop.f32.mrf.mxu0
  %v840 = vadd.f32 0.0, %v839
  %v841 = vpop.f32.mrf.mxu0
  %842 = vmatprep.mubr.bf16.mxu0 0
  %843 = vmatmul.mubr.bf16.gmra.mxu0 %v511
  %v844 = vpop.f32.mrf.mxu0
  %v845 = vadd.f32 0.0, %v844
  %v846 = vpop.f32.mrf.mxu0
  %v847 = vpop.f32.mrf.mxu0
  %v848 = vadd.f32 0.0, %v847
  %v849 = vpop.f32.mrf.mxu0
  %850 = vmatprep.mubr.bf16.mxu0 0
  %851 = vmatmul.mubr.bf16.gmra.mxu0 %v512
  %v852 = vpop.f32.mrf.mxu0
  %v853 = vadd.f32 0.0, %v852
  %v854 = vpop.f32.mrf.mxu0
  %v855 = vpop.f32.mrf.mxu0
  %v856 = vadd.f32 0.0, %v855
  %v857 = vpop.f32.mrf.mxu0
  %858 = vmatprep.mubr.bf16.mxu0 0
  %859 = vmatmul.mubr.bf16.gmra.mxu0 %v513
  %v860 = vpop.f32.mrf.mxu0
  %v861 = vadd.f32 0.0, %v860
  %v862 = vpop.f32.mrf.mxu0
  %v863 = vpop.f32.mrf.mxu0
  %v864 = vadd.f32 0.0, %v863
  %v865 = vpop.f32.mrf.mxu0
  %866 = vdwg.mxu0
  %v867 = vpack.c.bf16 %v616, %v613
  %v868 = vpack.c.bf16 %v624, %v621
  %v869 = vpack.c.bf16 %v632, %v629
  %v870 = vpack.c.bf16 %v640, %v637
  %v871 = vpack.c.bf16 %v648, %v645
  %v872 = vpack.c.bf16 %v656, %v653
  %v873 = vpack.c.bf16 %v664, %v661
  %v874 = vpack.c.bf16 %v672, %v669
  %v875 = vpack.c.bf16 %v680, %v677
  %v876 = vpack.c.bf16 %v688, %v685
  %v877 = vpack.c.bf16 %v696, %v693
  %v878 = vpack.c.bf16 %v704, %v701
  %v879 = vpack.c.bf16 %v712, %v709
  %v880 = vpack.c.bf16 %v720, %v717
  %v881 = vpack.c.bf16 %v728, %v725
  %v882 = vpack.c.bf16 %v736, %v733
  %v883 = vpack.c.bf16 %v744, %v741
  %v884 = vpack.c.bf16 %v752, %v749
  %v885 = vpack.c.bf16 %v760, %v757
  %v886 = vpack.c.bf16 %v768, %v765
  %v887 = vpack.c.bf16 %v776, %v773
  %v888 = vpack.c.bf16 %v784, %v781
  %v889 = vpack.c.bf16 %v792, %v789
  %v890 = vpack.c.bf16 %v800, %v797
  %v891 = vpack.c.bf16 %v808, %v805
  %v892 = vpack.c.bf16 %v816, %v813
  %v893 = vpack.c.bf16 %v824, %v821
  %v894 = vpack.c.bf16 %v832, %v829
  %v895 = vpack.c.bf16 %v840, %v837
  %v896 = vpack.c.bf16 %v848, %v845
  %v897 = vpack.c.bf16 %v856, %v853
  %v898 = vpack.c.bf16 %v864, %v861
  %v931 = vunpack.c.l.b16 %v867
  %v932 = vunpack.c.h.b16 %v867
  %v933 = vunpack.c.l.b16 %v868
  %v934 = vunpack.c.h.b16 %v868
  %v935 = vunpack.c.l.b16 %v869
  %v936 = vunpack.c.h.b16 %v869
  %v937 = vunpack.c.l.b16 %v870
  %v938 = vunpack.c.h.b16 %v870
  %v939 = vunpack.c.l.b16 %v871
  %v940 = vunpack.c.h.b16 %v871
  %v941 = vunpack.c.l.b16 %v872
  %v942 = vunpack.c.h.b16 %v872
  %v943 = vunpack.c.l.b16 %v873
  %v944 = vunpack.c.h.b16 %v873
  %v945 = vunpack.c.l.b16 %v874
  %v946 = vunpack.c.h.b16 %v874
  %v947 = vunpack.c.l.b16 %v875
  %v948 = vunpack.c.h.b16 %v875
  %v949 = vunpack.c.l.b16 %v876
  %v950 = vunpack.c.h.b16 %v876
  %v951 = vunpack.c.l.b16 %v877
  %v952 = vunpack.c.h.b16 %v877
  %v953 = vunpack.c.l.b16 %v878
  %v954 = vunpack.c.h.b16 %v878
  %v955 = vunpack.c.l.b16 %v879
  %v956 = vunpack.c.h.b16 %v879
  %v957 = vunpack.c.l.b16 %v880
  %v958 = vunpack.c.h.b16 %v880
  %v959 = vunpack.c.l.b16 %v881
  %v960 = vunpack.c.h.b16 %v881
  %v961 = vunpack.c.l.b16 %v882
  %v962 = vunpack.c.h.b16 %v882
  %v963 = vunpack.c.l.b16 %v883
  %v964 = vunpack.c.h.b16 %v883
  %v965 = vunpack.c.l.b16 %v884
  %v966 = vunpack.c.h.b16 %v884
  %v967 = vunpack.c.l.b16 %v885
  %v968 = vunpack.c.h.b16 %v885
  %v969 = vunpack.c.l.b16 %v886
  %v970 = vunpack.c.h.b16 %v886
  %v971 = vunpack.c.l.b16 %v887
  %v972 = vunpack.c.h.b16 %v887
  %v973 = vunpack.c.l.b16 %v888
  %v974 = vunpack.c.h.b16 %v888
  %v975 = vunpack.c.l.b16 %v889
  %v976 = vunpack.c.h.b16 %v889
  %v977 = vunpack.c.l.b16 %v890
  %v978 = vunpack.c.h.b16 %v890
  %v979 = vunpack.c.l.b16 %v891
  %v980 = vunpack.c.h.b16 %v891
  %v981 = vunpack.c.l.b16 %v892
  %v982 = vunpack.c.h.b16 %v892
  %v983 = vunpack.c.l.b16 %v893
  %v984 = vunpack.c.h.b16 %v893
  %v985 = vunpack.c.l.b16 %v894
  %v986 = vunpack.c.h.b16 %v894
  %v987 = vunpack.c.l.b16 %v895
  %v988 = vunpack.c.h.b16 %v895
  %v989 = vunpack.c.l.b16 %v896
  %v990 = vunpack.c.h.b16 %v896
  %v991 = vunpack.c.l.b16 %v897
  %v992 = vunpack.c.h.b16 %v897
  %v993 = vunpack.c.l.b16 %v898
  %v994 = vunpack.c.h.b16 %v898
  %v995 = vpack.c.b16 %v931, %v931
  %v996 = vpack.c.b16 %v932, %v932
  %v997 = vpack.c.b16 %v933, %v933
  %v998 = vpack.c.b16 %v934, %v934
  %v999 = vpack.c.b16 %v935, %v935
  %v1000 = vpack.c.b16 %v936, %v936
  %v1001 = vpack.c.b16 %v937, %v937
  %v1002 = vpack.c.b16 %v938, %v938
  %v1003 = vpack.c.b16 %v939, %v939
  %v1004 = vpack.c.b16 %v940, %v940
  %v1005 = vpack.c.b16 %v941, %v941
  %v1006 = vpack.c.b16 %v942, %v942
  %v1007 = vpack.c.b16 %v943, %v943
  %v1008 = vpack.c.b16 %v944, %v944
  %v1009 = vpack.c.b16 %v945, %v945
  %v1010 = vpack.c.b16 %v946, %v946
  %v1011 = vpack.c.b16 %v947, %v947
  %v1012 = vpack.c.b16 %v948, %v948
  %v1013 = vpack.c.b16 %v949, %v949
  %v1014 = vpack.c.b16 %v950, %v950
  %v1015 = vpack.c.b16 %v951, %v951
  %v1016 = vpack.c.b16 %v952, %v952
  %v1017 = vpack.c.b16 %v953, %v953
  %v1018 = vpack.c.b16 %v954, %v954
  %v1019 = vpack.c.b16 %v955, %v955
  %v1020 = vpack.c.b16 %v956, %v956
  %v1021 = vpack.c.b16 %v957, %v957
  %v1022 = vpack.c.b16 %v958, %v958
  %v1023 = vpack.c.b16 %v959, %v959
  %v1024 = vpack.c.b16 %v960, %v960
  %v1025 = vpack.c.b16 %v961, %v961
  %v1026 = vpack.c.b16 %v962, %v962
  %v1027 = vpack.c.b16 %v963, %v963
  %v1028 = vpack.c.b16 %v964, %v964
  %v1029 = vpack.c.b16 %v965, %v965
  %v1030 = vpack.c.b16 %v966, %v966
  %v1031 = vpack.c.b16 %v967, %v967
  %v1032 = vpack.c.b16 %v968, %v968
  %v1033 = vpack.c.b16 %v969, %v969
  %v1034 = vpack.c.b16 %v970, %v970
  %v1035 = vpack.c.b16 %v971, %v971
  %v1036 = vpack.c.b16 %v972, %v972
  %v1037 = vpack.c.b16 %v973, %v973
  %v1038 = vpack.c.b16 %v974, %v974
  %v1039 = vpack.c.b16 %v975, %v975
  %v1040 = vpack.c.b16 %v976, %v976
  %v1041 = vpack.c.b16 %v977, %v977
  %v1042 = vpack.c.b16 %v978, %v978
  %v1043 = vpack.c.b16 %v979, %v979
  %v1044 = vpack.c.b16 %v980, %v980
  %v1045 = vpack.c.b16 %v981, %v981
  %v1046 = vpack.c.b16 %v982, %v982
  %v1047 = vpack.c.b16 %v983, %v983
  %v1048 = vpack.c.b16 %v984, %v984
  %v1049 = vpack.c.b16 %v985, %v985
  %v1050 = vpack.c.b16 %v986, %v986
  %v1051 = vpack.c.b16 %v987, %v987
  %v1052 = vpack.c.b16 %v988, %v988
  %v1053 = vpack.c.b16 %v989, %v989
  %v1054 = vpack.c.b16 %v990, %v990
  %v1055 = vpack.c.b16 %v991, %v991
  %v1056 = vpack.c.b16 %v992, %v992
  %v1057 = vpack.c.b16 %v993, %v993
  %v1058 = vpack.c.b16 %v994, %v994
  %1123 = vst [vmem:[%s4] sm:$0xf] %v995
  %1124 = vst [vmem:[%s4 + $0x4] sm:$0xf] %v996
  %1125 = vst [vmem:[%s4 + $0x8] sm:$0xf] %v997
  %1126 = vst [vmem:[%s4 + $0xc] sm:$0xf] %v998
  %1127 = vst [vmem:[%s4 + $0x10] sm:$0xf] %v999
  %1128 = vst [vmem:[%s4 + $0x14] sm:$0xf] %v1000
  %1129 = vst [vmem:[%s4 + $0x18] sm:$0xf] %v1001
  %1130 = vst [vmem:[%s4 + $0x1c] sm:$0xf] %v1002
  %1131 = vst [vmem:[%s4 + $0x20] sm:$0xf] %v1003
  %1132 = vst [vmem:[%s4 + $0x24] sm:$0xf] %v1004
  %1133 = vst [vmem:[%s4 + $0x28] sm:$0xf] %v1005
  %1134 = vst [vmem:[%s4 + $0x2c] sm:$0xf] %v1006
  %1135 = vst [vmem:[%s4 + $0x30] sm:$0xf] %v1007
  %1136 = vst [vmem:[%s4 + $0x34] sm:$0xf] %v1008
  %1137 = vst [vmem:[%s4 + $0x38] sm:$0xf] %v1009
  %1138 = vst [vmem:[%s4 + $0x3c] sm:$0xf] %v1010
  %1139 = vst [vmem:[%s4 + $0x40] sm:$0xf] %v1011
  %1140 = vst [vmem:[%s4 + $0x44] sm:$0xf] %v1012
  %1141 = vst [vmem:[%s4 + $0x48] sm:$0xf] %v1013
  %1142 = vst [vmem:[%s4 + $0x4c] sm:$0xf] %v1014
  %1143 = vst [vmem:[%s4 + $0x50] sm:$0xf] %v1015
  %1144 = vst [vmem:[%s4 + $0x54] sm:$0xf] %v1016
  %1145 = vst [vmem:[%s4 + $0x58] sm:$0xf] %v1017
  %1146 = vst [vmem:[%s4 + $0x5c] sm:$0xf] %v1018
  %1147 = vst [vmem:[%s4 + $0x60] sm:$0xf] %v1019
  %1148 = vst [vmem:[%s4 + $0x64] sm:$0xf] %v1020
  %1149 = vst [vmem:[%s4 + $0x68] sm:$0xf] %v1021
  %1150 = vst [vmem:[%s4 + $0x6c] sm:$0xf] %v1022
  %1151 = vst [vmem:[%s4 + $0x70] sm:$0xf] %v1023
  %1152 = vst [vmem:[%s4 + $0x74] sm:$0xf] %v1024
  %1153 = vst [vmem:[%s4 + $0x78] sm:$0xf] %v1025
  %1154 = vst [vmem:[%s4 + $0x7c] sm:$0xf] %v1026
  %1155 = vst [vmem:[%s4 + $0x80] sm:$0xf] %v1027
  %1156 = vst [vmem:[%s4 + $0x84] sm:$0xf] %v1028
  %1157 = vst [vmem:[%s4 + $0x88] sm:$0xf] %v1029
  %1158 = vst [vmem:[%s4 + $0x8c] sm:$0xf] %v1030
  %1159 = vst [vmem:[%s4 + $0x90] sm:$0xf] %v1031
  %1160 = vst [vmem:[%s4 + $0x94] sm:$0xf] %v1032
  %1161 = vst [vmem:[%s4 + $0x98] sm:$0xf] %v1033
  %1162 = vst [vmem:[%s4 + $0x9c] sm:$0xf] %v1034
  %1163 = vst [vmem:[%s4 + $0xa0] sm:$0xf] %v1035
  %1164 = vst [vmem:[%s4 + $0xa4] sm:$0xf] %v1036
  %1165 = vst [vmem:[%s4 + $0xa8] sm:$0xf] %v1037
  %1166 = vst [vmem:[%s4 + $0xac] sm:$0xf] %v1038
  %1167 = vst [vmem:[%s4 + $0xb0] sm:$0xf] %v1039
  %1168 = vst [vmem:[%s4 + $0xb4] sm:$0xf] %v1040
  %1169 = vst [vmem:[%s4 + $0xb8] sm:$0xf] %v1041
  %1170 = vst [vmem:[%s4 + $0xbc] sm:$0xf] %v1042
  %1171 = vst [vmem:[%s4 + $0xc0] sm:$0xf] %v1043
  %1172 = vst [vmem:[%s4 + $0xc4] sm:$0xf] %v1044
  %1173 = vst [vmem:[%s4 + $0xc8] sm:$0xf] %v1045
  %1174 = vst [vmem:[%s4 + $0xcc] sm:$0xf] %v1046
  %1175 = vst [vmem:[%s4 + $0xd0] sm:$0xf] %v1047
  %1176 = vst [vmem:[%s4 + $0xd4] sm:$0xf] %v1048
  %1177 = vst [vmem:[%s4 + $0xd8] sm:$0xf] %v1049
  %1178 = vst [vmem:[%s4 + $0xdc] sm:$0xf] %v1050
  %1179 = vst [vmem:[%s4 + $0xe0] sm:$0xf] %v1051
  %1180 = vst [vmem:[%s4 + $0xe4] sm:$0xf] %v1052
  %1181 = vst [vmem:[%s4 + $0xe8] sm:$0xf] %v1053
  %1182 = vst [vmem:[%s4 + $0xec] sm:$0xf] %v1054
  %1183 = vst [vmem:[%s4 + $0xf0] sm:$0xf] %v1055
  %1184 = vst [vmem:[%s4 + $0xf4] sm:$0xf] %v1056
  %1185 = vst [vmem:[%s4 + $0xf8] sm:$0xf] %v1057
  %1186 = vst [vmem:[%s4 + $0xfc] sm:$0xf] %v1058
  %v1187 = vunpack.c.l.bf16 %v867
  %v1188 = vunpack.c.h.bf16 %v867
  %v1189 = vunpack.c.l.bf16 %v868
  %v1190 = vunpack.c.h.bf16 %v868
  %v1191 = vunpack.c.l.bf16 %v869
  %v1192 = vunpack.c.h.bf16 %v869
  %v1193 = vunpack.c.l.bf16 %v870
  %v1194 = vunpack.c.h.bf16 %v870
  %v1195 = vunpack.c.l.bf16 %v871
  %v1196 = vunpack.c.h.bf16 %v871
  %v1197 = vunpack.c.l.bf16 %v872
  %v1198 = vunpack.c.h.bf16 %v872
  %v1199 = vunpack.c.l.bf16 %v873
  %v1200 = vunpack.c.h.bf16 %v873
  %v1201 = vunpack.c.l.bf16 %v874
  %v1202 = vunpack.c.h.bf16 %v874
  %v1203 = vunpack.c.l.bf16 %v875
  %v1204 = vunpack.c.h.bf16 %v875
  %v1205 = vunpack.c.l.bf16 %v876
  %v1206 = vunpack.c.h.bf16 %v876
  %v1207 = vunpack.c.l.bf16 %v877
  %v1208 = vunpack.c.h.bf16 %v877
  %v1209 = vunpack.c.l.bf16 %v878
  %v1210 = vunpack.c.h.bf16 %v878
  %v1211 = vunpack.c.l.bf16 %v879
  %v1212 = vunpack.c.h.bf16 %v879
  %v1213 = vunpack.c.l.bf16 %v880
  %v1214 = vunpack.c.h.bf16 %v880
  %v1215 = vunpack.c.l.bf16 %v881
  %v1216 = vunpack.c.h.bf16 %v881
  %v1217 = vunpack.c.l.bf16 %v882
  %v1218 = vunpack.c.h.bf16 %v882
  %v1219 = vunpack.c.l.bf16 %v883
  %v1220 = vunpack.c.h.bf16 %v883
  %v1221 = vunpack.c.l.bf16 %v884
  %v1222 = vunpack.c.h.bf16 %v884
  %v1223 = vunpack.c.l.bf16 %v885
  %v1224 = vunpack.c.h.bf16 %v885
  %v1225 = vunpack.c.l.bf16 %v886
  %v1226 = vunpack.c.h.bf16 %v886
  %v1227 = vunpack.c.l.bf16 %v887
  %v1228 = vunpack.c.h.bf16 %v887
  %v1229 = vunpack.c.l.bf16 %v888
  %v1230 = vunpack.c.h.bf16 %v888
  %v1231 = vunpack.c.l.bf16 %v889
  %v1232 = vunpack.c.h.bf16 %v889
  %v1233 = vunpack.c.l.bf16 %v890
  %v1234 = vunpack.c.h.bf16 %v890
  %v1235 = vunpack.c.l.bf16 %v891
  %v1236 = vunpack.c.h.bf16 %v891
  %v1237 = vunpack.c.l.bf16 %v892
  %v1238 = vunpack.c.h.bf16 %v892
  %v1239 = vunpack.c.l.bf16 %v893
  %v1240 = vunpack.c.h.bf16 %v893
  %v1241 = vunpack.c.l.bf16 %v894
  %v1242 = vunpack.c.h.bf16 %v894
  %v1243 = vunpack.c.l.bf16 %v895
  %v1244 = vunpack.c.h.bf16 %v895
  %v1245 = vunpack.c.l.bf16 %v896
  %v1246 = vunpack.c.h.bf16 %v896
  %v1247 = vunpack.c.l.bf16 %v897
  %v1248 = vunpack.c.h.bf16 %v897
  %v1249 = vunpack.c.l.bf16 %v898
  %v1250 = vunpack.c.h.bf16 %v898
  %v1251 = vadd.f32 %v1187, %v1188
  %v1252 = vadd.f32 %v1251, %v1189
  %v1253 = vadd.f32 %v1252, %v1190
  %v1254 = vadd.f32 %v1253, %v1191
  %v1255 = vadd.f32 %v1254, %v1192
  %v1256 = vadd.f32 %v1255, %v1193
  %v1257 = vadd.f32 %v1256, %v1194
  %v1258 = vadd.f32 %v1257, %v1195
  %v1259 = vadd.f32 %v1258, %v1196
  %v1260 = vadd.f32 %v1259, %v1197
  %v1261 = vadd.f32 %v1260, %v1198
  %v1262 = vadd.f32 %v1261, %v1199
  %v1263 = vadd.f32 %v1262, %v1200
  %v1264 = vadd.f32 %v1263, %v1201
  %v1265 = vadd.f32 %v1264, %v1202
  %v1266 = vadd.f32 %v1265, %v1203
  %v1267 = vadd.f32 %v1266, %v1204
  %v1268 = vadd.f32 %v1267, %v1205
  %v1269 = vadd.f32 %v1268, %v1206
  %v1270 = vadd.f32 %v1269, %v1207
  %v1271 = vadd.f32 %v1270, %v1208
  %v1272 = vadd.f32 %v1271, %v1209
  %v1273 = vadd.f32 %v1272, %v1210
  %v1274 = vadd.f32 %v1273, %v1211
  %v1275 = vadd.f32 %v1274, %v1212
  %v1276 = vadd.f32 %v1275, %v1213
  %v1277 = vadd.f32 %v1276, %v1214
  %v1278 = vadd.f32 %v1277, %v1215
  %v1279 = vadd.f32 %v1278, %v1216
  %v1280 = vadd.f32 %v1279, %v1217
  %v1281 = vadd.f32 %v1280, %v1218
  %v1282 = vadd.f32 %v1281, %v1219
  %v1283 = vadd.f32 %v1282, %v1220
  %v1284 = vadd.f32 %v1283, %v1221
  %v1285 = vadd.f32 %v1284, %v1222
  %v1286 = vadd.f32 %v1285, %v1223
  %v1287 = vadd.f32 %v1286, %v1224
  %v1288 = vadd.f32 %v1287, %v1225
  %v1289 = vadd.f32 %v1288, %v1226
  %v1290 = vadd.f32 %v1289, %v1227
  %v1291 = vadd.f32 %v1290, %v1228
  %v1292 = vadd.f32 %v1291, %v1229
  %v1293 = vadd.f32 %v1292, %v1230
  %v1294 = vadd.f32 %v1293, %v1231
  %v1295 = vadd.f32 %v1294, %v1232
  %v1296 = vadd.f32 %v1295, %v1233
  %v1297 = vadd.f32 %v1296, %v1234
  %v1298 = vadd.f32 %v1297, %v1235
  %v1299 = vadd.f32 %v1298, %v1236
  %v1300 = vadd.f32 %v1299, %v1237
  %v1301 = vadd.f32 %v1300, %v1238
  %v1302 = vadd.f32 %v1301, %v1239
  %v1303 = vadd.f32 %v1302, %v1240
  %v1304 = vadd.f32 %v1303, %v1241
  %v1305 = vadd.f32 %v1304, %v1242
  %v1306 = vadd.f32 %v1305, %v1243
  %v1307 = vadd.f32 %v1306, %v1244
  %v1308 = vadd.f32 %v1307, %v1245
  %v1309 = vadd.f32 %v1308, %v1246
  %v1310 = vadd.f32 %v1309, %v1247
  %v1311 = vadd.f32 %v1310, %v1248
  %v1312 = vadd.f32 %v1311, %v1249
  %v1313 = vadd.f32 %v1312, %v1250
  %v1314 = vrot.slane %v1313, 4
  %v1315 = vadd.f32 %v1313, %v1314
  %v1316 = vrot.slane %v1315, 2
  %v1317 = vadd.f32 %v1315, %v1316
  %v1318 = vrot.slane %v1317, 1
  %v1319 = vadd.f32 %v1317, %v1318
  %v1320 = vmul.f32 %v1187, %v1187
  %v1321 = vmul.f32 %v1188, %v1188
  %v1322 = vmul.f32 %v1189, %v1189
  %v1323 = vmul.f32 %v1190, %v1190
  %v1324 = vmul.f32 %v1191, %v1191
  %v1325 = vmul.f32 %v1192, %v1192
  %v1326 = vmul.f32 %v1193, %v1193
  %v1327 = vmul.f32 %v1194, %v1194
  %v1328 = vmul.f32 %v1195, %v1195
  %v1329 = vmul.f32 %v1196, %v1196
  %v1330 = vmul.f32 %v1197, %v1197
  %v1331 = vmul.f32 %v1198, %v1198
  %v1332 = vmul.f32 %v1199, %v1199
  %v1333 = vmul.f32 %v1200, %v1200
  %v1334 = vmul.f32 %v1201, %v1201
  %v1335 = vmul.f32 %v1202, %v1202
  %v1336 = vmul.f32 %v1203, %v1203
  %v1337 = vmul.f32 %v1204, %v1204
  %v1338 = vmul.f32 %v1205, %v1205
  %v1339 = vmul.f32 %v1206, %v1206
  %v1340 = vmul.f32 %v1207, %v1207
  %v1341 = vmul.f32 %v1208, %v1208
  %v1342 = vmul.f32 %v1209, %v1209
  %v1343 = vmul.f32 %v1210, %v1210
  %v1344 = vmul.f32 %v1211, %v1211
  %v1345 = vmul.f32 %v1212, %v1212
  %v1346 = vmul.f32 %v1213, %v1213
  %v1347 = vmul.f32 %v1214, %v1214
  %v1348 = vmul.f32 %v1215, %v1215
  %v1349 = vmul.f32 %v1216, %v1216
  %v1350 = vmul.f32 %v1217, %v1217
  %v1351 = vmul.f32 %v1218, %v1218
  %v1352 = vmul.f32 %v1219, %v1219
  %v1353 = vmul.f32 %v1220, %v1220
  %v1354 = vmul.f32 %v1221, %v1221
  %v1355 = vmul.f32 %v1222, %v1222
  %v1356 = vmul.f32 %v1223, %v1223
  %v1357 = vmul.f32 %v1224, %v1224
  %v1358 = vmul.f32 %v1225, %v1225
  %v1359 = vmul.f32 %v1226, %v1226
  %v1360 = vmul.f32 %v1227, %v1227
  %v1361 = vmul.f32 %v1228, %v1228
  %v1362 = vmul.f32 %v1229, %v1229
  %v1363 = vmul.f32 %v1230, %v1230
  %v1364 = vmul.f32 %v1231, %v1231
  %v1365 = vmul.f32 %v1232, %v1232
  %v1366 = vmul.f32 %v1233, %v1233
  %v1367 = vmul.f32 %v1234, %v1234
  %v1368 = vmul.f32 %v1235, %v1235
  %v1369 = vmul.f32 %v1236, %v1236
  %v1370 = vmul.f32 %v1237, %v1237
  %v1371 = vmul.f32 %v1238, %v1238
  %v1372 = vmul.f32 %v1239, %v1239
  %v1373 = vmul.f32 %v1240, %v1240
  %v1374 = vmul.f32 %v1241, %v1241
  %v1375 = vmul.f32 %v1242, %v1242
  %v1376 = vmul.f32 %v1243, %v1243
  %v1377 = vmul.f32 %v1244, %v1244
  %v1378 = vmul.f32 %v1245, %v1245
  %v1379 = vmul.f32 %v1246, %v1246
  %v1380 = vmul.f32 %v1247, %v1247
  %v1381 = vmul.f32 %v1248, %v1248
  %v1382 = vmul.f32 %v1249, %v1249
  %v1383 = vmul.f32 %v1250, %v1250
  %v1384 = vadd.f32 %v1320, %v1321
  %v1385 = vadd.f32 %v1384, %v1322
  %v1386 = vadd.f32 %v1385, %v1323
  %v1387 = vadd.f32 %v1386, %v1324
  %v1388 = vadd.f32 %v1387, %v1325
  %v1389 = vadd.f32 %v1388, %v1326
  %v1390 = vadd.f32 %v1389, %v1327
  %v1391 = vadd.f32 %v1390, %v1328
  %v1392 = vadd.f32 %v1391, %v1329
  %v1393 = vadd.f32 %v1392, %v1330
  %v1394 = vadd.f32 %v1393, %v1331
  %v1395 = vadd.f32 %v1394, %v1332
  %v1396 = vadd.f32 %v1395, %v1333
  %v1397 = vadd.f32 %v1396, %v1334
  %v1398 = vadd.f32 %v1397, %v1335
  %v1399 = vadd.f32 %v1398, %v1336
  %v1400 = vadd.f32 %v1399, %v1337
  %v1401 = vadd.f32 %v1400, %v1338
  %v1402 = vadd.f32 %v1401, %v1339
  %v1403 = vadd.f32 %v1402, %v1340
  %v1404 = vadd.f32 %v1403, %v1341
  %v1405 = vadd.f32 %v1404, %v1342
  %v1406 = vadd.f32 %v1405, %v1343
  %v1407 = vadd.f32 %v1406, %v1344
  %v1408 = vadd.f32 %v1407, %v1345
  %v1409 = vadd.f32 %v1408, %v1346
  %v1410 = vadd.f32 %v1409, %v1347
  %v1411 = vadd.f32 %v1410, %v1348
  %v1412 = vadd.f32 %v1411, %v1349
  %v1413 = vadd.f32 %v1412, %v1350
  %v1414 = vadd.f32 %v1413, %v1351
  %v1415 = vadd.f32 %v1414, %v1352
  %v1416 = vadd.f32 %v1415, %v1353
  %v1417 = vadd.f32 %v1416, %v1354
  %v1418 = vadd.f32 %v1417, %v1355
  %v1419 = vadd.f32 %v1418, %v1356
  %v1420 = vadd.f32 %v1419, %v1357
  %v1421 = vadd.f32 %v1420, %v1358
  %v1422 = vadd.f32 %v1421, %v1359
  %v1423 = vadd.f32 %v1422, %v1360
  %v1424 = vadd.f32 %v1423, %v1361
  %v1425 = vadd.f32 %v1424, %v1362
  %v1426 = vadd.f32 %v1425, %v1363
  %v1427 = vadd.f32 %v1426, %v1364
  %v1428 = vadd.f32 %v1427, %v1365
  %v1429 = vadd.f32 %v1428, %v1366
  %v1430 = vadd.f32 %v1429, %v1367
  %v1431 = vadd.f32 %v1430, %v1368
  %v1432 = vadd.f32 %v1431, %v1369
  %v1433 = vadd.f32 %v1432, %v1370
  %v1434 = vadd.f32 %v1433, %v1371
  %v1435 = vadd.f32 %v1434, %v1372
  %v1436 = vadd.f32 %v1435, %v1373
  %v1437 = vadd.f32 %v1436, %v1374
  %v1438 = vadd.f32 %v1437, %v1375
  %v1439 = vadd.f32 %v1438, %v1376
  %v1440 = vadd.f32 %v1439, %v1377
  %v1441 = vadd.f32 %v1440, %v1378
  %v1442 = vadd.f32 %v1441, %v1379
  %v1443 = vadd.f32 %v1442, %v1380
  %v1444 = vadd.f32 %v1443, %v1381
  %v1445 = vadd.f32 %v1444, %v1382
  %v1446 = vadd.f32 %v1445, %v1383
  %v1447 = vrot.slane %v1446, 4
  %v1448 = vadd.f32 %v1446, %v1447
  %v1449 = vrot.slane %v1448, 2
  %v1450 = vadd.f32 %v1448, %v1449
  %v1451 = vrot.slane %v1450, 1
  %v1452 = vadd.f32 %v1450, %v1451
  %vm1453 = vcmask 1040384
  %v1454 = vsel %vm1453, %v1319, %v1452
  %1455 = vst [vmem:[%s5] sm:$0x3] %v1454
  // Predicated region
  $region18: #{basic_block_noshortcut.4} parent=0 // pred_check
    _
  $region19: #{basic_block_noshortcut.4} parent=0 // pred_check_branch
    %1457 = sbr.rel (0) target = $region21
  $region20: #{basic_block_noshortcut.4} parent=0 // pred_region
    _
  $region21: #{basic_block_noshortcut.4} parent=0 // pred_fallthru
    _
  // Predicated region
  $region22: #{basic_block_noshortcut.4} parent=0 // pred_check
    _
  $region23: #{basic_block_noshortcut.4} parent=0 // pred_check_branch
    %1459 = sbr.rel (0) target = $region25
  $region24: #{basic_block_noshortcut.4} parent=0 // pred_region
    _
  $region25: #{basic_block_noshortcut.4} parent=0 // pred_fallthru
    _
  // Predicated region
  $region26: #{basic_block_noshortcut.4} parent=0 // pred_check
    _
  $region27: #{basic_block_noshortcut.4} parent=0 // pred_check_branch
    %1461 = sbr.rel (0) target = $region29
  $region28: #{basic_block_noshortcut.4} parent=0 // pred_region
    _
  $region29: #{basic_block_noshortcut.4} parent=0 // pred_fallthru
    _
  // Predicated region
  $region30: #{basic_block_noshortcut.4} parent=0 // pred_check
    _
  $region31: #{basic_block_noshortcut.4} parent=0 // pred_check_branch
    %1463 = sbr.rel (0) target = $region33
  $region32: #{basic_block_noshortcut.4} parent=0 // pred_region
    _
  $region33: #{basic_block_noshortcut.4} parent=0 // pred_fallthru
    _

</llo_original>
